<compile_context>
chip_gen: v5e
topology: v5e:2x2
jax: 0.10.0
libtpu: 0.0.40
codegen_flags: <defaults>
</compile_context>

<pallas_src>
import functools

import jax
import jax.numpy as jnp
from jax.experimental import pallas as pl
from jax.experimental.pallas import tpu as pltpu

_IN_FEATURES = 1024


def _discriminator_kernel(x_ref,
                          w1_ref, b1_ref,
                          w2_ref, b2_ref,
                          w3_ref, b3_ref,
                          w4_ref, b4_ref,
                          o_ref):
    """One batch tile of the fused MLP.

    x tile   : (TB, 1024) bf16
    w1..w3   : bf16 (in, out), VMEM-resident across all grid steps
    w4       : (1, 256) bf16 row vector -> final layer via VPU mul + lane reduce
    biases   : f32; all accumulation / activations in f32.
    """
    x = x_ref[...]                                                   # bf16

    # Dense 1024 -> 1024 (+ ReLU).
    h = jnp.dot(x, w1_ref[...], preferred_element_type=jnp.float32) + b1_ref[...]
    h = jnp.maximum(h, 0.0)

    # Dense 1024 -> 512 (+ ReLU).
    h = jnp.dot(h.astype(jnp.bfloat16), w2_ref[...],
                preferred_element_type=jnp.float32) + b2_ref[...]
    h = jnp.maximum(h, 0.0)

    # Dense 512 -> 256 (+ ReLU).
    h = jnp.dot(h.astype(jnp.bfloat16), w3_ref[...],
                preferred_element_type=jnp.float32) + b3_ref[...]
    h = jnp.maximum(h, 0.0)

    # Dense 256 -> 1 (+ sigmoid).  An N=1 matmul would use 1/256 of the MXU;
    # do it as a VPU broadcast-multiply + XLU lane reduction instead.
    w4 = w4_ref[...].astype(jnp.float32)                             # (1, 256)
    logits = jnp.sum(h * w4, axis=-1, keepdims=True) + b4_ref[...]   # (TB, 1)
    o_ref[...] = (1.0 / (1.0 + jnp.exp(-logits))).astype(o_ref.dtype)


def _round_up(x, m):
    return ((x + m - 1) // m) * m


@functools.partial(jax.jit, static_argnames=("block_b",))
def discriminator_forward(images, params, block_b=256):
    """images: (B, C, H, W) NCHW with C*H*W == 1024, like the PyTorch module."""
    B = images.shape[0]
    feat = 1
    for d in images.shape[1:]:
        feat *= d
    assert feat == _IN_FEATURES, f"expected C*H*W == {_IN_FEATURES}, got {feat}"

    # Same flattening as images.reshape(B, 1024); bf16 input halves the x DMA.
    x = images.reshape(B, _IN_FEATURES).astype(jnp.bfloat16)

    (w1, b1), (w2, b2), (w3, b3), (w4, b4) = params
    # bf16 operands for the MXU (accumulation stays f32 inside the kernel).
    w1b = w1.astype(jnp.bfloat16)
    w2b = w2.astype(jnp.bfloat16)
    w3b = w3.astype(jnp.bfloat16)
    w4row = w4.reshape(1, w4.shape[0]).astype(jnp.bfloat16)          # (1, 256)

    # Batch tiling: pad B so every grid step sees a full (tb, 1024) tile.
    if B <= block_b:
        tb = _round_up(max(B, 8), 8)
    else:
        tb = block_b
    b_pad = _round_up(B, tb)
    if b_pad != B:
        x = jnp.pad(x, ((0, b_pad - B), (0, 0)))
    n_tiles = b_pad // tb

    d0, d1 = w1.shape
    d2 = w2.shape[1]
    d3 = w3.shape[1]
    flops = 2 * b_pad * (d0 * d1 + d1 * d2 + d2 * d3 + d3)
    bytes_accessed = (b_pad * d0 * 2                                  # x (bf16)
                      + (w1b.size + w2b.size + w3b.size + w4row.size) * 2
                      + (b1.size + b2.size + b3.size + b4.size) * 4
                      + b_pad * 4)                                    # output

    const2 = lambda i: (0, 0)
    out = pl.pallas_call(
        _discriminator_kernel,
        out_shape=jax.ShapeDtypeStruct((b_pad, 1), jnp.float32),
        grid=(n_tiles,),
        in_specs=[
            pl.BlockSpec((tb, d0), lambda i: (i, 0)),   # x tile, streamed
            pl.BlockSpec(w1b.shape, const2),            # weights/biases pinned
            pl.BlockSpec(b1.shape, const2),
            pl.BlockSpec(w2b.shape, const2),
            pl.BlockSpec(b2.shape, const2),
            pl.BlockSpec(w3b.shape, const2),
            pl.BlockSpec(b3.shape, const2),
            pl.BlockSpec(w4row.shape, const2),
            pl.BlockSpec(b4.shape, const2),
        ],
        out_specs=pl.BlockSpec((tb, 1), lambda i: (i, 0)),
        compiler_params=pltpu.CompilerParams(
            dimension_semantics=("parallel",),
            vmem_limit_bytes=32 << 20),
        cost_estimate=pl.CostEstimate(
            flops=flops, transcendentals=b_pad, bytes_accessed=bytes_accessed),
    )(x, w1b, b1, w2b, b2, w3b, b3, w4row, b4)
    return out[:B]


def init_params(key, width=1):
    """PyTorch-Linear-style init: U(-1/sqrt(fan_in), 1/sqrt(fan_in)).

    Weights stored as (fan_in, fan_out); biases as (1, fan_out).
    """
    dims = [1024, int(1024 * width), int(512 * width), int(256 * width), 1]
    params = []
    for i in range(4):
        fan_in, fan_out = dims[i], dims[i + 1]
        key, kw, kb = jax.random.split(key, 3)
        bound = 1.0 / jnp.sqrt(jnp.float32(fan_in))
        w = jax.random.uniform(kw, (fan_in, fan_out), jnp.float32, -bound, bound)
        b = jax.random.uniform(kb, (1, fan_out), jnp.float32, -bound, bound)
        params.append((w, b))
    return params


def reference_forward_f32(images, params):
    """Pure-JAX f32 reference (module semantics)."""
    x = images.reshape(images.shape[0], _IN_FEATURES)
    (w1, b1), (w2, b2), (w3, b3), (w4, b4) = params
    h = jnp.maximum(x @ w1 + b1, 0.0)
    h = jnp.maximum(h @ w2 + b2, 0.0)
    h = jnp.maximum(h @ w3 + b3, 0.0)
    return jax.nn.sigmoid(h @ w4 + b4)


def reference_forward_bf16(images, params):
    """Pure-JAX reference matching the kernel's bf16-operand / f32-accumulate math."""
    x = images.reshape(images.shape[0], _IN_FEATURES).astype(jnp.bfloat16)
    (w1, b1), (w2, b2), (w3, b3), (w4, b4) = params

    def dense(h, w, b):
        y = jnp.dot(h.astype(jnp.bfloat16), w.astype(jnp.bfloat16),
                    preferred_element_type=jnp.float32) + b
        return jnp.maximum(y, 0.0)

    h = dense(x, w1, b1)
    h = dense(h, w2, b2)
    h = dense(h, w3, b3)
    w4r = w4.astype(jnp.bfloat16).astype(jnp.float32).reshape(1, -1)
    logits = jnp.sum(h * w4r, axis=-1, keepdims=True) + b4
    return 1.0 / (1.0 + jnp.exp(-logits))


if __name__ == "__main__":
    key = jax.random.PRNGKey(0)
    key, k_img = jax.random.split(key)

    # Small NCHW input whose flattened feature size is 1024: (B=2, C=4, H=16, W=16).
    images = jax.random.normal(k_img, (2, 4, 16, 16), jnp.float32)
    params = init_params(key, width=1)

    out = jax.block_until_ready(discriminator_forward(images, params))
    assert out.shape == (2, 1), out.shape

    ref_match = reference_forward_bf16(images, params)
    ref_f32 = reference_forward_f32(images, params)
    assert jnp.allclose(out, ref_match, atol=1e-3, rtol=0), (out, ref_match)
    assert jnp.allclose(out, ref_f32, atol=5e-2, rtol=0), (out, ref_f32)

    # Larger ragged batch exercising the tiled grid (2 tiles of 256 + padding).
    key, k_img2 = jax.random.split(key)
    images2 = jax.random.normal(k_img2, (300, 1, 32, 32), jnp.float32)
    out2 = jax.block_until_ready(discriminator_forward(images2, params))
    assert out2.shape == (300, 1), out2.shape
    ref2 = reference_forward_bf16(images2, params)
    assert jnp.allclose(out2, ref2, atol=1e-3, rtol=0)

    print("KERNEL_OK")
</pallas_src>

<mosaic_0001>
module attributes {stable_mosaic.version = 11 : i64} {
  func.func @_discriminator_kernel(%arg0: i32, %arg1: memref<8x1024xbf16, #tpu.memory_space<vmem>>, %arg2: memref<1024x1024xbf16, #tpu.memory_space<vmem>>, %arg3: memref<1x1024xf32, #tpu.memory_space<vmem>>, %arg4: memref<1024x512xbf16, #tpu.memory_space<vmem>>, %arg5: memref<1x512xf32, #tpu.memory_space<vmem>>, %arg6: memref<512x256xbf16, #tpu.memory_space<vmem>>, %arg7: memref<1x256xf32, #tpu.memory_space<vmem>>, %arg8: memref<1x256xbf16, #tpu.memory_space<vmem>>, %arg9: memref<1x1xf32, #tpu.memory_space<vmem>>, %arg10: memref<8x1xf32, #tpu.memory_space<vmem>>) attributes {dimension_semantics = [#tpu.dimension_semantics<parallel>], iteration_bounds = array<i64: 1>, scalar_prefetch = 0 : i64, scratch_operands = 0 : i64, tpu.core_type = #tpu.core_type<tc>, window_params = [{transform_indices = @transform_0, window_bounds = array<i64: 8, 1024>}, {pipeline_mode = #tpu.pipeline_mode<synchronous>, transform_indices = @transform_1, window_bounds = array<i64: 1024, 1024>}, {pipeline_mode = #tpu.pipeline_mode<synchronous>, transform_indices = @transform_2, window_bounds = array<i64: 1, 1024>}, {pipeline_mode = #tpu.pipeline_mode<synchronous>, transform_indices = @transform_3, window_bounds = array<i64: 1024, 512>}, {pipeline_mode = #tpu.pipeline_mode<synchronous>, transform_indices = @transform_4, window_bounds = array<i64: 1, 512>}, {pipeline_mode = #tpu.pipeline_mode<synchronous>, transform_indices = @transform_5, window_bounds = array<i64: 512, 256>}, {pipeline_mode = #tpu.pipeline_mode<synchronous>, transform_indices = @transform_6, window_bounds = array<i64: 1, 256>}, {pipeline_mode = #tpu.pipeline_mode<synchronous>, transform_indices = @transform_7, window_bounds = array<i64: 1, 256>}, {pipeline_mode = #tpu.pipeline_mode<synchronous>, transform_indices = @transform_8, window_bounds = array<i64: 1, 1>}, {transform_indices = @transform_9, window_bounds = array<i64: 8, 1>}]} {
    %c0 = arith.constant 0 : index
    %c0_0 = arith.constant 0 : index
    %0 = vector.load %arg1[%c0, %c0_0] : memref<8x1024xbf16, #tpu.memory_space<vmem>>, vector<8x1024xbf16>
    %c0_1 = arith.constant 0 : index
    %c0_2 = arith.constant 0 : index
    %1 = vector.load %arg2[%c0_1, %c0_2] : memref<1024x1024xbf16, #tpu.memory_space<vmem>>, vector<1024x1024xbf16>
    %cst = arith.constant dense<0.000000e+00> : vector<8x1024xf32>
    %2 = tpu.matmul %0, %1, %cst {dimension_numbers = #tpu.dot_dimension_numbers<[1], [0], [0], [1], [0, 0, 1, 1], [], []>} : vector<8x1024xbf16>, vector<1024x1024xbf16>, vector<8x1024xf32> -> vector<8x1024xf32>
    %c0_3 = arith.constant 0 : index
    %c0_4 = arith.constant 0 : index
    %3 = vector.load %arg3[%c0_3, %c0_4] : memref<1x1024xf32, #tpu.memory_space<vmem>>, vector<1x1024xf32>
    %4 = vector.broadcast %3 : vector<1x1024xf32> to vector<8x1024xf32>
    %5 = arith.addf %2, %4 : vector<8x1024xf32>
    %cst_5 = arith.constant 0.000000e+00 : f32
    %6 = vector.broadcast %cst_5 : f32 to vector<8x1024xf32>
    %7 = arith.maximumf %5, %6 : vector<8x1024xf32>
    %8 = arith.truncf %7 : vector<8x1024xf32> to vector<8x1024xbf16>
    %c0_6 = arith.constant 0 : index
    %c0_7 = arith.constant 0 : index
    %9 = vector.load %arg4[%c0_6, %c0_7] : memref<1024x512xbf16, #tpu.memory_space<vmem>>, vector<1024x512xbf16>
    %cst_8 = arith.constant dense<0.000000e+00> : vector<8x512xf32>
    %10 = tpu.matmul %8, %9, %cst_8 {dimension_numbers = #tpu.dot_dimension_numbers<[1], [0], [0], [1], [0, 0, 1, 1], [], []>} : vector<8x1024xbf16>, vector<1024x512xbf16>, vector<8x512xf32> -> vector<8x512xf32>
    %c0_9 = arith.constant 0 : index
    %c0_10 = arith.constant 0 : index
    %11 = vector.load %arg5[%c0_9, %c0_10] : memref<1x512xf32, #tpu.memory_space<vmem>>, vector<1x512xf32>
    %12 = vector.broadcast %11 : vector<1x512xf32> to vector<8x512xf32>
    %13 = arith.addf %10, %12 : vector<8x512xf32>
    %cst_11 = arith.constant 0.000000e+00 : f32
    %14 = vector.broadcast %cst_11 : f32 to vector<8x512xf32>
    %15 = arith.maximumf %13, %14 : vector<8x512xf32>
    %16 = arith.truncf %15 : vector<8x512xf32> to vector<8x512xbf16>
    %c0_12 = arith.constant 0 : index
    %c0_13 = arith.constant 0 : index
    %17 = vector.load %arg6[%c0_12, %c0_13] : memref<512x256xbf16, #tpu.memory_space<vmem>>, vector<512x256xbf16>
    %cst_14 = arith.constant dense<0.000000e+00> : vector<8x256xf32>
    %18 = tpu.matmul %16, %17, %cst_14 {dimension_numbers = #tpu.dot_dimension_numbers<[1], [0], [0], [1], [0, 0, 1, 1], [], []>} : vector<8x512xbf16>, vector<512x256xbf16>, vector<8x256xf32> -> vector<8x256xf32>
    %c0_15 = arith.constant 0 : index
    %c0_16 = arith.constant 0 : index
    %19 = vector.load %arg7[%c0_15, %c0_16] : memref<1x256xf32, #tpu.memory_space<vmem>>, vector<1x256xf32>
    %20 = vector.broadcast %19 : vector<1x256xf32> to vector<8x256xf32>
    %21 = arith.addf %18, %20 : vector<8x256xf32>
    %cst_17 = arith.constant 0.000000e+00 : f32
    %22 = vector.broadcast %cst_17 : f32 to vector<8x256xf32>
    %23 = arith.maximumf %21, %22 : vector<8x256xf32>
    %c0_18 = arith.constant 0 : index
    %c0_19 = arith.constant 0 : index
    %24 = vector.load %arg8[%c0_18, %c0_19] : memref<1x256xbf16, #tpu.memory_space<vmem>>, vector<1x256xbf16>
    %25 = arith.extf %24 : vector<1x256xbf16> to vector<1x256xf32>
    %26 = vector.broadcast %25 : vector<1x256xf32> to vector<8x256xf32>
    %27 = arith.mulf %23, %26 : vector<8x256xf32>
    %cst_20 = arith.constant dense<0.000000e+00> : vector<8xf32>
    %28 = vector.multi_reduction <add>, %27, %cst_20 [1] : vector<8x256xf32> to vector<8xf32>
    %29 = vector.shape_cast %28 : vector<8xf32> to vector<8x1xf32>
    %c0_21 = arith.constant 0 : index
    %c0_22 = arith.constant 0 : index
    %30 = vector.load %arg9[%c0_21, %c0_22] : memref<1x1xf32, #tpu.memory_space<vmem>>, vector<1x1xf32>
    %31 = vector.broadcast %30 : vector<1x1xf32> to vector<8x1xf32>
    %32 = arith.addf %29, %31 : vector<8x1xf32>
    %cst_23 = arith.constant 0.000000e+00 : f32
    %33 = vector.broadcast %cst_23 : f32 to vector<8x1xf32>
    %34 = arith.subf %33, %32 : vector<8x1xf32>
    %35 = math.exp %34 : vector<8x1xf32>
    %cst_24 = arith.constant 1.000000e+00 : f32
    %36 = vector.broadcast %cst_24 : f32 to vector<8x1xf32>
    %37 = arith.addf %36, %35 : vector<8x1xf32>
    %cst_25 = arith.constant 1.000000e+00 : f32
    %38 = vector.broadcast %cst_25 : f32 to vector<8x1xf32>
    %39 = arith.divf %38, %37 : vector<8x1xf32>
    %c0_26 = arith.constant 0 : index
    %c0_27 = arith.constant 0 : index
    %40 = vector.load %arg10[%c0_26, %c0_27] : memref<8x1xf32, #tpu.memory_space<vmem>>, vector<8x1xf32>
    tpu.vector_store %arg10[%c0_26, %c0_27], %39 {strides = array<i32>} : memref<8x1xf32, #tpu.memory_space<vmem>>, vector<8x1xf32>,
    return
  }
  func.func @transform_0(%arg0: i32) -> (i32, i32) {
    %c0_i32 = arith.constant 0 : i32
    %c0_i32_0 = arith.constant 0 : i32
    return %arg0, %c0_i32 : i32, i32
  }
  func.func @transform_1(%arg0: i32) -> (i32, i32) {
    %c0_i32 = arith.constant 0 : i32
    %c0_i32_0 = arith.constant 0 : i32
    %c0_i32_1 = arith.constant 0 : i32
    return %c0_i32, %c0_i32_0 : i32, i32
  }
  func.func @transform_2(%arg0: i32) -> (i32, i32) {
    %c0_i32 = arith.constant 0 : i32
    %c0_i32_0 = arith.constant 0 : i32
    %c0_i32_1 = arith.constant 0 : i32
    return %c0_i32, %c0_i32_0 : i32, i32
  }
  func.func @transform_3(%arg0: i32) -> (i32, i32) {
    %c0_i32 = arith.constant 0 : i32
    %c0_i32_0 = arith.constant 0 : i32
    %c0_i32_1 = arith.constant 0 : i32
    return %c0_i32, %c0_i32_0 : i32, i32
  }
  func.func @transform_4(%arg0: i32) -> (i32, i32) {
    %c0_i32 = arith.constant 0 : i32
    %c0_i32_0 = arith.constant 0 : i32
    %c0_i32_1 = arith.constant 0 : i32
    return %c0_i32, %c0_i32_0 : i32, i32
  }
  func.func @transform_5(%arg0: i32) -> (i32, i32) {
    %c0_i32 = arith.constant 0 : i32
    %c0_i32_0 = arith.constant 0 : i32
    %c0_i32_1 = arith.constant 0 : i32
    return %c0_i32, %c0_i32_0 : i32, i32
  }
  func.func @transform_6(%arg0: i32) -> (i32, i32) {
    %c0_i32 = arith.constant 0 : i32
    %c0_i32_0 = arith.constant 0 : i32
    %c0_i32_1 = arith.constant 0 : i32
    return %c0_i32, %c0_i32_0 : i32, i32
  }
  func.func @transform_7(%arg0: i32) -> (i32, i32) {
    %c0_i32 = arith.constant 0 : i32
    %c0_i32_0 = arith.constant 0 : i32
    %c0_i32_1 = arith.constant 0 : i32
    return %c0_i32, %c0_i32_0 : i32, i32
  }
  func.func @transform_8(%arg0: i32) -> (i32, i32) {
    %c0_i32 = arith.constant 0 : i32
    %c0_i32_0 = arith.constant 0 : i32
    %c0_i32_1 = arith.constant 0 : i32
    return %c0_i32, %c0_i32_0 : i32, i32
  }
  func.func @transform_9(%arg0: i32) -> (i32, i32) {
    %c0_i32 = arith.constant 0 : i32
    %c0_i32_0 = arith.constant 0 : i32
    return %arg0, %c0_i32 : i32, i32
  }
}

</mosaic_0001>

<llo_original>
// kernel: discriminator_forward.1
$region0: #{discriminator_forward.1}
  #allocation0 [shape = 'u32[]', space=smem, size = 0x4, offset = 0x4, fixed_abs, tag = 'smem constant byte address 0x4 - core index']
  #allocation1 [shape = 'u32[72,128]{1,0:T(1,128)}', space=vmem, size = 0x9000, scoped, tag = 'internal scratch']
  #allocation2 [shape = 'f32[1,1]{1,0:T(1,128)S(1)}', space=vmem, size = 0x200, scoped, tag = 'scoped memory for discriminator_forward.1']
  %s0 = inlined_call_operand.vmem [shape: bf16[8,1024], index: 0, kind: input, shape index: {}]
  %s1 = inlined_call_operand.vmem [shape: bf16[1024,1024], index: 1, kind: input, shape index: {}]
  %s2 = inlined_call_operand.vmem [shape: f32[1,1024], index: 2, kind: input, shape index: {}]
  %s3 = inlined_call_operand.vmem [shape: bf16[1024,512], index: 3, kind: input, shape index: {}]
  %s4 = inlined_call_operand.vmem [shape: f32[1,512], index: 4, kind: input, shape index: {}]
  %s5 = inlined_call_operand.vmem [shape: bf16[512,256], index: 5, kind: input, shape index: {}]
  %s6 = inlined_call_operand.vmem [shape: f32[1,256], index: 6, kind: input, shape index: {}]
  %s7 = inlined_call_operand.vmem [shape: bf16[1,256], index: 7, kind: input, shape index: {}]
  %s8 = inlined_call_operand.<no memory space> [shape: f32[1,1], index: 8, kind: input, shape index: {}]
  %s9 = inlined_call_operand.vmem [shape: f32[8,1], index: 9, kind: output, shape index: {}]
  %s10 = sld [smem:[#allocation0]]
  $region46: #{discriminator_forward.1} parent=0
    _
  %s12 = ssub.s32 1, %s10
  %s13 = scalar_select 0, %s12, %s10
  %v14 = vstv %s8
  %15 = vst [vmem:[#allocation2] sm:$0x1] %v14
  // Predicated region
  $region2: #{discriminator_forward.1} parent=0 // pred_check
    _
  $region3: #{discriminator_forward.1} parent=0 // pred_check_branch
    %17 = sbr.rel (0) target = $region5
  $region4: #{discriminator_forward.1} parent=0 // pred_region
    _
  $region5: #{discriminator_forward.1} parent=0 // pred_fallthru
    _
  // Predicated region
  $region6: #{discriminator_forward.1} parent=0 // pred_check
    _
  $region7: #{discriminator_forward.1} parent=0 // pred_check_branch
    %19 = sbr.rel (0) target = $region9
  $region8: #{discriminator_forward.1} parent=0 // pred_region
    _
  $region9: #{discriminator_forward.1} parent=0 // pred_fallthru
    _
  // Predicated region
  $region10: #{discriminator_forward.1} parent=0 // pred_check
    _
  $region11: #{discriminator_forward.1} parent=0 // pred_check_branch
    %21 = sbr.rel (0) target = $region13
  $region12: #{discriminator_forward.1} parent=0 // pred_region
    _
  $region13: #{discriminator_forward.1} parent=0 // pred_fallthru
    _
  // Predicated region
  $region14: #{discriminator_forward.1} parent=0 // pred_check
    _
  $region15: #{discriminator_forward.1} parent=0 // pred_check_branch
    %23 = sbr.rel (0) target = $region17
  $region16: #{discriminator_forward.1} parent=0 // pred_region
    _
  $region17: #{discriminator_forward.1} parent=0 // pred_fallthru
    _
  // Predicated region
  $region18: #{discriminator_forward.1} parent=0 // pred_check
    _
  $region19: #{discriminator_forward.1} parent=0 // pred_check_branch
    %25 = sbr.rel (0) target = $region21
  $region20: #{discriminator_forward.1} parent=0 // pred_region
    _
  $region21: #{discriminator_forward.1} parent=0 // pred_fallthru
    _
  // Predicated region
  $region22: #{discriminator_forward.1} parent=0 // pred_check
    _
  $region23: #{discriminator_forward.1} parent=0 // pred_check_branch
    %27 = sbr.rel (0) target = $region25
  $region24: #{discriminator_forward.1} parent=0 // pred_region
    _
  $region25: #{discriminator_forward.1} parent=0 // pred_fallthru
    _
  // Predicated region
  $region26: #{discriminator_forward.1} parent=0 // pred_check
    _
  $region27: #{discriminator_forward.1} parent=0 // pred_check_branch
    %29 = sbr.rel (0) target = $region29
  $region28: #{discriminator_forward.1} parent=0 // pred_region
    _
  $region29: #{discriminator_forward.1} parent=0 // pred_fallthru
    _
  // Predicated region
  $region30: #{discriminator_forward.1} parent=0 // pred_check
    _
  $region31: #{discriminator_forward.1} parent=0 // pred_check_branch
    %31 = sbr.rel (0) target = $region33
  $region32: #{discriminator_forward.1} parent=0 // pred_region
    _
  $region33: #{discriminator_forward.1} parent=0 // pred_fallthru
    _
  // Predicated region
  $region34: #{discriminator_forward.1} parent=0 // pred_check
    _
  $region35: #{discriminator_forward.1} parent=0 // pred_check_branch
    %33 = sbr.rel (0) target = $region37
  $region36: #{discriminator_forward.1} parent=0 // pred_region
    _
  $region37: #{discriminator_forward.1} parent=0 // pred_fallthru
    _
  %v34 = vld [vmem:[%s0] sm:$0xff]
  %v35 = vld [vmem:[%s0 + $0x8] sm:$0xff]
  %v36 = vld [vmem:[%s0 + $0x10] sm:$0xff]
  %v37 = vld [vmem:[%s0 + $0x18] sm:$0xff]
  %v38 = vld [vmem:[%s1] sm:$0xff]
  %v39 = vld [vmem:[%s1 + $0x8] sm:$0xff]
  %v40 = vld [vmem:[%s1 + $0x10] sm:$0xff]
  %v41 = vld [vmem:[%s1 + $0x18] sm:$0xff]
  %v42 = vld [vmem:[%s1 + $0x20] sm:$0xff]
  %v43 = vld [vmem:[%s1 + $0x28] sm:$0xff]
  %v44 = vld [vmem:[%s1 + $0x30] sm:$0xff]
  %v45 = vld [vmem:[%s1 + $0x38] sm:$0xff]
  %v46 = vld [vmem:[%s1 + $0x40] sm:$0xff]
  %v47 = vld [vmem:[%s1 + $0x48] sm:$0xff]
  %v48 = vld [vmem:[%s1 + $0x50] sm:$0xff]
  %v49 = vld [vmem:[%s1 + $0x58] sm:$0xff]
  %v50 = vld [vmem:[%s1 + $0x60] sm:$0xff]
  %v51 = vld [vmem:[%s1 + $0x68] sm:$0xff]
  %v52 = vld [vmem:[%s1 + $0x70] sm:$0xff]
  %v53 = vld [vmem:[%s1 + $0x78] sm:$0xff]
  %v54 = vld [vmem:[%s1 + $0x80] sm:$0xff]
  %v55 = vld [vmem:[%s1 + $0x88] sm:$0xff]
  %v56 = vld [vmem:[%s1 + $0x90] sm:$0xff]
  %v57 = vld [vmem:[%s1 + $0x98] sm:$0xff]
  %v58 = vld [vmem:[%s1 + $0xa0] sm:$0xff]
  %v59 = vld [vmem:[%s1 + $0xa8] sm:$0xff]
  %v60 = vld [vmem:[%s1 + $0xb0] sm:$0xff]
  %v61 = vld [vmem:[%s1 + $0xb8] sm:$0xff]
  %v62 = vld [vmem:[%s1 + $0xc0] sm:$0xff]
  %v63 = vld [vmem:[%s1 + $0xc8] sm:$0xff]
  %v64 = vld [vmem:[%s1 + $0xd0] sm:$0xff]
  %v65 = vld [vmem:[%s1 + $0xd8] sm:$0xff]
  %v66 = vld [vmem:[%s1 + $0xe0] sm:$0xff]
  %v67 = vld [vmem:[%s1 + $0xe8] sm:$0xff]
  %v68 = vld [vmem:[%s1 + $0xf0] sm:$0xff]
  %v69 = vld [vmem:[%s1 + $0xf8] sm:$0xff]
  %v70 = vld [vmem:[%s1 + $0x100] sm:$0xff]
  %v71 = vld [vmem:[%s1 + $0x108] sm:$0xff]
  %v72 = vld [vmem:[%s1 + $0x110] sm:$0xff]
  %v73 = vld [vmem:[%s1 + $0x118] sm:$0xff]
  %v74 = vld [vmem:[%s1 + $0x120] sm:$0xff]
  %v75 = vld [vmem:[%s1 + $0x128] sm:$0xff]
  %v76 = vld [vmem:[%s1 + $0x130] sm:$0xff]
  %v77 = vld [vmem:[%s1 + $0x138] sm:$0xff]
  %v78 = vld [vmem:[%s1 + $0x140] sm:$0xff]
  %v79 = vld [vmem:[%s1 + $0x148] sm:$0xff]
  %v80 = vld [vmem:[%s1 + $0x150] sm:$0xff]
  %v81 = vld [vmem:[%s1 + $0x158] sm:$0xff]
  %v82 = vld [vmem:[%s1 + $0x160] sm:$0xff]
  %v83 = vld [vmem:[%s1 + $0x168] sm:$0xff]
  %v84 = vld [vmem:[%s1 + $0x170] sm:$0xff]
  %v85 = vld [vmem:[%s1 + $0x178] sm:$0xff]
  %v86 = vld [vmem:[%s1 + $0x180] sm:$0xff]
  %v87 = vld [vmem:[%s1 + $0x188] sm:$0xff]
  %v88 = vld [vmem:[%s1 + $0x190] sm:$0xff]
  %v89 = vld [vmem:[%s1 + $0x198] sm:$0xff]
  %v90 = vld [vmem:[%s1 + $0x1a0] sm:$0xff]
  %v91 = vld [vmem:[%s1 + $0x1a8] sm:$0xff]
  %v92 = vld [vmem:[%s1 + $0x1b0] sm:$0xff]
  %v93 = vld [vmem:[%s1 + $0x1b8] sm:$0xff]
  %v94 = vld [vmem:[%s1 + $0x1c0] sm:$0xff]
  %v95 = vld [vmem:[%s1 + $0x1c8] sm:$0xff]
  %v96 = vld [vmem:[%s1 + $0x1d0] sm:$0xff]
  %v97 = vld [vmem:[%s1 + $0x1d8] sm:$0xff]
  %v98 = vld [vmem:[%s1 + $0x1e0] sm:$0xff]
  %v99 = vld [vmem:[%s1 + $0x1e8] sm:$0xff]
  %v100 = vld [vmem:[%s1 + $0x1f0] sm:$0xff]
  %v101 = vld [vmem:[%s1 + $0x1f8] sm:$0xff]
  %v102 = vld [vmem:[%s1 + $0x200] sm:$0xff]
  %v103 = vld [vmem:[%s1 + $0x208] sm:$0xff]
  %v104 = vld [vmem:[%s1 + $0x210] sm:$0xff]
  %v105 = vld [vmem:[%s1 + $0x218] sm:$0xff]
  %v106 = vld [vmem:[%s1 + $0x220] sm:$0xff]
  %v107 = vld [vmem:[%s1 + $0x228] sm:$0xff]
  %v108 = vld [vmem:[%s1 + $0x230] sm:$0xff]
  %v109 = vld [vmem:[%s1 + $0x238] sm:$0xff]
  %v110 = vld [vmem:[%s1 + $0x240] sm:$0xff]
  %v111 = vld [vmem:[%s1 + $0x248] sm:$0xff]
  %v112 = vld [vmem:[%s1 + $0x250] sm:$0xff]
  %v113 = vld [vmem:[%s1 + $0x258] sm:$0xff]
  %v114 = vld [vmem:[%s1 + $0x260] sm:$0xff]
  %v115 = vld [vmem:[%s1 + $0x268] sm:$0xff]
  %v116 = vld [vmem:[%s1 + $0x270] sm:$0xff]
  %v117 = vld [vmem:[%s1 + $0x278] sm:$0xff]
  %v118 = vld [vmem:[%s1 + $0x280] sm:$0xff]
  %v119 = vld [vmem:[%s1 + $0x288] sm:$0xff]
  %v120 = vld [vmem:[%s1 + $0x290] sm:$0xff]
  %v121 = vld [vmem:[%s1 + $0x298] sm:$0xff]
  %v122 = vld [vmem:[%s1 + $0x2a0] sm:$0xff]
  %v123 = vld [vmem:[%s1 + $0x2a8] sm:$0xff]
  %v124 = vld [vmem:[%s1 + $0x2b0] sm:$0xff]
  %v125 = vld [vmem:[%s1 + $0x2b8] sm:$0xff]
  %v126 = vld [vmem:[%s1 + $0x2c0] sm:$0xff]
  %v127 = vld [vmem:[%s1 + $0x2c8] sm:$0xff]
  %v128 = vld [vmem:[%s1 + $0x2d0] sm:$0xff]
  %v129 = vld [vmem:[%s1 + $0x2d8] sm:$0xff]
  %v130 = vld [vmem:[%s1 + $0x2e0] sm:$0xff]
  %v131 = vld [vmem:[%s1 + $0x2e8] sm:$0xff]
  %v132 = vld [vmem:[%s1 + $0x2f0] sm:$0xff]
  %v133 = vld [vmem:[%s1 + $0x2f8] sm:$0xff]
  %v134 = vld [vmem:[%s1 + $0x300] sm:$0xff]
  %v135 = vld [vmem:[%s1 + $0x308] sm:$0xff]
  %v136 = vld [vmem:[%s1 + $0x310] sm:$0xff]
  %v137 = vld [vmem:[%s1 + $0x318] sm:$0xff]
  %v138 = vld [vmem:[%s1 + $0x320] sm:$0xff]
  %v139 = vld [vmem:[%s1 + $0x328] sm:$0xff]
  %v140 = vld [vmem:[%s1 + $0x330] sm:$0xff]
  %v141 = vld [vmem:[%s1 + $0x338] sm:$0xff]
  %v142 = vld [vmem:[%s1 + $0x340] sm:$0xff]
  %v143 = vld [vmem:[%s1 + $0x348] sm:$0xff]
  %v144 = vld [vmem:[%s1 + $0x350] sm:$0xff]
  %v145 = vld [vmem:[%s1 + $0x358] sm:$0xff]
  %v146 = vld [vmem:[%s1 + $0x360] sm:$0xff]
  %v147 = vld [vmem:[%s1 + $0x368] sm:$0xff]
  %v148 = vld [vmem:[%s1 + $0x370] sm:$0xff]
  %v149 = vld [vmem:[%s1 + $0x378] sm:$0xff]
  %v150 = vld [vmem:[%s1 + $0x380] sm:$0xff]
  %v151 = vld [vmem:[%s1 + $0x388] sm:$0xff]
  %v152 = vld [vmem:[%s1 + $0x390] sm:$0xff]
  %v153 = vld [vmem:[%s1 + $0x398] sm:$0xff]
  %v154 = vld [vmem:[%s1 + $0x3a0] sm:$0xff]
  %v155 = vld [vmem:[%s1 + $0x3a8] sm:$0xff]
  %v156 = vld [vmem:[%s1 + $0x3b0] sm:$0xff]
  %v157 = vld [vmem:[%s1 + $0x3b8] sm:$0xff]
  %v158 = vld [vmem:[%s1 + $0x3c0] sm:$0xff]
  %v159 = vld [vmem:[%s1 + $0x3c8] sm:$0xff]
  %v160 = vld [vmem:[%s1 + $0x3d0] sm:$0xff]
  %v161 = vld [vmem:[%s1 + $0x3d8] sm:$0xff]
  %v162 = vld [vmem:[%s1 + $0x3e0] sm:$0xff]
  %v163 = vld [vmem:[%s1 + $0x3e8] sm:$0xff]
  %v164 = vld [vmem:[%s1 + $0x3f0] sm:$0xff]
  %v165 = vld [vmem:[%s1 + $0x3f8] sm:$0xff]
  %v166 = vld [vmem:[%s1 + $0x400] sm:$0xff]
  %v167 = vld [vmem:[%s1 + $0x408] sm:$0xff]
  %v168 = vld [vmem:[%s1 + $0x410] sm:$0xff]
  %v169 = vld [vmem:[%s1 + $0x418] sm:$0xff]
  %v170 = vld [vmem:[%s1 + $0x420] sm:$0xff]
  %v171 = vld [vmem:[%s1 + $0x428] sm:$0xff]
  %v172 = vld [vmem:[%s1 + $0x430] sm:$0xff]
  %v173 = vld [vmem:[%s1 + $0x438] sm:$0xff]
  %v174 = vld [vmem:[%s1 + $0x440] sm:$0xff]
  %v175 = vld [vmem:[%s1 + $0x448] sm:$0xff]
  %v176 = vld [vmem:[%s1 + $0x450] sm:$0xff]
  %v177 = vld [vmem:[%s1 + $0x458] sm:$0xff]
  %v178 = vld [vmem:[%s1 + $0x460] sm:$0xff]
  %v179 = vld [vmem:[%s1 + $0x468] sm:$0xff]
  %v180 = vld [vmem:[%s1 + $0x470] sm:$0xff]
  %v181 = vld [vmem:[%s1 + $0x478] sm:$0xff]
  %v182 = vld [vmem:[%s1 + $0x480] sm:$0xff]
  %v183 = vld [vmem:[%s1 + $0x488] sm:$0xff]
  %v184 = vld [vmem:[%s1 + $0x490] sm:$0xff]
  %v185 = vld [vmem:[%s1 + $0x498] sm:$0xff]
  %v186 = vld [vmem:[%s1 + $0x4a0] sm:$0xff]
  %v187 = vld [vmem:[%s1 + $0x4a8] sm:$0xff]
  %v188 = vld [vmem:[%s1 + $0x4b0] sm:$0xff]
  %v189 = vld [vmem:[%s1 + $0x4b8] sm:$0xff]
  %v190 = vld [vmem:[%s1 + $0x4c0] sm:$0xff]
  %v191 = vld [vmem:[%s1 + $0x4c8] sm:$0xff]
  %v192 = vld [vmem:[%s1 + $0x4d0] sm:$0xff]
  %v193 = vld [vmem:[%s1 + $0x4d8] sm:$0xff]
  %v194 = vld [vmem:[%s1 + $0x4e0] sm:$0xff]
  %v195 = vld [vmem:[%s1 + $0x4e8] sm:$0xff]
  %v196 = vld [vmem:[%s1 + $0x4f0] sm:$0xff]
  %v197 = vld [vmem:[%s1 + $0x4f8] sm:$0xff]
  %v198 = vld [vmem:[%s1 + $0x500] sm:$0xff]
  %v199 = vld [vmem:[%s1 + $0x508] sm:$0xff]
  %v200 = vld [vmem:[%s1 + $0x510] sm:$0xff]
  %v201 = vld [vmem:[%s1 + $0x518] sm:$0xff]
  %v202 = vld [vmem:[%s1 + $0x520] sm:$0xff]
  %v203 = vld [vmem:[%s1 + $0x528] sm:$0xff]
  %v204 = vld [vmem:[%s1 + $0x530] sm:$0xff]
  %v205 = vld [vmem:[%s1 + $0x538] sm:$0xff]
  %v206 = vld [vmem:[%s1 + $0x540] sm:$0xff]
  %v207 = vld [vmem:[%s1 + $0x548] sm:$0xff]
  %v208 = vld [vmem:[%s1 + $0x550] sm:$0xff]
  %v209 = vld [vmem:[%s1 + $0x558] sm:$0xff]
  %v210 = vld [vmem:[%s1 + $0x560] sm:$0xff]
  %v211 = vld [vmem:[%s1 + $0x568] sm:$0xff]
  %v212 = vld [vmem:[%s1 + $0x570] sm:$0xff]
  %v213 = vld [vmem:[%s1 + $0x578] sm:$0xff]
  %v214 = vld [vmem:[%s1 + $0x580] sm:$0xff]
  %v215 = vld [vmem:[%s1 + $0x588] sm:$0xff]
  %v216 = vld [vmem:[%s1 + $0x590] sm:$0xff]
  %v217 = vld [vmem:[%s1 + $0x598] sm:$0xff]
  %v218 = vld [vmem:[%s1 + $0x5a0] sm:$0xff]
  %v219 = vld [vmem:[%s1 + $0x5a8] sm:$0xff]
  %v220 = vld [vmem:[%s1 + $0x5b0] sm:$0xff]
  %v221 = vld [vmem:[%s1 + $0x5b8] sm:$0xff]
  %v222 = vld [vmem:[%s1 + $0x5c0] sm:$0xff]
  %v223 = vld [vmem:[%s1 + $0x5c8] sm:$0xff]
  %v224 = vld [vmem:[%s1 + $0x5d0] sm:$0xff]
  %v225 = vld [vmem:[%s1 + $0x5d8] sm:$0xff]
  %v226 = vld [vmem:[%s1 + $0x5e0] sm:$0xff]
  %v227 = vld [vmem:[%s1 + $0x5e8] sm:$0xff]
  %v228 = vld [vmem:[%s1 + $0x5f0] sm:$0xff]
  %v229 = vld [vmem:[%s1 + $0x5f8] sm:$0xff]
  %v230 = vld [vmem:[%s1 + $0x600] sm:$0xff]
  %v231 = vld [vmem:[%s1 + $0x608] sm:$0xff]
  %v232 = vld [vmem:[%s1 + $0x610] sm:$0xff]
  %v233 = vld [vmem:[%s1 + $0x618] sm:$0xff]
  %v234 = vld [vmem:[%s1 + $0x620] sm:$0xff]
  %v235 = vld [vmem:[%s1 + $0x628] sm:$0xff]
  %v236 = vld [vmem:[%s1 + $0x630] sm:$0xff]
  %v237 = vld [vmem:[%s1 + $0x638] sm:$0xff]
  %v238 = vld [vmem:[%s1 + $0x640] sm:$0xff]
  %v239 = vld [vmem:[%s1 + $0x648] sm:$0xff]
  %v240 = vld [vmem:[%s1 + $0x650] sm:$0xff]
  %v241 = vld [vmem:[%s1 + $0x658] sm:$0xff]
  %v242 = vld [vmem:[%s1 + $0x660] sm:$0xff]
  %v243 = vld [vmem:[%s1 + $0x668] sm:$0xff]
  %v244 = vld [vmem:[%s1 + $0x670] sm:$0xff]
  %v245 = vld [vmem:[%s1 + $0x678] sm:$0xff]
  %v246 = vld [vmem:[%s1 + $0x680] sm:$0xff]
  %v247 = vld [vmem:[%s1 + $0x688] sm:$0xff]
  %v248 = vld [vmem:[%s1 + $0x690] sm:$0xff]
  %v249 = vld [vmem:[%s1 + $0x698] sm:$0xff]
  %v250 = vld [vmem:[%s1 + $0x6a0] sm:$0xff]
  %v251 = vld [vmem:[%s1 + $0x6a8] sm:$0xff]
  %v252 = vld [vmem:[%s1 + $0x6b0] sm:$0xff]
  %v253 = vld [vmem:[%s1 + $0x6b8] sm:$0xff]
  %v254 = vld [vmem:[%s1 + $0x6c0] sm:$0xff]
  %v255 = vld [vmem:[%s1 + $0x6c8] sm:$0xff]
  %v256 = vld [vmem:[%s1 + $0x6d0] sm:$0xff]
  %v257 = vld [vmem:[%s1 + $0x6d8] sm:$0xff]
  %v258 = vld [vmem:[%s1 + $0x6e0] sm:$0xff]
  %v259 = vld [vmem:[%s1 + $0x6e8] sm:$0xff]
  %v260 = vld [vmem:[%s1 + $0x6f0] sm:$0xff]
  %v261 = vld [vmem:[%s1 + $0x6f8] sm:$0xff]
  %v262 = vld [vmem:[%s1 + $0x700] sm:$0xff]
  %v263 = vld [vmem:[%s1 + $0x708] sm:$0xff]
  %v264 = vld [vmem:[%s1 + $0x710] sm:$0xff]
  %v265 = vld [vmem:[%s1 + $0x718] sm:$0xff]
  %v266 = vld [vmem:[%s1 + $0x720] sm:$0xff]
  %v267 = vld [vmem:[%s1 + $0x728] sm:$0xff]
  %v268 = vld [vmem:[%s1 + $0x730] sm:$0xff]
  %v269 = vld [vmem:[%s1 + $0x738] sm:$0xff]
  %v270 = vld [vmem:[%s1 + $0x740] sm:$0xff]
  %v271 = vld [vmem:[%s1 + $0x748] sm:$0xff]
  %v272 = vld [vmem:[%s1 + $0x750] sm:$0xff]
  %v273 = vld [vmem:[%s1 + $0x758] sm:$0xff]
  %v274 = vld [vmem:[%s1 + $0x760] sm:$0xff]
  %v275 = vld [vmem:[%s1 + $0x768] sm:$0xff]
  %v276 = vld [vmem:[%s1 + $0x770] sm:$0xff]
  %v277 = vld [vmem:[%s1 + $0x778] sm:$0xff]
  %v278 = vld [vmem:[%s1 + $0x780] sm:$0xff]
  %v279 = vld [vmem:[%s1 + $0x788] sm:$0xff]
  %v280 = vld [vmem:[%s1 + $0x790] sm:$0xff]
  %v281 = vld [vmem:[%s1 + $0x798] sm:$0xff]
  %v282 = vld [vmem:[%s1 + $0x7a0] sm:$0xff]
  %v283 = vld [vmem:[%s1 + $0x7a8] sm:$0xff]
  %v284 = vld [vmem:[%s1 + $0x7b0] sm:$0xff]
  %v285 = vld [vmem:[%s1 + $0x7b8] sm:$0xff]
  %v286 = vld [vmem:[%s1 + $0x7c0] sm:$0xff]
  %v287 = vld [vmem:[%s1 + $0x7c8] sm:$0xff]
  %v288 = vld [vmem:[%s1 + $0x7d0] sm:$0xff]
  %v289 = vld [vmem:[%s1 + $0x7d8] sm:$0xff]
  %v290 = vld [vmem:[%s1 + $0x7e0] sm:$0xff]
  %v291 = vld [vmem:[%s1 + $0x7e8] sm:$0xff]
  %v292 = vld [vmem:[%s1 + $0x7f0] sm:$0xff]
  %v293 = vld [vmem:[%s1 + $0x7f8] sm:$0xff]
  %v294 = vld [vmem:[%s1 + $0x800] sm:$0xff]
  %v295 = vld [vmem:[%s1 + $0x808] sm:$0xff]
  %v296 = vld [vmem:[%s1 + $0x810] sm:$0xff]
  %v297 = vld [vmem:[%s1 + $0x818] sm:$0xff]
  %v298 = vld [vmem:[%s1 + $0x820] sm:$0xff]
  %v299 = vld [vmem:[%s1 + $0x828] sm:$0xff]
  %v300 = vld [vmem:[%s1 + $0x830] sm:$0xff]
  %v301 = vld [vmem:[%s1 + $0x838] sm:$0xff]
  %v302 = vld [vmem:[%s1 + $0x840] sm:$0xff]
  %v303 = vld [vmem:[%s1 + $0x848] sm:$0xff]
  %v304 = vld [vmem:[%s1 + $0x850] sm:$0xff]
  %v305 = vld [vmem:[%s1 + $0x858] sm:$0xff]
  %v306 = vld [vmem:[%s1 + $0x860] sm:$0xff]
  %v307 = vld [vmem:[%s1 + $0x868] sm:$0xff]
  %v308 = vld [vmem:[%s1 + $0x870] sm:$0xff]
  %v309 = vld [vmem:[%s1 + $0x878] sm:$0xff]
  %v310 = vld [vmem:[%s1 + $0x880] sm:$0xff]
  %v311 = vld [vmem:[%s1 + $0x888] sm:$0xff]
  %v312 = vld [vmem:[%s1 + $0x890] sm:$0xff]
  %v313 = vld [vmem:[%s1 + $0x898] sm:$0xff]
  %v314 = vld [vmem:[%s1 + $0x8a0] sm:$0xff]
  %v315 = vld [vmem:[%s1 + $0x8a8] sm:$0xff]
  %v316 = vld [vmem:[%s1 + $0x8b0] sm:$0xff]
  %v317 = vld [vmem:[%s1 + $0x8b8] sm:$0xff]
  %v318 = vld [vmem:[%s1 + $0x8c0] sm:$0xff]
  %v319 = vld [vmem:[%s1 + $0x8c8] sm:$0xff]
  %v320 = vld [vmem:[%s1 + $0x8d0] sm:$0xff]
  %v321 = vld [vmem:[%s1 + $0x8d8] sm:$0xff]
  %v322 = vld [vmem:[%s1 + $0x8e0] sm:$0xff]
  %v323 = vld [vmem:[%s1 + $0x8e8] sm:$0xff]
  %v324 = vld [vmem:[%s1 + $0x8f0] sm:$0xff]
  %v325 = vld [vmem:[%s1 + $0x8f8] sm:$0xff]
  %v326 = vld [vmem:[%s1 + $0x900] sm:$0xff]
  %v327 = vld [vmem:[%s1 + $0x908] sm:$0xff]
  %v328 = vld [vmem:[%s1 + $0x910] sm:$0xff]
  %v329 = vld [vmem:[%s1 + $0x918] sm:$0xff]
  %v330 = vld [vmem:[%s1 + $0x920] sm:$0xff]
  %v331 = vld [vmem:[%s1 + $0x928] sm:$0xff]
  %v332 = vld [vmem:[%s1 + $0x930] sm:$0xff]
  %v333 = vld [vmem:[%s1 + $0x938] sm:$0xff]
  %v334 = vld [vmem:[%s1 + $0x940] sm:$0xff]
  %v335 = vld [vmem:[%s1 + $0x948] sm:$0xff]
  %v336 = vld [vmem:[%s1 + $0x950] sm:$0xff]
  %v337 = vld [vmem:[%s1 + $0x958] sm:$0xff]
  %v338 = vld [vmem:[%s1 + $0x960] sm:$0xff]
  %v339 = vld [vmem:[%s1 + $0x968] sm:$0xff]
  %v340 = vld [vmem:[%s1 + $0x970] sm:$0xff]
  %v341 = vld [vmem:[%s1 + $0x978] sm:$0xff]
  %v342 = vld [vmem:[%s1 + $0x980] sm:$0xff]
  %v343 = vld [vmem:[%s1 + $0x988] sm:$0xff]
  %v344 = vld [vmem:[%s1 + $0x990] sm:$0xff]
  %v345 = vld [vmem:[%s1 + $0x998] sm:$0xff]
  %v346 = vld [vmem:[%s1 + $0x9a0] sm:$0xff]
  %v347 = vld [vmem:[%s1 + $0x9a8] sm:$0xff]
  %v348 = vld [vmem:[%s1 + $0x9b0] sm:$0xff]
  %v349 = vld [vmem:[%s1 + $0x9b8] sm:$0xff]
  %v350 = vld [vmem:[%s1 + $0x9c0] sm:$0xff]
  %v351 = vld [vmem:[%s1 + $0x9c8] sm:$0xff]
  %v352 = vld [vmem:[%s1 + $0x9d0] sm:$0xff]
  %v353 = vld [vmem:[%s1 + $0x9d8] sm:$0xff]
  %v354 = vld [vmem:[%s1 + $0x9e0] sm:$0xff]
  %v355 = vld [vmem:[%s1 + $0x9e8] sm:$0xff]
  %v356 = vld [vmem:[%s1 + $0x9f0] sm:$0xff]
  %v357 = vld [vmem:[%s1 + $0x9f8] sm:$0xff]
  %v358 = vld [vmem:[%s1 + $0xa00] sm:$0xff]
  %v359 = vld [vmem:[%s1 + $0xa08] sm:$0xff]
  %v360 = vld [vmem:[%s1 + $0xa10] sm:$0xff]
  %v361 = vld [vmem:[%s1 + $0xa18] sm:$0xff]
  %v362 = vld [vmem:[%s1 + $0xa20] sm:$0xff]
  %v363 = vld [vmem:[%s1 + $0xa28] sm:$0xff]
  %v364 = vld [vmem:[%s1 + $0xa30] sm:$0xff]
  %v365 = vld [vmem:[%s1 + $0xa38] sm:$0xff]
  %v366 = vld [vmem:[%s1 + $0xa40] sm:$0xff]
  %v367 = vld [vmem:[%s1 + $0xa48] sm:$0xff]
  %v368 = vld [vmem:[%s1 + $0xa50] sm:$0xff]
  %v369 = vld [vmem:[%s1 + $0xa58] sm:$0xff]
  %v370 = vld [vmem:[%s1 + $0xa60] sm:$0xff]
  %v371 = vld [vmem:[%s1 + $0xa68] sm:$0xff]
  %v372 = vld [vmem:[%s1 + $0xa70] sm:$0xff]
  %v373 = vld [vmem:[%s1 + $0xa78] sm:$0xff]
  %v374 = vld [vmem:[%s1 + $0xa80] sm:$0xff]
  %v375 = vld [vmem:[%s1 + $0xa88] sm:$0xff]
  %v376 = vld [vmem:[%s1 + $0xa90] sm:$0xff]
  %v377 = vld [vmem:[%s1 + $0xa98] sm:$0xff]
  %v378 = vld [vmem:[%s1 + $0xaa0] sm:$0xff]
  %v379 = vld [vmem:[%s1 + $0xaa8] sm:$0xff]
  %v380 = vld [vmem:[%s1 + $0xab0] sm:$0xff]
  %v381 = vld [vmem:[%s1 + $0xab8] sm:$0xff]
  %v382 = vld [vmem:[%s1 + $0xac0] sm:$0xff]
  %v383 = vld [vmem:[%s1 + $0xac8] sm:$0xff]
  %v384 = vld [vmem:[%s1 + $0xad0] sm:$0xff]
  %v385 = vld [vmem:[%s1 + $0xad8] sm:$0xff]
  %v386 = vld [vmem:[%s1 + $0xae0] sm:$0xff]
  %v387 = vld [vmem:[%s1 + $0xae8] sm:$0xff]
  %v388 = vld [vmem:[%s1 + $0xaf0] sm:$0xff]
  %v389 = vld [vmem:[%s1 + $0xaf8] sm:$0xff]
  %v390 = vld [vmem:[%s1 + $0xb00] sm:$0xff]
  %v391 = vld [vmem:[%s1 + $0xb08] sm:$0xff]
  %v392 = vld [vmem:[%s1 + $0xb10] sm:$0xff]
  %v393 = vld [vmem:[%s1 + $0xb18] sm:$0xff]
  %v394 = vld [vmem:[%s1 + $0xb20] sm:$0xff]
  %v395 = vld [vmem:[%s1 + $0xb28] sm:$0xff]
  %v396 = vld [vmem:[%s1 + $0xb30] sm:$0xff]
  %v397 = vld [vmem:[%s1 + $0xb38] sm:$0xff]
  %v398 = vld [vmem:[%s1 + $0xb40] sm:$0xff]
  %v399 = vld [vmem:[%s1 + $0xb48] sm:$0xff]
  %v400 = vld [vmem:[%s1 + $0xb50] sm:$0xff]
  %v401 = vld [vmem:[%s1 + $0xb58] sm:$0xff]
  %v402 = vld [vmem:[%s1 + $0xb60] sm:$0xff]
  %v403 = vld [vmem:[%s1 + $0xb68] sm:$0xff]
  %v404 = vld [vmem:[%s1 + $0xb70] sm:$0xff]
  %v405 = vld [vmem:[%s1 + $0xb78] sm:$0xff]
  %v406 = vld [vmem:[%s1 + $0xb80] sm:$0xff]
  %v407 = vld [vmem:[%s1 + $0xb88] sm:$0xff]
  %v408 = vld [vmem:[%s1 + $0xb90] sm:$0xff]
  %v409 = vld [vmem:[%s1 + $0xb98] sm:$0xff]
  %v410 = vld [vmem:[%s1 + $0xba0] sm:$0xff]
  %v411 = vld [vmem:[%s1 + $0xba8] sm:$0xff]
  %v412 = vld [vmem:[%s1 + $0xbb0] sm:$0xff]
  %v413 = vld [vmem:[%s1 + $0xbb8] sm:$0xff]
  %v414 = vld [vmem:[%s1 + $0xbc0] sm:$0xff]
  %v415 = vld [vmem:[%s1 + $0xbc8] sm:$0xff]
  %v416 = vld [vmem:[%s1 + $0xbd0] sm:$0xff]
  %v417 = vld [vmem:[%s1 + $0xbd8] sm:$0xff]
  %v418 = vld [vmem:[%s1 + $0xbe0] sm:$0xff]
  %v419 = vld [vmem:[%s1 + $0xbe8] sm:$0xff]
  %v420 = vld [vmem:[%s1 + $0xbf0] sm:$0xff]
  %v421 = vld [vmem:[%s1 + $0xbf8] sm:$0xff]
  %v422 = vld [vmem:[%s1 + $0xc00] sm:$0xff]
  %v423 = vld [vmem:[%s1 + $0xc08] sm:$0xff]
  %v424 = vld [vmem:[%s1 + $0xc10] sm:$0xff]
  %v425 = vld [vmem:[%s1 + $0xc18] sm:$0xff]
  %v426 = vld [vmem:[%s1 + $0xc20] sm:$0xff]
  %v427 = vld [vmem:[%s1 + $0xc28] sm:$0xff]
  %v428 = vld [vmem:[%s1 + $0xc30] sm:$0xff]
  %v429 = vld [vmem:[%s1 + $0xc38] sm:$0xff]
  %v430 = vld [vmem:[%s1 + $0xc40] sm:$0xff]
  %v431 = vld [vmem:[%s1 + $0xc48] sm:$0xff]
  %v432 = vld [vmem:[%s1 + $0xc50] sm:$0xff]
  %v433 = vld [vmem:[%s1 + $0xc58] sm:$0xff]
  %v434 = vld [vmem:[%s1 + $0xc60] sm:$0xff]
  %v435 = vld [vmem:[%s1 + $0xc68] sm:$0xff]
  %v436 = vld [vmem:[%s1 + $0xc70] sm:$0xff]
  %v437 = vld [vmem:[%s1 + $0xc78] sm:$0xff]
  %v438 = vld [vmem:[%s1 + $0xc80] sm:$0xff]
  %v439 = vld [vmem:[%s1 + $0xc88] sm:$0xff]
  %v440 = vld [vmem:[%s1 + $0xc90] sm:$0xff]
  %v441 = vld [vmem:[%s1 + $0xc98] sm:$0xff]
  %v442 = vld [vmem:[%s1 + $0xca0] sm:$0xff]
  %v443 = vld [vmem:[%s1 + $0xca8] sm:$0xff]
  %v444 = vld [vmem:[%s1 + $0xcb0] sm:$0xff]
  %v445 = vld [vmem:[%s1 + $0xcb8] sm:$0xff]
  %v446 = vld [vmem:[%s1 + $0xcc0] sm:$0xff]
  %v447 = vld [vmem:[%s1 + $0xcc8] sm:$0xff]
  %v448 = vld [vmem:[%s1 + $0xcd0] sm:$0xff]
  %v449 = vld [vmem:[%s1 + $0xcd8] sm:$0xff]
  %v450 = vld [vmem:[%s1 + $0xce0] sm:$0xff]
  %v451 = vld [vmem:[%s1 + $0xce8] sm:$0xff]
  %v452 = vld [vmem:[%s1 + $0xcf0] sm:$0xff]
  %v453 = vld [vmem:[%s1 + $0xcf8] sm:$0xff]
  %v454 = vld [vmem:[%s1 + $0xd00] sm:$0xff]
  %v455 = vld [vmem:[%s1 + $0xd08] sm:$0xff]
  %v456 = vld [vmem:[%s1 + $0xd10] sm:$0xff]
  %v457 = vld [vmem:[%s1 + $0xd18] sm:$0xff]
  %v458 = vld [vmem:[%s1 + $0xd20] sm:$0xff]
  %v459 = vld [vmem:[%s1 + $0xd28] sm:$0xff]
  %v460 = vld [vmem:[%s1 + $0xd30] sm:$0xff]
  %v461 = vld [vmem:[%s1 + $0xd38] sm:$0xff]
  %v462 = vld [vmem:[%s1 + $0xd40] sm:$0xff]
  %v463 = vld [vmem:[%s1 + $0xd48] sm:$0xff]
  %v464 = vld [vmem:[%s1 + $0xd50] sm:$0xff]
  %v465 = vld [vmem:[%s1 + $0xd58] sm:$0xff]
  %v466 = vld [vmem:[%s1 + $0xd60] sm:$0xff]
  %v467 = vld [vmem:[%s1 + $0xd68] sm:$0xff]
  %v468 = vld [vmem:[%s1 + $0xd70] sm:$0xff]
  %v469 = vld [vmem:[%s1 + $0xd78] sm:$0xff]
  %v470 = vld [vmem:[%s1 + $0xd80] sm:$0xff]
  %v471 = vld [vmem:[%s1 + $0xd88] sm:$0xff]
  %v472 = vld [vmem:[%s1 + $0xd90] sm:$0xff]
  %v473 = vld [vmem:[%s1 + $0xd98] sm:$0xff]
  %v474 = vld [vmem:[%s1 + $0xda0] sm:$0xff]
  %v475 = vld [vmem:[%s1 + $0xda8] sm:$0xff]
  %v476 = vld [vmem:[%s1 + $0xdb0] sm:$0xff]
  %v477 = vld [vmem:[%s1 + $0xdb8] sm:$0xff]
  %v478 = vld [vmem:[%s1 + $0xdc0] sm:$0xff]
  %v479 = vld [vmem:[%s1 + $0xdc8] sm:$0xff]
  %v480 = vld [vmem:[%s1 + $0xdd0] sm:$0xff]
  %v481 = vld [vmem:[%s1 + $0xdd8] sm:$0xff]
  %v482 = vld [vmem:[%s1 + $0xde0] sm:$0xff]
  %v483 = vld [vmem:[%s1 + $0xde8] sm:$0xff]
  %v484 = vld [vmem:[%s1 + $0xdf0] sm:$0xff]
  %v485 = vld [vmem:[%s1 + $0xdf8] sm:$0xff]
  %v486 = vld [vmem:[%s1 + $0xe00] sm:$0xff]
  %v487 = vld [vmem:[%s1 + $0xe08] sm:$0xff]
  %v488 = vld [vmem:[%s1 + $0xe10] sm:$0xff]
  %v489 = vld [vmem:[%s1 + $0xe18] sm:$0xff]
  %v490 = vld [vmem:[%s1 + $0xe20] sm:$0xff]
  %v491 = vld [vmem:[%s1 + $0xe28] sm:$0xff]
  %v492 = vld [vmem:[%s1 + $0xe30] sm:$0xff]
  %v493 = vld [vmem:[%s1 + $0xe38] sm:$0xff]
  %v494 = vld [vmem:[%s1 + $0xe40] sm:$0xff]
  %v495 = vld [vmem:[%s1 + $0xe48] sm:$0xff]
  %v496 = vld [vmem:[%s1 + $0xe50] sm:$0xff]
  %v497 = vld [vmem:[%s1 + $0xe58] sm:$0xff]
  %v498 = vld [vmem:[%s1 + $0xe60] sm:$0xff]
  %v499 = vld [vmem:[%s1 + $0xe68] sm:$0xff]
  %v500 = vld [vmem:[%s1 + $0xe70] sm:$0xff]
  %v501 = vld [vmem:[%s1 + $0xe78] sm:$0xff]
  %v502 = vld [vmem:[%s1 + $0xe80] sm:$0xff]
  %v503 = vld [vmem:[%s1 + $0xe88] sm:$0xff]
  %v504 = vld [vmem:[%s1 + $0xe90] sm:$0xff]
  %v505 = vld [vmem:[%s1 + $0xe98] sm:$0xff]
  %v506 = vld [vmem:[%s1 + $0xea0] sm:$0xff]
  %v507 = vld [vmem:[%s1 + $0xea8] sm:$0xff]
  %v508 = vld [vmem:[%s1 + $0xeb0] sm:$0xff]
  %v509 = vld [vmem:[%s1 + $0xeb8] sm:$0xff]
  %v510 = vld [vmem:[%s1 + $0xec0] sm:$0xff]
  %v511 = vld [vmem:[%s1 + $0xec8] sm:$0xff]
  %v512 = vld [vmem:[%s1 + $0xed0] sm:$0xff]
  %v513 = vld [vmem:[%s1 + $0xed8] sm:$0xff]
  %v514 = vld [vmem:[%s1 + $0xee0] sm:$0xff]
  %v515 = vld [vmem:[%s1 + $0xee8] sm:$0xff]
  %v516 = vld [vmem:[%s1 + $0xef0] sm:$0xff]
  %v517 = vld [vmem:[%s1 + $0xef8] sm:$0xff]
  %v518 = vld [vmem:[%s1 + $0xf00] sm:$0xff]
  %v519 = vld [vmem:[%s1 + $0xf08] sm:$0xff]
  %v520 = vld [vmem:[%s1 + $0xf10] sm:$0xff]
  %v521 = vld [vmem:[%s1 + $0xf18] sm:$0xff]
  %v522 = vld [vmem:[%s1 + $0xf20] sm:$0xff]
  %v523 = vld [vmem:[%s1 + $0xf28] sm:$0xff]
  %v524 = vld [vmem:[%s1 + $0xf30] sm:$0xff]
  %v525 = vld [vmem:[%s1 + $0xf38] sm:$0xff]
  %v526 = vld [vmem:[%s1 + $0xf40] sm:$0xff]
  %v527 = vld [vmem:[%s1 + $0xf48] sm:$0xff]
  %v528 = vld [vmem:[%s1 + $0xf50] sm:$0xff]
  %v529 = vld [vmem:[%s1 + $0xf58] sm:$0xff]
  %v530 = vld [vmem:[%s1 + $0xf60] sm:$0xff]
  %v531 = vld [vmem:[%s1 + $0xf68] sm:$0xff]
  %v532 = vld [vmem:[%s1 + $0xf70] sm:$0xff]
  %v533 = vld [vmem:[%s1 + $0xf78] sm:$0xff]
  %v534 = vld [vmem:[%s1 + $0xf80] sm:$0xff]
  %v535 = vld [vmem:[%s1 + $0xf88] sm:$0xff]
  %v536 = vld [vmem:[%s1 + $0xf90] sm:$0xff]
  %v537 = vld [vmem:[%s1 + $0xf98] sm:$0xff]
  %v538 = vld [vmem:[%s1 + $0xfa0] sm:$0xff]
  %v539 = vld [vmem:[%s1 + $0xfa8] sm:$0xff]
  %v540 = vld [vmem:[%s1 + $0xfb0] sm:$0xff]
  %v541 = vld [vmem:[%s1 + $0xfb8] sm:$0xff]
  %v542 = vld [vmem:[%s1 + $0xfc0] sm:$0xff]
  %v543 = vld [vmem:[%s1 + $0xfc8] sm:$0xff]
  %v544 = vld [vmem:[%s1 + $0xfd0] sm:$0xff]
  %v545 = vld [vmem:[%s1 + $0xfd8] sm:$0xff]
  %v546 = vld [vmem:[%s1 + $0xfe0] sm:$0xff]
  %v547 = vld [vmem:[%s1 + $0xfe8] sm:$0xff]
  %v548 = vld [vmem:[%s1 + $0xff0] sm:$0xff]
  %v549 = vld [vmem:[%s1 + $0xff8] sm:$0xff]
  %v550 = vld [vmem:[%s2] sm:$0xff]
  %v552 = vperm.slane %v550, 0
  %v553 = vperm.slane %v550, 1
  %v554 = vperm.slane %v550, 2
  %v555 = vperm.slane %v550, 3
  %v556 = vperm.slane %v550, 4
  %v557 = vperm.slane %v550, 5
  %v558 = vperm.slane %v550, 6
  %v559 = vperm.slane %v550, 7
  %v572 = vunpack.c.l.b16 %v34
  %v573 = vunpack.c.h.b16 %v34
  %v574 = vunpack.c.l.b16 %v35
  %v575 = vunpack.c.h.b16 %v35
  %v576 = vunpack.c.l.b16 %v36
  %v577 = vunpack.c.h.b16 %v36
  %v578 = vunpack.c.l.b16 %v37
  %v579 = vunpack.c.h.b16 %v37
  %v580 = vpack.c.b16 %v572, %v572
  %v581 = vpack.c.b16 %v573, %v573
  %v582 = vpack.c.b16 %v574, %v574
  %v583 = vpack.c.b16 %v575, %v575
  %v584 = vpack.c.b16 %v576, %v576
  %v585 = vpack.c.b16 %v577, %v577
  %v586 = vpack.c.b16 %v578, %v578
  %v587 = vpack.c.b16 %v579, %v579
  %v1108 = vunpack.c.l.b16 %v38
  %v1109 = vunpack.c.h.b16 %v38
  %v1110 = vunpack.c.l.b16 %v39
  %v1111 = vunpack.c.h.b16 %v39
  %v1112 = vunpack.c.l.b16 %v40
  %v1113 = vunpack.c.h.b16 %v40
  %v1114 = vunpack.c.l.b16 %v41
  %v1115 = vunpack.c.h.b16 %v41
  %v1116 = vunpack.c.l.b16 %v42
  %v1117 = vunpack.c.h.b16 %v42
  %v1118 = vunpack.c.l.b16 %v43
  %v1119 = vunpack.c.h.b16 %v43
  %v1120 = vunpack.c.l.b16 %v44
  %v1121 = vunpack.c.h.b16 %v44
  %v1122 = vunpack.c.l.b16 %v45
  %v1123 = vunpack.c.h.b16 %v45
  %v1124 = vunpack.c.l.b16 %v46
  %v1125 = vunpack.c.h.b16 %v46
  %v1126 = vunpack.c.l.b16 %v47
  %v1127 = vunpack.c.h.b16 %v47
  %v1128 = vunpack.c.l.b16 %v48
  %v1129 = vunpack.c.h.b16 %v48
  %v1130 = vunpack.c.l.b16 %v49
  %v1131 = vunpack.c.h.b16 %v49
  %v1132 = vunpack.c.l.b16 %v50
  %v1133 = vunpack.c.h.b16 %v50
  %v1134 = vunpack.c.l.b16 %v51
  %v1135 = vunpack.c.h.b16 %v51
  %v1136 = vunpack.c.l.b16 %v52
  %v1137 = vunpack.c.h.b16 %v52
  %v1138 = vunpack.c.l.b16 %v53
  %v1139 = vunpack.c.h.b16 %v53
  %v1140 = vunpack.c.l.b16 %v54
  %v1141 = vunpack.c.h.b16 %v54
  %v1142 = vunpack.c.l.b16 %v55
  %v1143 = vunpack.c.h.b16 %v55
  %v1144 = vunpack.c.l.b16 %v56
  %v1145 = vunpack.c.h.b16 %v56
  %v1146 = vunpack.c.l.b16 %v57
  %v1147 = vunpack.c.h.b16 %v57
  %v1148 = vunpack.c.l.b16 %v58
  %v1149 = vunpack.c.h.b16 %v58
  %v1150 = vunpack.c.l.b16 %v59
  %v1151 = vunpack.c.h.b16 %v59
  %v1152 = vunpack.c.l.b16 %v60
  %v1153 = vunpack.c.h.b16 %v60
  %v1154 = vunpack.c.l.b16 %v61
  %v1155 = vunpack.c.h.b16 %v61
  %v1156 = vunpack.c.l.b16 %v62
  %v1157 = vunpack.c.h.b16 %v62
  %v1158 = vunpack.c.l.b16 %v63
  %v1159 = vunpack.c.h.b16 %v63
  %v1160 = vunpack.c.l.b16 %v64
  %v1161 = vunpack.c.h.b16 %v64
  %v1162 = vunpack.c.l.b16 %v65
  %v1163 = vunpack.c.h.b16 %v65
  %v1164 = vunpack.c.l.b16 %v66
  %v1165 = vunpack.c.h.b16 %v66
  %v1166 = vunpack.c.l.b16 %v67
  %v1167 = vunpack.c.h.b16 %v67
  %v1168 = vunpack.c.l.b16 %v68
  %v1169 = vunpack.c.h.b16 %v68
  %v1170 = vunpack.c.l.b16 %v69
  %v1171 = vunpack.c.h.b16 %v69
  %v1172 = vunpack.c.l.b16 %v70
  %v1173 = vunpack.c.h.b16 %v70
  %v1174 = vunpack.c.l.b16 %v71
  %v1175 = vunpack.c.h.b16 %v71
  %v1176 = vunpack.c.l.b16 %v72
  %v1177 = vunpack.c.h.b16 %v72
  %v1178 = vunpack.c.l.b16 %v73
  %v1179 = vunpack.c.h.b16 %v73
  %v1180 = vunpack.c.l.b16 %v74
  %v1181 = vunpack.c.h.b16 %v74
  %v1182 = vunpack.c.l.b16 %v75
  %v1183 = vunpack.c.h.b16 %v75
  %v1184 = vunpack.c.l.b16 %v76
  %v1185 = vunpack.c.h.b16 %v76
  %v1186 = vunpack.c.l.b16 %v77
  %v1187 = vunpack.c.h.b16 %v77
  %v1188 = vunpack.c.l.b16 %v78
  %v1189 = vunpack.c.h.b16 %v78
  %v1190 = vunpack.c.l.b16 %v79
  %v1191 = vunpack.c.h.b16 %v79
  %v1192 = vunpack.c.l.b16 %v80
  %v1193 = vunpack.c.h.b16 %v80
  %v1194 = vunpack.c.l.b16 %v81
  %v1195 = vunpack.c.h.b16 %v81
  %v1196 = vunpack.c.l.b16 %v82
  %v1197 = vunpack.c.h.b16 %v82
  %v1198 = vunpack.c.l.b16 %v83
  %v1199 = vunpack.c.h.b16 %v83
  %v1200 = vunpack.c.l.b16 %v84
  %v1201 = vunpack.c.h.b16 %v84
  %v1202 = vunpack.c.l.b16 %v85
  %v1203 = vunpack.c.h.b16 %v85
  %v1204 = vunpack.c.l.b16 %v86
  %v1205 = vunpack.c.h.b16 %v86
  %v1206 = vunpack.c.l.b16 %v87
  %v1207 = vunpack.c.h.b16 %v87
  %v1208 = vunpack.c.l.b16 %v88
  %v1209 = vunpack.c.h.b16 %v88
  %v1210 = vunpack.c.l.b16 %v89
  %v1211 = vunpack.c.h.b16 %v89
  %v1212 = vunpack.c.l.b16 %v90
  %v1213 = vunpack.c.h.b16 %v90
  %v1214 = vunpack.c.l.b16 %v91
  %v1215 = vunpack.c.h.b16 %v91
  %v1216 = vunpack.c.l.b16 %v92
  %v1217 = vunpack.c.h.b16 %v92
  %v1218 = vunpack.c.l.b16 %v93
  %v1219 = vunpack.c.h.b16 %v93
  %v1220 = vunpack.c.l.b16 %v94
  %v1221 = vunpack.c.h.b16 %v94
  %v1222 = vunpack.c.l.b16 %v95
  %v1223 = vunpack.c.h.b16 %v95
  %v1224 = vunpack.c.l.b16 %v96
  %v1225 = vunpack.c.h.b16 %v96
  %v1226 = vunpack.c.l.b16 %v97
  %v1227 = vunpack.c.h.b16 %v97
  %v1228 = vunpack.c.l.b16 %v98
  %v1229 = vunpack.c.h.b16 %v98
  %v1230 = vunpack.c.l.b16 %v99
  %v1231 = vunpack.c.h.b16 %v99
  %v1232 = vunpack.c.l.b16 %v100
  %v1233 = vunpack.c.h.b16 %v100
  %v1234 = vunpack.c.l.b16 %v101
  %v1235 = vunpack.c.h.b16 %v101
  %v1236 = vunpack.c.l.b16 %v102
  %v1237 = vunpack.c.h.b16 %v102
  %v1238 = vunpack.c.l.b16 %v103
  %v1239 = vunpack.c.h.b16 %v103
  %v1240 = vunpack.c.l.b16 %v104
  %v1241 = vunpack.c.h.b16 %v104
  %v1242 = vunpack.c.l.b16 %v105
  %v1243 = vunpack.c.h.b16 %v105
  %v1244 = vunpack.c.l.b16 %v106
  %v1245 = vunpack.c.h.b16 %v106
  %v1246 = vunpack.c.l.b16 %v107
  %v1247 = vunpack.c.h.b16 %v107
  %v1248 = vunpack.c.l.b16 %v108
  %v1249 = vunpack.c.h.b16 %v108
  %v1250 = vunpack.c.l.b16 %v109
  %v1251 = vunpack.c.h.b16 %v109
  %v1252 = vunpack.c.l.b16 %v110
  %v1253 = vunpack.c.h.b16 %v110
  %v1254 = vunpack.c.l.b16 %v111
  %v1255 = vunpack.c.h.b16 %v111
  %v1256 = vunpack.c.l.b16 %v112
  %v1257 = vunpack.c.h.b16 %v112
  %v1258 = vunpack.c.l.b16 %v113
  %v1259 = vunpack.c.h.b16 %v113
  %v1260 = vunpack.c.l.b16 %v114
  %v1261 = vunpack.c.h.b16 %v114
  %v1262 = vunpack.c.l.b16 %v115
  %v1263 = vunpack.c.h.b16 %v115
  %v1264 = vunpack.c.l.b16 %v116
  %v1265 = vunpack.c.h.b16 %v116
  %v1266 = vunpack.c.l.b16 %v117
  %v1267 = vunpack.c.h.b16 %v117
  %v1268 = vunpack.c.l.b16 %v118
  %v1269 = vunpack.c.h.b16 %v118
  %v1270 = vunpack.c.l.b16 %v119
  %v1271 = vunpack.c.h.b16 %v119
  %v1272 = vunpack.c.l.b16 %v120
  %v1273 = vunpack.c.h.b16 %v120
  %v1274 = vunpack.c.l.b16 %v121
  %v1275 = vunpack.c.h.b16 %v121
  %v1276 = vunpack.c.l.b16 %v122
  %v1277 = vunpack.c.h.b16 %v122
  %v1278 = vunpack.c.l.b16 %v123
  %v1279 = vunpack.c.h.b16 %v123
  %v1280 = vunpack.c.l.b16 %v124
  %v1281 = vunpack.c.h.b16 %v124
  %v1282 = vunpack.c.l.b16 %v125
  %v1283 = vunpack.c.h.b16 %v125
  %v1284 = vunpack.c.l.b16 %v126
  %v1285 = vunpack.c.h.b16 %v126
  %v1286 = vunpack.c.l.b16 %v127
  %v1287 = vunpack.c.h.b16 %v127
  %v1288 = vunpack.c.l.b16 %v128
  %v1289 = vunpack.c.h.b16 %v128
  %v1290 = vunpack.c.l.b16 %v129
  %v1291 = vunpack.c.h.b16 %v129
  %v1292 = vunpack.c.l.b16 %v130
  %v1293 = vunpack.c.h.b16 %v130
  %v1294 = vunpack.c.l.b16 %v131
  %v1295 = vunpack.c.h.b16 %v131
  %v1296 = vunpack.c.l.b16 %v132
  %v1297 = vunpack.c.h.b16 %v132
  %v1298 = vunpack.c.l.b16 %v133
  %v1299 = vunpack.c.h.b16 %v133
  %v1300 = vunpack.c.l.b16 %v134
  %v1301 = vunpack.c.h.b16 %v134
  %v1302 = vunpack.c.l.b16 %v135
  %v1303 = vunpack.c.h.b16 %v135
  %v1304 = vunpack.c.l.b16 %v136
  %v1305 = vunpack.c.h.b16 %v136
  %v1306 = vunpack.c.l.b16 %v137
  %v1307 = vunpack.c.h.b16 %v137
  %v1308 = vunpack.c.l.b16 %v138
  %v1309 = vunpack.c.h.b16 %v138
  %v1310 = vunpack.c.l.b16 %v139
  %v1311 = vunpack.c.h.b16 %v139
  %v1312 = vunpack.c.l.b16 %v140
  %v1313 = vunpack.c.h.b16 %v140
  %v1314 = vunpack.c.l.b16 %v141
  %v1315 = vunpack.c.h.b16 %v141
  %v1316 = vunpack.c.l.b16 %v142
  %v1317 = vunpack.c.h.b16 %v142
  %v1318 = vunpack.c.l.b16 %v143
  %v1319 = vunpack.c.h.b16 %v143
  %v1320 = vunpack.c.l.b16 %v144
  %v1321 = vunpack.c.h.b16 %v144
  %v1322 = vunpack.c.l.b16 %v145
  %v1323 = vunpack.c.h.b16 %v145
  %v1324 = vunpack.c.l.b16 %v146
  %v1325 = vunpack.c.h.b16 %v146
  %v1326 = vunpack.c.l.b16 %v147
  %v1327 = vunpack.c.h.b16 %v147
  %v1328 = vunpack.c.l.b16 %v148
  %v1329 = vunpack.c.h.b16 %v148
  %v1330 = vunpack.c.l.b16 %v149
  %v1331 = vunpack.c.h.b16 %v149
  %v1332 = vunpack.c.l.b16 %v150
  %v1333 = vunpack.c.h.b16 %v150
  %v1334 = vunpack.c.l.b16 %v151
  %v1335 = vunpack.c.h.b16 %v151
  %v1336 = vunpack.c.l.b16 %v152
  %v1337 = vunpack.c.h.b16 %v152
  %v1338 = vunpack.c.l.b16 %v153
  %v1339 = vunpack.c.h.b16 %v153
  %v1340 = vunpack.c.l.b16 %v154
  %v1341 = vunpack.c.h.b16 %v154
  %v1342 = vunpack.c.l.b16 %v155
  %v1343 = vunpack.c.h.b16 %v155
  %v1344 = vunpack.c.l.b16 %v156
  %v1345 = vunpack.c.h.b16 %v156
  %v1346 = vunpack.c.l.b16 %v157
  %v1347 = vunpack.c.h.b16 %v157
  %v1348 = vunpack.c.l.b16 %v158
  %v1349 = vunpack.c.h.b16 %v158
  %v1350 = vunpack.c.l.b16 %v159
  %v1351 = vunpack.c.h.b16 %v159
  %v1352 = vunpack.c.l.b16 %v160
  %v1353 = vunpack.c.h.b16 %v160
  %v1354 = vunpack.c.l.b16 %v161
  %v1355 = vunpack.c.h.b16 %v161
  %v1356 = vunpack.c.l.b16 %v162
  %v1357 = vunpack.c.h.b16 %v162
  %v1358 = vunpack.c.l.b16 %v163
  %v1359 = vunpack.c.h.b16 %v163
  %v1360 = vunpack.c.l.b16 %v164
  %v1361 = vunpack.c.h.b16 %v164
  %v1362 = vunpack.c.l.b16 %v165
  %v1363 = vunpack.c.h.b16 %v165
  %v1364 = vunpack.c.l.b16 %v166
  %v1365 = vunpack.c.h.b16 %v166
  %v1366 = vunpack.c.l.b16 %v167
  %v1367 = vunpack.c.h.b16 %v167
  %v1368 = vunpack.c.l.b16 %v168
  %v1369 = vunpack.c.h.b16 %v168
  %v1370 = vunpack.c.l.b16 %v169
  %v1371 = vunpack.c.h.b16 %v169
  %v1372 = vunpack.c.l.b16 %v170
  %v1373 = vunpack.c.h.b16 %v170
  %v1374 = vunpack.c.l.b16 %v171
  %v1375 = vunpack.c.h.b16 %v171
  %v1376 = vunpack.c.l.b16 %v172
  %v1377 = vunpack.c.h.b16 %v172
  %v1378 = vunpack.c.l.b16 %v173
  %v1379 = vunpack.c.h.b16 %v173
  %v1380 = vunpack.c.l.b16 %v174
  %v1381 = vunpack.c.h.b16 %v174
  %v1382 = vunpack.c.l.b16 %v175
  %v1383 = vunpack.c.h.b16 %v175
  %v1384 = vunpack.c.l.b16 %v176
  %v1385 = vunpack.c.h.b16 %v176
  %v1386 = vunpack.c.l.b16 %v177
  %v1387 = vunpack.c.h.b16 %v177
  %v1388 = vunpack.c.l.b16 %v178
  %v1389 = vunpack.c.h.b16 %v178
  %v1390 = vunpack.c.l.b16 %v179
  %v1391 = vunpack.c.h.b16 %v179
  %v1392 = vunpack.c.l.b16 %v180
  %v1393 = vunpack.c.h.b16 %v180
  %v1394 = vunpack.c.l.b16 %v181
  %v1395 = vunpack.c.h.b16 %v181
  %v1396 = vunpack.c.l.b16 %v182
  %v1397 = vunpack.c.h.b16 %v182
  %v1398 = vunpack.c.l.b16 %v183
  %v1399 = vunpack.c.h.b16 %v183
  %v1400 = vunpack.c.l.b16 %v184
  %v1401 = vunpack.c.h.b16 %v184
  %v1402 = vunpack.c.l.b16 %v185
  %v1403 = vunpack.c.h.b16 %v185
  %v1404 = vunpack.c.l.b16 %v186
  %v1405 = vunpack.c.h.b16 %v186
  %v1406 = vunpack.c.l.b16 %v187
  %v1407 = vunpack.c.h.b16 %v187
  %v1408 = vunpack.c.l.b16 %v188
  %v1409 = vunpack.c.h.b16 %v188
  %v1410 = vunpack.c.l.b16 %v189
  %v1411 = vunpack.c.h.b16 %v189
  %v1412 = vunpack.c.l.b16 %v190
  %v1413 = vunpack.c.h.b16 %v190
  %v1414 = vunpack.c.l.b16 %v191
  %v1415 = vunpack.c.h.b16 %v191
  %v1416 = vunpack.c.l.b16 %v192
  %v1417 = vunpack.c.h.b16 %v192
  %v1418 = vunpack.c.l.b16 %v193
  %v1419 = vunpack.c.h.b16 %v193
  %v1420 = vunpack.c.l.b16 %v194
  %v1421 = vunpack.c.h.b16 %v194
  %v1422 = vunpack.c.l.b16 %v195
  %v1423 = vunpack.c.h.b16 %v195
  %v1424 = vunpack.c.l.b16 %v196
  %v1425 = vunpack.c.h.b16 %v196
  %v1426 = vunpack.c.l.b16 %v197
  %v1427 = vunpack.c.h.b16 %v197
  %v1428 = vunpack.c.l.b16 %v198
  %v1429 = vunpack.c.h.b16 %v198
  %v1430 = vunpack.c.l.b16 %v199
  %v1431 = vunpack.c.h.b16 %v199
  %v1432 = vunpack.c.l.b16 %v200
  %v1433 = vunpack.c.h.b16 %v200
  %v1434 = vunpack.c.l.b16 %v201
  %v1435 = vunpack.c.h.b16 %v201
  %v1436 = vunpack.c.l.b16 %v202
  %v1437 = vunpack.c.h.b16 %v202
  %v1438 = vunpack.c.l.b16 %v203
  %v1439 = vunpack.c.h.b16 %v203
  %v1440 = vunpack.c.l.b16 %v204
  %v1441 = vunpack.c.h.b16 %v204
  %v1442 = vunpack.c.l.b16 %v205
  %v1443 = vunpack.c.h.b16 %v205
  %v1444 = vunpack.c.l.b16 %v206
  %v1445 = vunpack.c.h.b16 %v206
  %v1446 = vunpack.c.l.b16 %v207
  %v1447 = vunpack.c.h.b16 %v207
  %v1448 = vunpack.c.l.b16 %v208
  %v1449 = vunpack.c.h.b16 %v208
  %v1450 = vunpack.c.l.b16 %v209
  %v1451 = vunpack.c.h.b16 %v209
  %v1452 = vunpack.c.l.b16 %v210
  %v1453 = vunpack.c.h.b16 %v210
  %v1454 = vunpack.c.l.b16 %v211
  %v1455 = vunpack.c.h.b16 %v211
  %v1456 = vunpack.c.l.b16 %v212
  %v1457 = vunpack.c.h.b16 %v212
  %v1458 = vunpack.c.l.b16 %v213
  %v1459 = vunpack.c.h.b16 %v213
  %v1460 = vunpack.c.l.b16 %v214
  %v1461 = vunpack.c.h.b16 %v214
  %v1462 = vunpack.c.l.b16 %v215
  %v1463 = vunpack.c.h.b16 %v215
  %v1464 = vunpack.c.l.b16 %v216
  %v1465 = vunpack.c.h.b16 %v216
  %v1466 = vunpack.c.l.b16 %v217
  %v1467 = vunpack.c.h.b16 %v217
  %v1468 = vunpack.c.l.b16 %v218
  %v1469 = vunpack.c.h.b16 %v218
  %v1470 = vunpack.c.l.b16 %v219
  %v1471 = vunpack.c.h.b16 %v219
  %v1472 = vunpack.c.l.b16 %v220
  %v1473 = vunpack.c.h.b16 %v220
  %v1474 = vunpack.c.l.b16 %v221
  %v1475 = vunpack.c.h.b16 %v221
  %v1476 = vunpack.c.l.b16 %v222
  %v1477 = vunpack.c.h.b16 %v222
  %v1478 = vunpack.c.l.b16 %v223
  %v1479 = vunpack.c.h.b16 %v223
  %v1480 = vunpack.c.l.b16 %v224
  %v1481 = vunpack.c.h.b16 %v224
  %v1482 = vunpack.c.l.b16 %v225
  %v1483 = vunpack.c.h.b16 %v225
  %v1484 = vunpack.c.l.b16 %v226
  %v1485 = vunpack.c.h.b16 %v226
  %v1486 = vunpack.c.l.b16 %v227
  %v1487 = vunpack.c.h.b16 %v227
  %v1488 = vunpack.c.l.b16 %v228
  %v1489 = vunpack.c.h.b16 %v228
  %v1490 = vunpack.c.l.b16 %v229
  %v1491 = vunpack.c.h.b16 %v229
  %v1492 = vunpack.c.l.b16 %v230
  %v1493 = vunpack.c.h.b16 %v230
  %v1494 = vunpack.c.l.b16 %v231
  %v1495 = vunpack.c.h.b16 %v231
  %v1496 = vunpack.c.l.b16 %v232
  %v1497 = vunpack.c.h.b16 %v232
  %v1498 = vunpack.c.l.b16 %v233
  %v1499 = vunpack.c.h.b16 %v233
  %v1500 = vunpack.c.l.b16 %v234
  %v1501 = vunpack.c.h.b16 %v234
  %v1502 = vunpack.c.l.b16 %v235
  %v1503 = vunpack.c.h.b16 %v235
  %v1504 = vunpack.c.l.b16 %v236
  %v1505 = vunpack.c.h.b16 %v236
  %v1506 = vunpack.c.l.b16 %v237
  %v1507 = vunpack.c.h.b16 %v237
  %v1508 = vunpack.c.l.b16 %v238
  %v1509 = vunpack.c.h.b16 %v238
  %v1510 = vunpack.c.l.b16 %v239
  %v1511 = vunpack.c.h.b16 %v239
  %v1512 = vunpack.c.l.b16 %v240
  %v1513 = vunpack.c.h.b16 %v240
  %v1514 = vunpack.c.l.b16 %v241
  %v1515 = vunpack.c.h.b16 %v241
  %v1516 = vunpack.c.l.b16 %v242
  %v1517 = vunpack.c.h.b16 %v242
  %v1518 = vunpack.c.l.b16 %v243
  %v1519 = vunpack.c.h.b16 %v243
  %v1520 = vunpack.c.l.b16 %v244
  %v1521 = vunpack.c.h.b16 %v244
  %v1522 = vunpack.c.l.b16 %v245
  %v1523 = vunpack.c.h.b16 %v245
  %v1524 = vunpack.c.l.b16 %v246
  %v1525 = vunpack.c.h.b16 %v246
  %v1526 = vunpack.c.l.b16 %v247
  %v1527 = vunpack.c.h.b16 %v247
  %v1528 = vunpack.c.l.b16 %v248
  %v1529 = vunpack.c.h.b16 %v248
  %v1530 = vunpack.c.l.b16 %v249
  %v1531 = vunpack.c.h.b16 %v249
  %v1532 = vunpack.c.l.b16 %v250
  %v1533 = vunpack.c.h.b16 %v250
  %v1534 = vunpack.c.l.b16 %v251
  %v1535 = vunpack.c.h.b16 %v251
  %v1536 = vunpack.c.l.b16 %v252
  %v1537 = vunpack.c.h.b16 %v252
  %v1538 = vunpack.c.l.b16 %v253
  %v1539 = vunpack.c.h.b16 %v253
  %v1540 = vunpack.c.l.b16 %v254
  %v1541 = vunpack.c.h.b16 %v254
  %v1542 = vunpack.c.l.b16 %v255
  %v1543 = vunpack.c.h.b16 %v255
  %v1544 = vunpack.c.l.b16 %v256
  %v1545 = vunpack.c.h.b16 %v256
  %v1546 = vunpack.c.l.b16 %v257
  %v1547 = vunpack.c.h.b16 %v257
  %v1548 = vunpack.c.l.b16 %v258
  %v1549 = vunpack.c.h.b16 %v258
  %v1550 = vunpack.c.l.b16 %v259
  %v1551 = vunpack.c.h.b16 %v259
  %v1552 = vunpack.c.l.b16 %v260
  %v1553 = vunpack.c.h.b16 %v260
  %v1554 = vunpack.c.l.b16 %v261
  %v1555 = vunpack.c.h.b16 %v261
  %v1556 = vunpack.c.l.b16 %v262
  %v1557 = vunpack.c.h.b16 %v262
  %v1558 = vunpack.c.l.b16 %v263
  %v1559 = vunpack.c.h.b16 %v263
  %v1560 = vunpack.c.l.b16 %v264
  %v1561 = vunpack.c.h.b16 %v264
  %v1562 = vunpack.c.l.b16 %v265
  %v1563 = vunpack.c.h.b16 %v265
  %v1564 = vunpack.c.l.b16 %v266
  %v1565 = vunpack.c.h.b16 %v266
  %v1566 = vunpack.c.l.b16 %v267
  %v1567 = vunpack.c.h.b16 %v267
  %v1568 = vunpack.c.l.b16 %v268
  %v1569 = vunpack.c.h.b16 %v268
  %v1570 = vunpack.c.l.b16 %v269
  %v1571 = vunpack.c.h.b16 %v269
  %v1572 = vunpack.c.l.b16 %v270
  %v1573 = vunpack.c.h.b16 %v270
  %v1574 = vunpack.c.l.b16 %v271
  %v1575 = vunpack.c.h.b16 %v271
  %v1576 = vunpack.c.l.b16 %v272
  %v1577 = vunpack.c.h.b16 %v272
  %v1578 = vunpack.c.l.b16 %v273
  %v1579 = vunpack.c.h.b16 %v273
  %v1580 = vunpack.c.l.b16 %v274
  %v1581 = vunpack.c.h.b16 %v274
  %v1582 = vunpack.c.l.b16 %v275
  %v1583 = vunpack.c.h.b16 %v275
  %v1584 = vunpack.c.l.b16 %v276
  %v1585 = vunpack.c.h.b16 %v276
  %v1586 = vunpack.c.l.b16 %v277
  %v1587 = vunpack.c.h.b16 %v277
  %v1588 = vunpack.c.l.b16 %v278
  %v1589 = vunpack.c.h.b16 %v278
  %v1590 = vunpack.c.l.b16 %v279
  %v1591 = vunpack.c.h.b16 %v279
  %v1592 = vunpack.c.l.b16 %v280
  %v1593 = vunpack.c.h.b16 %v280
  %v1594 = vunpack.c.l.b16 %v281
  %v1595 = vunpack.c.h.b16 %v281
  %v1596 = vunpack.c.l.b16 %v282
  %v1597 = vunpack.c.h.b16 %v282
  %v1598 = vunpack.c.l.b16 %v283
  %v1599 = vunpack.c.h.b16 %v283
  %v1600 = vunpack.c.l.b16 %v284
  %v1601 = vunpack.c.h.b16 %v284
  %v1602 = vunpack.c.l.b16 %v285
  %v1603 = vunpack.c.h.b16 %v285
  %v1604 = vunpack.c.l.b16 %v286
  %v1605 = vunpack.c.h.b16 %v286
  %v1606 = vunpack.c.l.b16 %v287
  %v1607 = vunpack.c.h.b16 %v287
  %v1608 = vunpack.c.l.b16 %v288
  %v1609 = vunpack.c.h.b16 %v288
  %v1610 = vunpack.c.l.b16 %v289
  %v1611 = vunpack.c.h.b16 %v289
  %v1612 = vunpack.c.l.b16 %v290
  %v1613 = vunpack.c.h.b16 %v290
  %v1614 = vunpack.c.l.b16 %v291
  %v1615 = vunpack.c.h.b16 %v291
  %v1616 = vunpack.c.l.b16 %v292
  %v1617 = vunpack.c.h.b16 %v292
  %v1618 = vunpack.c.l.b16 %v293
  %v1619 = vunpack.c.h.b16 %v293
  %v1620 = vunpack.c.l.b16 %v294
  %v1621 = vunpack.c.h.b16 %v294
  %v1622 = vunpack.c.l.b16 %v295
  %v1623 = vunpack.c.h.b16 %v295
  %v1624 = vunpack.c.l.b16 %v296
  %v1625 = vunpack.c.h.b16 %v296
  %v1626 = vunpack.c.l.b16 %v297
  %v1627 = vunpack.c.h.b16 %v297
  %v1628 = vunpack.c.l.b16 %v298
  %v1629 = vunpack.c.h.b16 %v298
  %v1630 = vunpack.c.l.b16 %v299
  %v1631 = vunpack.c.h.b16 %v299
  %v1632 = vunpack.c.l.b16 %v300
  %v1633 = vunpack.c.h.b16 %v300
  %v1634 = vunpack.c.l.b16 %v301
  %v1635 = vunpack.c.h.b16 %v301
  %v1636 = vunpack.c.l.b16 %v302
  %v1637 = vunpack.c.h.b16 %v302
  %v1638 = vunpack.c.l.b16 %v303
  %v1639 = vunpack.c.h.b16 %v303
  %v1640 = vunpack.c.l.b16 %v304
  %v1641 = vunpack.c.h.b16 %v304
  %v1642 = vunpack.c.l.b16 %v305
  %v1643 = vunpack.c.h.b16 %v305
  %v1644 = vunpack.c.l.b16 %v306
  %v1645 = vunpack.c.h.b16 %v306
  %v1646 = vunpack.c.l.b16 %v307
  %v1647 = vunpack.c.h.b16 %v307
  %v1648 = vunpack.c.l.b16 %v308
  %v1649 = vunpack.c.h.b16 %v308
  %v1650 = vunpack.c.l.b16 %v309
  %v1651 = vunpack.c.h.b16 %v309
  %v1652 = vunpack.c.l.b16 %v310
  %v1653 = vunpack.c.h.b16 %v310
  %v1654 = vunpack.c.l.b16 %v311
  %v1655 = vunpack.c.h.b16 %v311
  %v1656 = vunpack.c.l.b16 %v312
  %v1657 = vunpack.c.h.b16 %v312
  %v1658 = vunpack.c.l.b16 %v313
  %v1659 = vunpack.c.h.b16 %v313
  %v1660 = vunpack.c.l.b16 %v314
  %v1661 = vunpack.c.h.b16 %v314
  %v1662 = vunpack.c.l.b16 %v315
  %v1663 = vunpack.c.h.b16 %v315
  %v1664 = vunpack.c.l.b16 %v316
  %v1665 = vunpack.c.h.b16 %v316
  %v1666 = vunpack.c.l.b16 %v317
  %v1667 = vunpack.c.h.b16 %v317
  %v1668 = vunpack.c.l.b16 %v318
  %v1669 = vunpack.c.h.b16 %v318
  %v1670 = vunpack.c.l.b16 %v319
  %v1671 = vunpack.c.h.b16 %v319
  %v1672 = vunpack.c.l.b16 %v320
  %v1673 = vunpack.c.h.b16 %v320
  %v1674 = vunpack.c.l.b16 %v321
  %v1675 = vunpack.c.h.b16 %v321
  %v1676 = vunpack.c.l.b16 %v322
  %v1677 = vunpack.c.h.b16 %v322
  %v1678 = vunpack.c.l.b16 %v323
  %v1679 = vunpack.c.h.b16 %v323
  %v1680 = vunpack.c.l.b16 %v324
  %v1681 = vunpack.c.h.b16 %v324
  %v1682 = vunpack.c.l.b16 %v325
  %v1683 = vunpack.c.h.b16 %v325
  %v1684 = vunpack.c.l.b16 %v326
  %v1685 = vunpack.c.h.b16 %v326
  %v1686 = vunpack.c.l.b16 %v327
  %v1687 = vunpack.c.h.b16 %v327
  %v1688 = vunpack.c.l.b16 %v328
  %v1689 = vunpack.c.h.b16 %v328
  %v1690 = vunpack.c.l.b16 %v329
  %v1691 = vunpack.c.h.b16 %v329
  %v1692 = vunpack.c.l.b16 %v330
  %v1693 = vunpack.c.h.b16 %v330
  %v1694 = vunpack.c.l.b16 %v331
  %v1695 = vunpack.c.h.b16 %v331
  %v1696 = vunpack.c.l.b16 %v332
  %v1697 = vunpack.c.h.b16 %v332
  %v1698 = vunpack.c.l.b16 %v333
  %v1699 = vunpack.c.h.b16 %v333
  %v1700 = vunpack.c.l.b16 %v334
  %v1701 = vunpack.c.h.b16 %v334
  %v1702 = vunpack.c.l.b16 %v335
  %v1703 = vunpack.c.h.b16 %v335
  %v1704 = vunpack.c.l.b16 %v336
  %v1705 = vunpack.c.h.b16 %v336
  %v1706 = vunpack.c.l.b16 %v337
  %v1707 = vunpack.c.h.b16 %v337
  %v1708 = vunpack.c.l.b16 %v338
  %v1709 = vunpack.c.h.b16 %v338
  %v1710 = vunpack.c.l.b16 %v339
  %v1711 = vunpack.c.h.b16 %v339
  %v1712 = vunpack.c.l.b16 %v340
  %v1713 = vunpack.c.h.b16 %v340
  %v1714 = vunpack.c.l.b16 %v341
  %v1715 = vunpack.c.h.b16 %v341
  %v1716 = vunpack.c.l.b16 %v342
  %v1717 = vunpack.c.h.b16 %v342
  %v1718 = vunpack.c.l.b16 %v343
  %v1719 = vunpack.c.h.b16 %v343
  %v1720 = vunpack.c.l.b16 %v344
  %v1721 = vunpack.c.h.b16 %v344
  %v1722 = vunpack.c.l.b16 %v345
  %v1723 = vunpack.c.h.b16 %v345
  %v1724 = vunpack.c.l.b16 %v346
  %v1725 = vunpack.c.h.b16 %v346
  %v1726 = vunpack.c.l.b16 %v347
  %v1727 = vunpack.c.h.b16 %v347
  %v1728 = vunpack.c.l.b16 %v348
  %v1729 = vunpack.c.h.b16 %v348
  %v1730 = vunpack.c.l.b16 %v349
  %v1731 = vunpack.c.h.b16 %v349
  %v1732 = vunpack.c.l.b16 %v350
  %v1733 = vunpack.c.h.b16 %v350
  %v1734 = vunpack.c.l.b16 %v351
  %v1735 = vunpack.c.h.b16 %v351
  %v1736 = vunpack.c.l.b16 %v352
  %v1737 = vunpack.c.h.b16 %v352
  %v1738 = vunpack.c.l.b16 %v353
  %v1739 = vunpack.c.h.b16 %v353
  %v1740 = vunpack.c.l.b16 %v354
  %v1741 = vunpack.c.h.b16 %v354
  %v1742 = vunpack.c.l.b16 %v355
  %v1743 = vunpack.c.h.b16 %v355
  %v1744 = vunpack.c.l.b16 %v356
  %v1745 = vunpack.c.h.b16 %v356
  %v1746 = vunpack.c.l.b16 %v357
  %v1747 = vunpack.c.h.b16 %v357
  %v1748 = vunpack.c.l.b16 %v358
  %v1749 = vunpack.c.h.b16 %v358
  %v1750 = vunpack.c.l.b16 %v359
  %v1751 = vunpack.c.h.b16 %v359
  %v1752 = vunpack.c.l.b16 %v360
  %v1753 = vunpack.c.h.b16 %v360
  %v1754 = vunpack.c.l.b16 %v361
  %v1755 = vunpack.c.h.b16 %v361
  %v1756 = vunpack.c.l.b16 %v362
  %v1757 = vunpack.c.h.b16 %v362
  %v1758 = vunpack.c.l.b16 %v363
  %v1759 = vunpack.c.h.b16 %v363
  %v1760 = vunpack.c.l.b16 %v364
  %v1761 = vunpack.c.h.b16 %v364
  %v1762 = vunpack.c.l.b16 %v365
  %v1763 = vunpack.c.h.b16 %v365
  %v1764 = vunpack.c.l.b16 %v366
  %v1765 = vunpack.c.h.b16 %v366
  %v1766 = vunpack.c.l.b16 %v367
  %v1767 = vunpack.c.h.b16 %v367
  %v1768 = vunpack.c.l.b16 %v368
  %v1769 = vunpack.c.h.b16 %v368
  %v1770 = vunpack.c.l.b16 %v369
  %v1771 = vunpack.c.h.b16 %v369
  %v1772 = vunpack.c.l.b16 %v370
  %v1773 = vunpack.c.h.b16 %v370
  %v1774 = vunpack.c.l.b16 %v371
  %v1775 = vunpack.c.h.b16 %v371
  %v1776 = vunpack.c.l.b16 %v372
  %v1777 = vunpack.c.h.b16 %v372
  %v1778 = vunpack.c.l.b16 %v373
  %v1779 = vunpack.c.h.b16 %v373
  %v1780 = vunpack.c.l.b16 %v374
  %v1781 = vunpack.c.h.b16 %v374
  %v1782 = vunpack.c.l.b16 %v375
  %v1783 = vunpack.c.h.b16 %v375
  %v1784 = vunpack.c.l.b16 %v376
  %v1785 = vunpack.c.h.b16 %v376
  %v1786 = vunpack.c.l.b16 %v377
  %v1787 = vunpack.c.h.b16 %v377
  %v1788 = vunpack.c.l.b16 %v378
  %v1789 = vunpack.c.h.b16 %v378
  %v1790 = vunpack.c.l.b16 %v379
  %v1791 = vunpack.c.h.b16 %v379
  %v1792 = vunpack.c.l.b16 %v380
  %v1793 = vunpack.c.h.b16 %v380
  %v1794 = vunpack.c.l.b16 %v381
  %v1795 = vunpack.c.h.b16 %v381
  %v1796 = vunpack.c.l.b16 %v382
  %v1797 = vunpack.c.h.b16 %v382
  %v1798 = vunpack.c.l.b16 %v383
  %v1799 = vunpack.c.h.b16 %v383
  %v1800 = vunpack.c.l.b16 %v384
  %v1801 = vunpack.c.h.b16 %v384
  %v1802 = vunpack.c.l.b16 %v385
  %v1803 = vunpack.c.h.b16 %v385
  %v1804 = vunpack.c.l.b16 %v386
  %v1805 = vunpack.c.h.b16 %v386
  %v1806 = vunpack.c.l.b16 %v387
  %v1807 = vunpack.c.h.b16 %v387
  %v1808 = vunpack.c.l.b16 %v388
  %v1809 = vunpack.c.h.b16 %v388
  %v1810 = vunpack.c.l.b16 %v389
  %v1811 = vunpack.c.h.b16 %v389
  %v1812 = vunpack.c.l.b16 %v390
  %v1813 = vunpack.c.h.b16 %v390
  %v1814 = vunpack.c.l.b16 %v391
  %v1815 = vunpack.c.h.b16 %v391
  %v1816 = vunpack.c.l.b16 %v392
  %v1817 = vunpack.c.h.b16 %v392
  %v1818 = vunpack.c.l.b16 %v393
  %v1819 = vunpack.c.h.b16 %v393
  %v1820 = vunpack.c.l.b16 %v394
  %v1821 = vunpack.c.h.b16 %v394
  %v1822 = vunpack.c.l.b16 %v395
  %v1823 = vunpack.c.h.b16 %v395
  %v1824 = vunpack.c.l.b16 %v396
  %v1825 = vunpack.c.h.b16 %v396
  %v1826 = vunpack.c.l.b16 %v397
  %v1827 = vunpack.c.h.b16 %v397
  %v1828 = vunpack.c.l.b16 %v398
  %v1829 = vunpack.c.h.b16 %v398
  %v1830 = vunpack.c.l.b16 %v399
  %v1831 = vunpack.c.h.b16 %v399
  %v1832 = vunpack.c.l.b16 %v400
  %v1833 = vunpack.c.h.b16 %v400
  %v1834 = vunpack.c.l.b16 %v401
  %v1835 = vunpack.c.h.b16 %v401
  %v1836 = vunpack.c.l.b16 %v402
  %v1837 = vunpack.c.h.b16 %v402
  %v1838 = vunpack.c.l.b16 %v403
  %v1839 = vunpack.c.h.b16 %v403
  %v1840 = vunpack.c.l.b16 %v404
  %v1841 = vunpack.c.h.b16 %v404
  %v1842 = vunpack.c.l.b16 %v405
  %v1843 = vunpack.c.h.b16 %v405
  %v1844 = vunpack.c.l.b16 %v406
  %v1845 = vunpack.c.h.b16 %v406
  %v1846 = vunpack.c.l.b16 %v407
  %v1847 = vunpack.c.h.b16 %v407
  %v1848 = vunpack.c.l.b16 %v408
  %v1849 = vunpack.c.h.b16 %v408
  %v1850 = vunpack.c.l.b16 %v409
  %v1851 = vunpack.c.h.b16 %v409
  %v1852 = vunpack.c.l.b16 %v410
  %v1853 = vunpack.c.h.b16 %v410
  %v1854 = vunpack.c.l.b16 %v411
  %v1855 = vunpack.c.h.b16 %v411
  %v1856 = vunpack.c.l.b16 %v412
  %v1857 = vunpack.c.h.b16 %v412
  %v1858 = vunpack.c.l.b16 %v413
  %v1859 = vunpack.c.h.b16 %v413
  %v1860 = vunpack.c.l.b16 %v414
  %v1861 = vunpack.c.h.b16 %v414
  %v1862 = vunpack.c.l.b16 %v415
  %v1863 = vunpack.c.h.b16 %v415
  %v1864 = vunpack.c.l.b16 %v416
  %v1865 = vunpack.c.h.b16 %v416
  %v1866 = vunpack.c.l.b16 %v417
  %v1867 = vunpack.c.h.b16 %v417
  %v1868 = vunpack.c.l.b16 %v418
  %v1869 = vunpack.c.h.b16 %v418
  %v1870 = vunpack.c.l.b16 %v419
  %v1871 = vunpack.c.h.b16 %v419
  %v1872 = vunpack.c.l.b16 %v420
  %v1873 = vunpack.c.h.b16 %v420
  %v1874 = vunpack.c.l.b16 %v421
  %v1875 = vunpack.c.h.b16 %v421
  %v1876 = vunpack.c.l.b16 %v422
  %v1877 = vunpack.c.h.b16 %v422
  %v1878 = vunpack.c.l.b16 %v423
  %v1879 = vunpack.c.h.b16 %v423
  %v1880 = vunpack.c.l.b16 %v424
  %v1881 = vunpack.c.h.b16 %v424
  %v1882 = vunpack.c.l.b16 %v425
  %v1883 = vunpack.c.h.b16 %v425
  %v1884 = vunpack.c.l.b16 %v426
  %v1885 = vunpack.c.h.b16 %v426
  %v1886 = vunpack.c.l.b16 %v427
  %v1887 = vunpack.c.h.b16 %v427
  %v1888 = vunpack.c.l.b16 %v428
  %v1889 = vunpack.c.h.b16 %v428
  %v1890 = vunpack.c.l.b16 %v429
  %v1891 = vunpack.c.h.b16 %v429
  %v1892 = vunpack.c.l.b16 %v430
  %v1893 = vunpack.c.h.b16 %v430
  %v1894 = vunpack.c.l.b16 %v431
  %v1895 = vunpack.c.h.b16 %v431
  %v1896 = vunpack.c.l.b16 %v432
  %v1897 = vunpack.c.h.b16 %v432
  %v1898 = vunpack.c.l.b16 %v433
  %v1899 = vunpack.c.h.b16 %v433
  %v1900 = vunpack.c.l.b16 %v434
  %v1901 = vunpack.c.h.b16 %v434
  %v1902 = vunpack.c.l.b16 %v435
  %v1903 = vunpack.c.h.b16 %v435
  %v1904 = vunpack.c.l.b16 %v436
  %v1905 = vunpack.c.h.b16 %v436
  %v1906 = vunpack.c.l.b16 %v437
  %v1907 = vunpack.c.h.b16 %v437
  %v1908 = vunpack.c.l.b16 %v438
  %v1909 = vunpack.c.h.b16 %v438
  %v1910 = vunpack.c.l.b16 %v439
  %v1911 = vunpack.c.h.b16 %v439
  %v1912 = vunpack.c.l.b16 %v440
  %v1913 = vunpack.c.h.b16 %v440
  %v1914 = vunpack.c.l.b16 %v441
  %v1915 = vunpack.c.h.b16 %v441
  %v1916 = vunpack.c.l.b16 %v442
  %v1917 = vunpack.c.h.b16 %v442
  %v1918 = vunpack.c.l.b16 %v443
  %v1919 = vunpack.c.h.b16 %v443
  %v1920 = vunpack.c.l.b16 %v444
  %v1921 = vunpack.c.h.b16 %v444
  %v1922 = vunpack.c.l.b16 %v445
  %v1923 = vunpack.c.h.b16 %v445
  %v1924 = vunpack.c.l.b16 %v446
  %v1925 = vunpack.c.h.b16 %v446
  %v1926 = vunpack.c.l.b16 %v447
  %v1927 = vunpack.c.h.b16 %v447
  %v1928 = vunpack.c.l.b16 %v448
  %v1929 = vunpack.c.h.b16 %v448
  %v1930 = vunpack.c.l.b16 %v449
  %v1931 = vunpack.c.h.b16 %v449
  %v1932 = vunpack.c.l.b16 %v450
  %v1933 = vunpack.c.h.b16 %v450
  %v1934 = vunpack.c.l.b16 %v451
  %v1935 = vunpack.c.h.b16 %v451
  %v1936 = vunpack.c.l.b16 %v452
  %v1937 = vunpack.c.h.b16 %v452
  %v1938 = vunpack.c.l.b16 %v453
  %v1939 = vunpack.c.h.b16 %v453
  %v1940 = vunpack.c.l.b16 %v454
  %v1941 = vunpack.c.h.b16 %v454
  %v1942 = vunpack.c.l.b16 %v455
  %v1943 = vunpack.c.h.b16 %v455
  %v1944 = vunpack.c.l.b16 %v456
  %v1945 = vunpack.c.h.b16 %v456
  %v1946 = vunpack.c.l.b16 %v457
  %v1947 = vunpack.c.h.b16 %v457
  %v1948 = vunpack.c.l.b16 %v458
  %v1949 = vunpack.c.h.b16 %v458
  %v1950 = vunpack.c.l.b16 %v459
  %v1951 = vunpack.c.h.b16 %v459
  %v1952 = vunpack.c.l.b16 %v460
  %v1953 = vunpack.c.h.b16 %v460
  %v1954 = vunpack.c.l.b16 %v461
  %v1955 = vunpack.c.h.b16 %v461
  %v1956 = vunpack.c.l.b16 %v462
  %v1957 = vunpack.c.h.b16 %v462
  %v1958 = vunpack.c.l.b16 %v463
  %v1959 = vunpack.c.h.b16 %v463
  %v1960 = vunpack.c.l.b16 %v464
  %v1961 = vunpack.c.h.b16 %v464
  %v1962 = vunpack.c.l.b16 %v465
  %v1963 = vunpack.c.h.b16 %v465
  %v1964 = vunpack.c.l.b16 %v466
  %v1965 = vunpack.c.h.b16 %v466
  %v1966 = vunpack.c.l.b16 %v467
  %v1967 = vunpack.c.h.b16 %v467
  %v1968 = vunpack.c.l.b16 %v468
  %v1969 = vunpack.c.h.b16 %v468
  %v1970 = vunpack.c.l.b16 %v469
  %v1971 = vunpack.c.h.b16 %v469
  %v1972 = vunpack.c.l.b16 %v470
  %v1973 = vunpack.c.h.b16 %v470
  %v1974 = vunpack.c.l.b16 %v471
  %v1975 = vunpack.c.h.b16 %v471
  %v1976 = vunpack.c.l.b16 %v472
  %v1977 = vunpack.c.h.b16 %v472
  %v1978 = vunpack.c.l.b16 %v473
  %v1979 = vunpack.c.h.b16 %v473
  %v1980 = vunpack.c.l.b16 %v474
  %v1981 = vunpack.c.h.b16 %v474
  %v1982 = vunpack.c.l.b16 %v475
  %v1983 = vunpack.c.h.b16 %v475
  %v1984 = vunpack.c.l.b16 %v476
  %v1985 = vunpack.c.h.b16 %v476
  %v1986 = vunpack.c.l.b16 %v477
  %v1987 = vunpack.c.h.b16 %v477
  %v1988 = vunpack.c.l.b16 %v478
  %v1989 = vunpack.c.h.b16 %v478
  %v1990 = vunpack.c.l.b16 %v479
  %v1991 = vunpack.c.h.b16 %v479
  %v1992 = vunpack.c.l.b16 %v480
  %v1993 = vunpack.c.h.b16 %v480
  %v1994 = vunpack.c.l.b16 %v481
  %v1995 = vunpack.c.h.b16 %v481
  %v1996 = vunpack.c.l.b16 %v482
  %v1997 = vunpack.c.h.b16 %v482
  %v1998 = vunpack.c.l.b16 %v483
  %v1999 = vunpack.c.h.b16 %v483
  %v2000 = vunpack.c.l.b16 %v484
  %v2001 = vunpack.c.h.b16 %v484
  %v2002 = vunpack.c.l.b16 %v485
  %v2003 = vunpack.c.h.b16 %v485
  %v2004 = vunpack.c.l.b16 %v486
  %v2005 = vunpack.c.h.b16 %v486
  %v2006 = vunpack.c.l.b16 %v487
  %v2007 = vunpack.c.h.b16 %v487
  %v2008 = vunpack.c.l.b16 %v488
  %v2009 = vunpack.c.h.b16 %v488
  %v2010 = vunpack.c.l.b16 %v489
  %v2011 = vunpack.c.h.b16 %v489
  %v2012 = vunpack.c.l.b16 %v490
  %v2013 = vunpack.c.h.b16 %v490
  %v2014 = vunpack.c.l.b16 %v491
  %v2015 = vunpack.c.h.b16 %v491
  %v2016 = vunpack.c.l.b16 %v492
  %v2017 = vunpack.c.h.b16 %v492
  %v2018 = vunpack.c.l.b16 %v493
  %v2019 = vunpack.c.h.b16 %v493
  %v2020 = vunpack.c.l.b16 %v494
  %v2021 = vunpack.c.h.b16 %v494
  %v2022 = vunpack.c.l.b16 %v495
  %v2023 = vunpack.c.h.b16 %v495
  %v2024 = vunpack.c.l.b16 %v496
  %v2025 = vunpack.c.h.b16 %v496
  %v2026 = vunpack.c.l.b16 %v497
  %v2027 = vunpack.c.h.b16 %v497
  %v2028 = vunpack.c.l.b16 %v498
  %v2029 = vunpack.c.h.b16 %v498
  %v2030 = vunpack.c.l.b16 %v499
  %v2031 = vunpack.c.h.b16 %v499
  %v2032 = vunpack.c.l.b16 %v500
  %v2033 = vunpack.c.h.b16 %v500
  %v2034 = vunpack.c.l.b16 %v501
  %v2035 = vunpack.c.h.b16 %v501
  %v2036 = vunpack.c.l.b16 %v502
  %v2037 = vunpack.c.h.b16 %v502
  %v2038 = vunpack.c.l.b16 %v503
  %v2039 = vunpack.c.h.b16 %v503
  %v2040 = vunpack.c.l.b16 %v504
  %v2041 = vunpack.c.h.b16 %v504
  %v2042 = vunpack.c.l.b16 %v505
  %v2043 = vunpack.c.h.b16 %v505
  %v2044 = vunpack.c.l.b16 %v506
  %v2045 = vunpack.c.h.b16 %v506
  %v2046 = vunpack.c.l.b16 %v507
  %v2047 = vunpack.c.h.b16 %v507
  %v2048 = vunpack.c.l.b16 %v508
  %v2049 = vunpack.c.h.b16 %v508
  %v2050 = vunpack.c.l.b16 %v509
  %v2051 = vunpack.c.h.b16 %v509
  %v2052 = vunpack.c.l.b16 %v510
  %v2053 = vunpack.c.h.b16 %v510
  %v2054 = vunpack.c.l.b16 %v511
  %v2055 = vunpack.c.h.b16 %v511
  %v2056 = vunpack.c.l.b16 %v512
  %v2057 = vunpack.c.h.b16 %v512
  %v2058 = vunpack.c.l.b16 %v513
  %v2059 = vunpack.c.h.b16 %v513
  %v2060 = vunpack.c.l.b16 %v514
  %v2061 = vunpack.c.h.b16 %v514
  %v2062 = vunpack.c.l.b16 %v515
  %v2063 = vunpack.c.h.b16 %v515
  %v2064 = vunpack.c.l.b16 %v516
  %v2065 = vunpack.c.h.b16 %v516
  %v2066 = vunpack.c.l.b16 %v517
  %v2067 = vunpack.c.h.b16 %v517
  %v2068 = vunpack.c.l.b16 %v518
  %v2069 = vunpack.c.h.b16 %v518
  %v2070 = vunpack.c.l.b16 %v519
  %v2071 = vunpack.c.h.b16 %v519
  %v2072 = vunpack.c.l.b16 %v520
  %v2073 = vunpack.c.h.b16 %v520
  %v2074 = vunpack.c.l.b16 %v521
  %v2075 = vunpack.c.h.b16 %v521
  %v2076 = vunpack.c.l.b16 %v522
  %v2077 = vunpack.c.h.b16 %v522
  %v2078 = vunpack.c.l.b16 %v523
  %v2079 = vunpack.c.h.b16 %v523
  %v2080 = vunpack.c.l.b16 %v524
  %v2081 = vunpack.c.h.b16 %v524
  %v2082 = vunpack.c.l.b16 %v525
  %v2083 = vunpack.c.h.b16 %v525
  %v2084 = vunpack.c.l.b16 %v526
  %v2085 = vunpack.c.h.b16 %v526
  %v2086 = vunpack.c.l.b16 %v527
  %v2087 = vunpack.c.h.b16 %v527
  %v2088 = vunpack.c.l.b16 %v528
  %v2089 = vunpack.c.h.b16 %v528
  %v2090 = vunpack.c.l.b16 %v529
  %v2091 = vunpack.c.h.b16 %v529
  %v2092 = vunpack.c.l.b16 %v530
  %v2093 = vunpack.c.h.b16 %v530
  %v2094 = vunpack.c.l.b16 %v531
  %v2095 = vunpack.c.h.b16 %v531
  %v2096 = vunpack.c.l.b16 %v532
  %v2097 = vunpack.c.h.b16 %v532
  %v2098 = vunpack.c.l.b16 %v533
  %v2099 = vunpack.c.h.b16 %v533
  %v2100 = vunpack.c.l.b16 %v534
  %v2101 = vunpack.c.h.b16 %v534
  %v2102 = vunpack.c.l.b16 %v535
  %v2103 = vunpack.c.h.b16 %v535
  %v2104 = vunpack.c.l.b16 %v536
  %v2105 = vunpack.c.h.b16 %v536
  %v2106 = vunpack.c.l.b16 %v537
  %v2107 = vunpack.c.h.b16 %v537
  %v2108 = vunpack.c.l.b16 %v538
  %v2109 = vunpack.c.h.b16 %v538
  %v2110 = vunpack.c.l.b16 %v539
  %v2111 = vunpack.c.h.b16 %v539
  %v2112 = vunpack.c.l.b16 %v540
  %v2113 = vunpack.c.h.b16 %v540
  %v2114 = vunpack.c.l.b16 %v541
  %v2115 = vunpack.c.h.b16 %v541
  %v2116 = vunpack.c.l.b16 %v542
  %v2117 = vunpack.c.h.b16 %v542
  %v2118 = vunpack.c.l.b16 %v543
  %v2119 = vunpack.c.h.b16 %v543
  %v2120 = vunpack.c.l.b16 %v544
  %v2121 = vunpack.c.h.b16 %v544
  %v2122 = vunpack.c.l.b16 %v545
  %v2123 = vunpack.c.h.b16 %v545
  %v2124 = vunpack.c.l.b16 %v546
  %v2125 = vunpack.c.h.b16 %v546
  %v2126 = vunpack.c.l.b16 %v547
  %v2127 = vunpack.c.h.b16 %v547
  %v2128 = vunpack.c.l.b16 %v548
  %v2129 = vunpack.c.h.b16 %v548
  %v2130 = vunpack.c.l.b16 %v549
  %v2131 = vunpack.c.h.b16 %v549
  %v2132 = vpack.c.b16 %v1116, %v1108
  %v2133 = vpack.c.b16 %v1117, %v1109
  %v2134 = vpack.c.b16 %v1118, %v1110
  %v2135 = vpack.c.b16 %v1119, %v1111
  %v2136 = vpack.c.b16 %v1120, %v1112
  %v2137 = vpack.c.b16 %v1121, %v1113
  %v2138 = vpack.c.b16 %v1122, %v1114
  %v2139 = vpack.c.b16 %v1123, %v1115
  %v2140 = vpack.c.b16 %v1132, %v1124
  %v2141 = vpack.c.b16 %v1133, %v1125
  %v2142 = vpack.c.b16 %v1134, %v1126
  %v2143 = vpack.c.b16 %v1135, %v1127
  %v2144 = vpack.c.b16 %v1136, %v1128
  %v2145 = vpack.c.b16 %v1137, %v1129
  %v2146 = vpack.c.b16 %v1138, %v1130
  %v2147 = vpack.c.b16 %v1139, %v1131
  %v2148 = vpack.c.b16 %v1148, %v1140
  %v2149 = vpack.c.b16 %v1149, %v1141
  %v2150 = vpack.c.b16 %v1150, %v1142
  %v2151 = vpack.c.b16 %v1151, %v1143
  %v2152 = vpack.c.b16 %v1152, %v1144
  %v2153 = vpack.c.b16 %v1153, %v1145
  %v2154 = vpack.c.b16 %v1154, %v1146
  %v2155 = vpack.c.b16 %v1155, %v1147
  %v2156 = vpack.c.b16 %v1164, %v1156
  %v2157 = vpack.c.b16 %v1165, %v1157
  %v2158 = vpack.c.b16 %v1166, %v1158
  %v2159 = vpack.c.b16 %v1167, %v1159
  %v2160 = vpack.c.b16 %v1168, %v1160
  %v2161 = vpack.c.b16 %v1169, %v1161
  %v2162 = vpack.c.b16 %v1170, %v1162
  %v2163 = vpack.c.b16 %v1171, %v1163
  %v2164 = vpack.c.b16 %v1180, %v1172
  %v2165 = vpack.c.b16 %v1181, %v1173
  %v2166 = vpack.c.b16 %v1182, %v1174
  %v2167 = vpack.c.b16 %v1183, %v1175
  %v2168 = vpack.c.b16 %v1184, %v1176
  %v2169 = vpack.c.b16 %v1185, %v1177
  %v2170 = vpack.c.b16 %v1186, %v1178
  %v2171 = vpack.c.b16 %v1187, %v1179
  %v2172 = vpack.c.b16 %v1196, %v1188
  %v2173 = vpack.c.b16 %v1197, %v1189
  %v2174 = vpack.c.b16 %v1198, %v1190
  %v2175 = vpack.c.b16 %v1199, %v1191
  %v2176 = vpack.c.b16 %v1200, %v1192
  %v2177 = vpack.c.b16 %v1201, %v1193
  %v2178 = vpack.c.b16 %v1202, %v1194
  %v2179 = vpack.c.b16 %v1203, %v1195
  %v2180 = vpack.c.b16 %v1212, %v1204
  %v2181 = vpack.c.b16 %v1213, %v1205
  %v2182 = vpack.c.b16 %v1214, %v1206
  %v2183 = vpack.c.b16 %v1215, %v1207
  %v2184 = vpack.c.b16 %v1216, %v1208
  %v2185 = vpack.c.b16 %v1217, %v1209
  %v2186 = vpack.c.b16 %v1218, %v1210
  %v2187 = vpack.c.b16 %v1219, %v1211
  %v2188 = vpack.c.b16 %v1228, %v1220
  %v2189 = vpack.c.b16 %v1229, %v1221
  %v2190 = vpack.c.b16 %v1230, %v1222
  %v2191 = vpack.c.b16 %v1231, %v1223
  %v2192 = vpack.c.b16 %v1232, %v1224
  %v2193 = vpack.c.b16 %v1233, %v1225
  %v2194 = vpack.c.b16 %v1234, %v1226
  %v2195 = vpack.c.b16 %v1235, %v1227
  %v2196 = vpack.c.b16 %v1244, %v1236
  %v2197 = vpack.c.b16 %v1245, %v1237
  %v2198 = vpack.c.b16 %v1246, %v1238
  %v2199 = vpack.c.b16 %v1247, %v1239
  %v2200 = vpack.c.b16 %v1248, %v1240
  %v2201 = vpack.c.b16 %v1249, %v1241
  %v2202 = vpack.c.b16 %v1250, %v1242
  %v2203 = vpack.c.b16 %v1251, %v1243
  %v2204 = vpack.c.b16 %v1260, %v1252
  %v2205 = vpack.c.b16 %v1261, %v1253
  %v2206 = vpack.c.b16 %v1262, %v1254
  %v2207 = vpack.c.b16 %v1263, %v1255
  %v2208 = vpack.c.b16 %v1264, %v1256
  %v2209 = vpack.c.b16 %v1265, %v1257
  %v2210 = vpack.c.b16 %v1266, %v1258
  %v2211 = vpack.c.b16 %v1267, %v1259
  %v2212 = vpack.c.b16 %v1276, %v1268
  %v2213 = vpack.c.b16 %v1277, %v1269
  %v2214 = vpack.c.b16 %v1278, %v1270
  %v2215 = vpack.c.b16 %v1279, %v1271
  %v2216 = vpack.c.b16 %v1280, %v1272
  %v2217 = vpack.c.b16 %v1281, %v1273
  %v2218 = vpack.c.b16 %v1282, %v1274
  %v2219 = vpack.c.b16 %v1283, %v1275
  %v2220 = vpack.c.b16 %v1292, %v1284
  %v2221 = vpack.c.b16 %v1293, %v1285
  %v2222 = vpack.c.b16 %v1294, %v1286
  %v2223 = vpack.c.b16 %v1295, %v1287
  %v2224 = vpack.c.b16 %v1296, %v1288
  %v2225 = vpack.c.b16 %v1297, %v1289
  %v2226 = vpack.c.b16 %v1298, %v1290
  %v2227 = vpack.c.b16 %v1299, %v1291
  %v2228 = vpack.c.b16 %v1308, %v1300
  %v2229 = vpack.c.b16 %v1309, %v1301
  %v2230 = vpack.c.b16 %v1310, %v1302
  %v2231 = vpack.c.b16 %v1311, %v1303
  %v2232 = vpack.c.b16 %v1312, %v1304
  %v2233 = vpack.c.b16 %v1313, %v1305
  %v2234 = vpack.c.b16 %v1314, %v1306
  %v2235 = vpack.c.b16 %v1315, %v1307
  %v2236 = vpack.c.b16 %v1324, %v1316
  %v2237 = vpack.c.b16 %v1325, %v1317
  %v2238 = vpack.c.b16 %v1326, %v1318
  %v2239 = vpack.c.b16 %v1327, %v1319
  %v2240 = vpack.c.b16 %v1328, %v1320
  %v2241 = vpack.c.b16 %v1329, %v1321
  %v2242 = vpack.c.b16 %v1330, %v1322
  %v2243 = vpack.c.b16 %v1331, %v1323
  %v2244 = vpack.c.b16 %v1340, %v1332
  %v2245 = vpack.c.b16 %v1341, %v1333
  %v2246 = vpack.c.b16 %v1342, %v1334
  %v2247 = vpack.c.b16 %v1343, %v1335
  %v2248 = vpack.c.b16 %v1344, %v1336
  %v2249 = vpack.c.b16 %v1345, %v1337
  %v2250 = vpack.c.b16 %v1346, %v1338
  %v2251 = vpack.c.b16 %v1347, %v1339
  %v2252 = vpack.c.b16 %v1356, %v1348
  %v2253 = vpack.c.b16 %v1357, %v1349
  %v2254 = vpack.c.b16 %v1358, %v1350
  %v2255 = vpack.c.b16 %v1359, %v1351
  %v2256 = vpack.c.b16 %v1360, %v1352
  %v2257 = vpack.c.b16 %v1361, %v1353
  %v2258 = vpack.c.b16 %v1362, %v1354
  %v2259 = vpack.c.b16 %v1363, %v1355
  %v2260 = vpack.c.b16 %v1372, %v1364
  %v2261 = vpack.c.b16 %v1373, %v1365
  %v2262 = vpack.c.b16 %v1374, %v1366
  %v2263 = vpack.c.b16 %v1375, %v1367
  %v2264 = vpack.c.b16 %v1376, %v1368
  %v2265 = vpack.c.b16 %v1377, %v1369
  %v2266 = vpack.c.b16 %v1378, %v1370
  %v2267 = vpack.c.b16 %v1379, %v1371
  %v2268 = vpack.c.b16 %v1388, %v1380
  %v2269 = vpack.c.b16 %v1389, %v1381
  %v2270 = vpack.c.b16 %v1390, %v1382
  %v2271 = vpack.c.b16 %v1391, %v1383
  %v2272 = vpack.c.b16 %v1392, %v1384
  %v2273 = vpack.c.b16 %v1393, %v1385
  %v2274 = vpack.c.b16 %v1394, %v1386
  %v2275 = vpack.c.b16 %v1395, %v1387
  %v2276 = vpack.c.b16 %v1404, %v1396
  %v2277 = vpack.c.b16 %v1405, %v1397
  %v2278 = vpack.c.b16 %v1406, %v1398
  %v2279 = vpack.c.b16 %v1407, %v1399
  %v2280 = vpack.c.b16 %v1408, %v1400
  %v2281 = vpack.c.b16 %v1409, %v1401
  %v2282 = vpack.c.b16 %v1410, %v1402
  %v2283 = vpack.c.b16 %v1411, %v1403
  %v2284 = vpack.c.b16 %v1420, %v1412
  %v2285 = vpack.c.b16 %v1421, %v1413
  %v2286 = vpack.c.b16 %v1422, %v1414
  %v2287 = vpack.c.b16 %v1423, %v1415
  %v2288 = vpack.c.b16 %v1424, %v1416
  %v2289 = vpack.c.b16 %v1425, %v1417
  %v2290 = vpack.c.b16 %v1426, %v1418
  %v2291 = vpack.c.b16 %v1427, %v1419
  %v2292 = vpack.c.b16 %v1436, %v1428
  %v2293 = vpack.c.b16 %v1437, %v1429
  %v2294 = vpack.c.b16 %v1438, %v1430
  %v2295 = vpack.c.b16 %v1439, %v1431
  %v2296 = vpack.c.b16 %v1440, %v1432
  %v2297 = vpack.c.b16 %v1441, %v1433
  %v2298 = vpack.c.b16 %v1442, %v1434
  %v2299 = vpack.c.b16 %v1443, %v1435
  %v2300 = vpack.c.b16 %v1452, %v1444
  %v2301 = vpack.c.b16 %v1453, %v1445
  %v2302 = vpack.c.b16 %v1454, %v1446
  %v2303 = vpack.c.b16 %v1455, %v1447
  %v2304 = vpack.c.b16 %v1456, %v1448
  %v2305 = vpack.c.b16 %v1457, %v1449
  %v2306 = vpack.c.b16 %v1458, %v1450
  %v2307 = vpack.c.b16 %v1459, %v1451
  %v2308 = vpack.c.b16 %v1468, %v1460
  %v2309 = vpack.c.b16 %v1469, %v1461
  %v2310 = vpack.c.b16 %v1470, %v1462
  %v2311 = vpack.c.b16 %v1471, %v1463
  %v2312 = vpack.c.b16 %v1472, %v1464
  %v2313 = vpack.c.b16 %v1473, %v1465
  %v2314 = vpack.c.b16 %v1474, %v1466
  %v2315 = vpack.c.b16 %v1475, %v1467
  %v2316 = vpack.c.b16 %v1484, %v1476
  %v2317 = vpack.c.b16 %v1485, %v1477
  %v2318 = vpack.c.b16 %v1486, %v1478
  %v2319 = vpack.c.b16 %v1487, %v1479
  %v2320 = vpack.c.b16 %v1488, %v1480
  %v2321 = vpack.c.b16 %v1489, %v1481
  %v2322 = vpack.c.b16 %v1490, %v1482
  %v2323 = vpack.c.b16 %v1491, %v1483
  %v2324 = vpack.c.b16 %v1500, %v1492
  %v2325 = vpack.c.b16 %v1501, %v1493
  %v2326 = vpack.c.b16 %v1502, %v1494
  %v2327 = vpack.c.b16 %v1503, %v1495
  %v2328 = vpack.c.b16 %v1504, %v1496
  %v2329 = vpack.c.b16 %v1505, %v1497
  %v2330 = vpack.c.b16 %v1506, %v1498
  %v2331 = vpack.c.b16 %v1507, %v1499
  %v2332 = vpack.c.b16 %v1516, %v1508
  %v2333 = vpack.c.b16 %v1517, %v1509
  %v2334 = vpack.c.b16 %v1518, %v1510
  %v2335 = vpack.c.b16 %v1519, %v1511
  %v2336 = vpack.c.b16 %v1520, %v1512
  %v2337 = vpack.c.b16 %v1521, %v1513
  %v2338 = vpack.c.b16 %v1522, %v1514
  %v2339 = vpack.c.b16 %v1523, %v1515
  %v2340 = vpack.c.b16 %v1532, %v1524
  %v2341 = vpack.c.b16 %v1533, %v1525
  %v2342 = vpack.c.b16 %v1534, %v1526
  %v2343 = vpack.c.b16 %v1535, %v1527
  %v2344 = vpack.c.b16 %v1536, %v1528
  %v2345 = vpack.c.b16 %v1537, %v1529
  %v2346 = vpack.c.b16 %v1538, %v1530
  %v2347 = vpack.c.b16 %v1539, %v1531
  %v2348 = vpack.c.b16 %v1548, %v1540
  %v2349 = vpack.c.b16 %v1549, %v1541
  %v2350 = vpack.c.b16 %v1550, %v1542
  %v2351 = vpack.c.b16 %v1551, %v1543
  %v2352 = vpack.c.b16 %v1552, %v1544
  %v2353 = vpack.c.b16 %v1553, %v1545
  %v2354 = vpack.c.b16 %v1554, %v1546
  %v2355 = vpack.c.b16 %v1555, %v1547
  %v2356 = vpack.c.b16 %v1564, %v1556
  %v2357 = vpack.c.b16 %v1565, %v1557
  %v2358 = vpack.c.b16 %v1566, %v1558
  %v2359 = vpack.c.b16 %v1567, %v1559
  %v2360 = vpack.c.b16 %v1568, %v1560
  %v2361 = vpack.c.b16 %v1569, %v1561
  %v2362 = vpack.c.b16 %v1570, %v1562
  %v2363 = vpack.c.b16 %v1571, %v1563
  %v2364 = vpack.c.b16 %v1580, %v1572
  %v2365 = vpack.c.b16 %v1581, %v1573
  %v2366 = vpack.c.b16 %v1582, %v1574
  %v2367 = vpack.c.b16 %v1583, %v1575
  %v2368 = vpack.c.b16 %v1584, %v1576
  %v2369 = vpack.c.b16 %v1585, %v1577
  %v2370 = vpack.c.b16 %v1586, %v1578
  %v2371 = vpack.c.b16 %v1587, %v1579
  %v2372 = vpack.c.b16 %v1596, %v1588
  %v2373 = vpack.c.b16 %v1597, %v1589
  %v2374 = vpack.c.b16 %v1598, %v1590
  %v2375 = vpack.c.b16 %v1599, %v1591
  %v2376 = vpack.c.b16 %v1600, %v1592
  %v2377 = vpack.c.b16 %v1601, %v1593
  %v2378 = vpack.c.b16 %v1602, %v1594
  %v2379 = vpack.c.b16 %v1603, %v1595
  %v2380 = vpack.c.b16 %v1612, %v1604
  %v2381 = vpack.c.b16 %v1613, %v1605
  %v2382 = vpack.c.b16 %v1614, %v1606
  %v2383 = vpack.c.b16 %v1615, %v1607
  %v2384 = vpack.c.b16 %v1616, %v1608
  %v2385 = vpack.c.b16 %v1617, %v1609
  %v2386 = vpack.c.b16 %v1618, %v1610
  %v2387 = vpack.c.b16 %v1619, %v1611
  %v2388 = vpack.c.b16 %v1628, %v1620
  %v2389 = vpack.c.b16 %v1629, %v1621
  %v2390 = vpack.c.b16 %v1630, %v1622
  %v2391 = vpack.c.b16 %v1631, %v1623
  %v2392 = vpack.c.b16 %v1632, %v1624
  %v2393 = vpack.c.b16 %v1633, %v1625
  %v2394 = vpack.c.b16 %v1634, %v1626
  %v2395 = vpack.c.b16 %v1635, %v1627
  %v2396 = vpack.c.b16 %v1644, %v1636
  %v2397 = vpack.c.b16 %v1645, %v1637
  %v2398 = vpack.c.b16 %v1646, %v1638
  %v2399 = vpack.c.b16 %v1647, %v1639
  %v2400 = vpack.c.b16 %v1648, %v1640
  %v2401 = vpack.c.b16 %v1649, %v1641
  %v2402 = vpack.c.b16 %v1650, %v1642
  %v2403 = vpack.c.b16 %v1651, %v1643
  %v2404 = vpack.c.b16 %v1660, %v1652
  %v2405 = vpack.c.b16 %v1661, %v1653
  %v2406 = vpack.c.b16 %v1662, %v1654
  %v2407 = vpack.c.b16 %v1663, %v1655
  %v2408 = vpack.c.b16 %v1664, %v1656
  %v2409 = vpack.c.b16 %v1665, %v1657
  %v2410 = vpack.c.b16 %v1666, %v1658
  %v2411 = vpack.c.b16 %v1667, %v1659
  %v2412 = vpack.c.b16 %v1676, %v1668
  %v2413 = vpack.c.b16 %v1677, %v1669
  %v2414 = vpack.c.b16 %v1678, %v1670
  %v2415 = vpack.c.b16 %v1679, %v1671
  %v2416 = vpack.c.b16 %v1680, %v1672
  %v2417 = vpack.c.b16 %v1681, %v1673
  %v2418 = vpack.c.b16 %v1682, %v1674
  %v2419 = vpack.c.b16 %v1683, %v1675
  %v2420 = vpack.c.b16 %v1692, %v1684
  %v2421 = vpack.c.b16 %v1693, %v1685
  %v2422 = vpack.c.b16 %v1694, %v1686
  %v2423 = vpack.c.b16 %v1695, %v1687
  %v2424 = vpack.c.b16 %v1696, %v1688
  %v2425 = vpack.c.b16 %v1697, %v1689
  %v2426 = vpack.c.b16 %v1698, %v1690
  %v2427 = vpack.c.b16 %v1699, %v1691
  %v2428 = vpack.c.b16 %v1708, %v1700
  %v2429 = vpack.c.b16 %v1709, %v1701
  %v2430 = vpack.c.b16 %v1710, %v1702
  %v2431 = vpack.c.b16 %v1711, %v1703
  %v2432 = vpack.c.b16 %v1712, %v1704
  %v2433 = vpack.c.b16 %v1713, %v1705
  %v2434 = vpack.c.b16 %v1714, %v1706
  %v2435 = vpack.c.b16 %v1715, %v1707
  %v2436 = vpack.c.b16 %v1724, %v1716
  %v2437 = vpack.c.b16 %v1725, %v1717
  %v2438 = vpack.c.b16 %v1726, %v1718
  %v2439 = vpack.c.b16 %v1727, %v1719
  %v2440 = vpack.c.b16 %v1728, %v1720
  %v2441 = vpack.c.b16 %v1729, %v1721
  %v2442 = vpack.c.b16 %v1730, %v1722
  %v2443 = vpack.c.b16 %v1731, %v1723
  %v2444 = vpack.c.b16 %v1740, %v1732
  %v2445 = vpack.c.b16 %v1741, %v1733
  %v2446 = vpack.c.b16 %v1742, %v1734
  %v2447 = vpack.c.b16 %v1743, %v1735
  %v2448 = vpack.c.b16 %v1744, %v1736
  %v2449 = vpack.c.b16 %v1745, %v1737
  %v2450 = vpack.c.b16 %v1746, %v1738
  %v2451 = vpack.c.b16 %v1747, %v1739
  %v2452 = vpack.c.b16 %v1756, %v1748
  %v2453 = vpack.c.b16 %v1757, %v1749
  %v2454 = vpack.c.b16 %v1758, %v1750
  %v2455 = vpack.c.b16 %v1759, %v1751
  %v2456 = vpack.c.b16 %v1760, %v1752
  %v2457 = vpack.c.b16 %v1761, %v1753
  %v2458 = vpack.c.b16 %v1762, %v1754
  %v2459 = vpack.c.b16 %v1763, %v1755
  %v2460 = vpack.c.b16 %v1772, %v1764
  %v2461 = vpack.c.b16 %v1773, %v1765
  %v2462 = vpack.c.b16 %v1774, %v1766
  %v2463 = vpack.c.b16 %v1775, %v1767
  %v2464 = vpack.c.b16 %v1776, %v1768
  %v2465 = vpack.c.b16 %v1777, %v1769
  %v2466 = vpack.c.b16 %v1778, %v1770
  %v2467 = vpack.c.b16 %v1779, %v1771
  %v2468 = vpack.c.b16 %v1788, %v1780
  %v2469 = vpack.c.b16 %v1789, %v1781
  %v2470 = vpack.c.b16 %v1790, %v1782
  %v2471 = vpack.c.b16 %v1791, %v1783
  %v2472 = vpack.c.b16 %v1792, %v1784
  %v2473 = vpack.c.b16 %v1793, %v1785
  %v2474 = vpack.c.b16 %v1794, %v1786
  %v2475 = vpack.c.b16 %v1795, %v1787
  %v2476 = vpack.c.b16 %v1804, %v1796
  %v2477 = vpack.c.b16 %v1805, %v1797
  %v2478 = vpack.c.b16 %v1806, %v1798
  %v2479 = vpack.c.b16 %v1807, %v1799
  %v2480 = vpack.c.b16 %v1808, %v1800
  %v2481 = vpack.c.b16 %v1809, %v1801
  %v2482 = vpack.c.b16 %v1810, %v1802
  %v2483 = vpack.c.b16 %v1811, %v1803
  %v2484 = vpack.c.b16 %v1820, %v1812
  %v2485 = vpack.c.b16 %v1821, %v1813
  %v2486 = vpack.c.b16 %v1822, %v1814
  %v2487 = vpack.c.b16 %v1823, %v1815
  %v2488 = vpack.c.b16 %v1824, %v1816
  %v2489 = vpack.c.b16 %v1825, %v1817
  %v2490 = vpack.c.b16 %v1826, %v1818
  %v2491 = vpack.c.b16 %v1827, %v1819
  %v2492 = vpack.c.b16 %v1836, %v1828
  %v2493 = vpack.c.b16 %v1837, %v1829
  %v2494 = vpack.c.b16 %v1838, %v1830
  %v2495 = vpack.c.b16 %v1839, %v1831
  %v2496 = vpack.c.b16 %v1840, %v1832
  %v2497 = vpack.c.b16 %v1841, %v1833
  %v2498 = vpack.c.b16 %v1842, %v1834
  %v2499 = vpack.c.b16 %v1843, %v1835
  %v2500 = vpack.c.b16 %v1852, %v1844
  %v2501 = vpack.c.b16 %v1853, %v1845
  %v2502 = vpack.c.b16 %v1854, %v1846
  %v2503 = vpack.c.b16 %v1855, %v1847
  %v2504 = vpack.c.b16 %v1856, %v1848
  %v2505 = vpack.c.b16 %v1857, %v1849
  %v2506 = vpack.c.b16 %v1858, %v1850
  %v2507 = vpack.c.b16 %v1859, %v1851
  %v2508 = vpack.c.b16 %v1868, %v1860
  %v2509 = vpack.c.b16 %v1869, %v1861
  %v2510 = vpack.c.b16 %v1870, %v1862
  %v2511 = vpack.c.b16 %v1871, %v1863
  %v2512 = vpack.c.b16 %v1872, %v1864
  %v2513 = vpack.c.b16 %v1873, %v1865
  %v2514 = vpack.c.b16 %v1874, %v1866
  %v2515 = vpack.c.b16 %v1875, %v1867
  %v2516 = vpack.c.b16 %v1884, %v1876
  %v2517 = vpack.c.b16 %v1885, %v1877
  %v2518 = vpack.c.b16 %v1886, %v1878
  %v2519 = vpack.c.b16 %v1887, %v1879
  %v2520 = vpack.c.b16 %v1888, %v1880
  %v2521 = vpack.c.b16 %v1889, %v1881
  %v2522 = vpack.c.b16 %v1890, %v1882
  %v2523 = vpack.c.b16 %v1891, %v1883
  %v2524 = vpack.c.b16 %v1900, %v1892
  %v2525 = vpack.c.b16 %v1901, %v1893
  %v2526 = vpack.c.b16 %v1902, %v1894
  %v2527 = vpack.c.b16 %v1903, %v1895
  %v2528 = vpack.c.b16 %v1904, %v1896
  %v2529 = vpack.c.b16 %v1905, %v1897
  %v2530 = vpack.c.b16 %v1906, %v1898
  %v2531 = vpack.c.b16 %v1907, %v1899
  %v2532 = vpack.c.b16 %v1916, %v1908
  %v2533 = vpack.c.b16 %v1917, %v1909
  %v2534 = vpack.c.b16 %v1918, %v1910
  %v2535 = vpack.c.b16 %v1919, %v1911
  %v2536 = vpack.c.b16 %v1920, %v1912
  %v2537 = vpack.c.b16 %v1921, %v1913
  %v2538 = vpack.c.b16 %v1922, %v1914
  %v2539 = vpack.c.b16 %v1923, %v1915
  %v2540 = vpack.c.b16 %v1932, %v1924
  %v2541 = vpack.c.b16 %v1933, %v1925
  %v2542 = vpack.c.b16 %v1934, %v1926
  %v2543 = vpack.c.b16 %v1935, %v1927
  %v2544 = vpack.c.b16 %v1936, %v1928
  %v2545 = vpack.c.b16 %v1937, %v1929
  %v2546 = vpack.c.b16 %v1938, %v1930
  %v2547 = vpack.c.b16 %v1939, %v1931
  %v2548 = vpack.c.b16 %v1948, %v1940
  %v2549 = vpack.c.b16 %v1949, %v1941
  %v2550 = vpack.c.b16 %v1950, %v1942
  %v2551 = vpack.c.b16 %v1951, %v1943
  %v2552 = vpack.c.b16 %v1952, %v1944
  %v2553 = vpack.c.b16 %v1953, %v1945
  %v2554 = vpack.c.b16 %v1954, %v1946
  %v2555 = vpack.c.b16 %v1955, %v1947
  %v2556 = vpack.c.b16 %v1964, %v1956
  %v2557 = vpack.c.b16 %v1965, %v1957
  %v2558 = vpack.c.b16 %v1966, %v1958
  %v2559 = vpack.c.b16 %v1967, %v1959
  %v2560 = vpack.c.b16 %v1968, %v1960
  %v2561 = vpack.c.b16 %v1969, %v1961
  %v2562 = vpack.c.b16 %v1970, %v1962
  %v2563 = vpack.c.b16 %v1971, %v1963
  %v2564 = vpack.c.b16 %v1980, %v1972
  %v2565 = vpack.c.b16 %v1981, %v1973
  %v2566 = vpack.c.b16 %v1982, %v1974
  %v2567 = vpack.c.b16 %v1983, %v1975
  %v2568 = vpack.c.b16 %v1984, %v1976
  %v2569 = vpack.c.b16 %v1985, %v1977
  %v2570 = vpack.c.b16 %v1986, %v1978
  %v2571 = vpack.c.b16 %v1987, %v1979
  %v2572 = vpack.c.b16 %v1996, %v1988
  %v2573 = vpack.c.b16 %v1997, %v1989
  %v2574 = vpack.c.b16 %v1998, %v1990
  %v2575 = vpack.c.b16 %v1999, %v1991
  %v2576 = vpack.c.b16 %v2000, %v1992
  %v2577 = vpack.c.b16 %v2001, %v1993
  %v2578 = vpack.c.b16 %v2002, %v1994
  %v2579 = vpack.c.b16 %v2003, %v1995
  %v2580 = vpack.c.b16 %v2012, %v2004
  %v2581 = vpack.c.b16 %v2013, %v2005
  %v2582 = vpack.c.b16 %v2014, %v2006
  %v2583 = vpack.c.b16 %v2015, %v2007
  %v2584 = vpack.c.b16 %v2016, %v2008
  %v2585 = vpack.c.b16 %v2017, %v2009
  %v2586 = vpack.c.b16 %v2018, %v2010
  %v2587 = vpack.c.b16 %v2019, %v2011
  %v2588 = vpack.c.b16 %v2028, %v2020
  %v2589 = vpack.c.b16 %v2029, %v2021
  %v2590 = vpack.c.b16 %v2030, %v2022
  %v2591 = vpack.c.b16 %v2031, %v2023
  %v2592 = vpack.c.b16 %v2032, %v2024
  %v2593 = vpack.c.b16 %v2033, %v2025
  %v2594 = vpack.c.b16 %v2034, %v2026
  %v2595 = vpack.c.b16 %v2035, %v2027
  %v2596 = vpack.c.b16 %v2044, %v2036
  %v2597 = vpack.c.b16 %v2045, %v2037
  %v2598 = vpack.c.b16 %v2046, %v2038
  %v2599 = vpack.c.b16 %v2047, %v2039
  %v2600 = vpack.c.b16 %v2048, %v2040
  %v2601 = vpack.c.b16 %v2049, %v2041
  %v2602 = vpack.c.b16 %v2050, %v2042
  %v2603 = vpack.c.b16 %v2051, %v2043
  %v2604 = vpack.c.b16 %v2060, %v2052
  %v2605 = vpack.c.b16 %v2061, %v2053
  %v2606 = vpack.c.b16 %v2062, %v2054
  %v2607 = vpack.c.b16 %v2063, %v2055
  %v2608 = vpack.c.b16 %v2064, %v2056
  %v2609 = vpack.c.b16 %v2065, %v2057
  %v2610 = vpack.c.b16 %v2066, %v2058
  %v2611 = vpack.c.b16 %v2067, %v2059
  %v2612 = vpack.c.b16 %v2076, %v2068
  %v2613 = vpack.c.b16 %v2077, %v2069
  %v2614 = vpack.c.b16 %v2078, %v2070
  %v2615 = vpack.c.b16 %v2079, %v2071
  %v2616 = vpack.c.b16 %v2080, %v2072
  %v2617 = vpack.c.b16 %v2081, %v2073
  %v2618 = vpack.c.b16 %v2082, %v2074
  %v2619 = vpack.c.b16 %v2083, %v2075
  %v2620 = vpack.c.b16 %v2092, %v2084
  %v2621 = vpack.c.b16 %v2093, %v2085
  %v2622 = vpack.c.b16 %v2094, %v2086
  %v2623 = vpack.c.b16 %v2095, %v2087
  %v2624 = vpack.c.b16 %v2096, %v2088
  %v2625 = vpack.c.b16 %v2097, %v2089
  %v2626 = vpack.c.b16 %v2098, %v2090
  %v2627 = vpack.c.b16 %v2099, %v2091
  %v2628 = vpack.c.b16 %v2108, %v2100
  %v2629 = vpack.c.b16 %v2109, %v2101
  %v2630 = vpack.c.b16 %v2110, %v2102
  %v2631 = vpack.c.b16 %v2111, %v2103
  %v2632 = vpack.c.b16 %v2112, %v2104
  %v2633 = vpack.c.b16 %v2113, %v2105
  %v2634 = vpack.c.b16 %v2114, %v2106
  %v2635 = vpack.c.b16 %v2115, %v2107
  %v2636 = vpack.c.b16 %v2124, %v2116
  %v2637 = vpack.c.b16 %v2125, %v2117
  %v2638 = vpack.c.b16 %v2126, %v2118
  %v2639 = vpack.c.b16 %v2127, %v2119
  %v2640 = vpack.c.b16 %v2128, %v2120
  %v2641 = vpack.c.b16 %v2129, %v2121
  %v2642 = vpack.c.b16 %v2130, %v2122
  %v2643 = vpack.c.b16 %v2131, %v2123
  %3156 = vmatpush.bf16.msra.mxu0 %v2188
  %3157 = vmatpush.bf16.msra.mxu0 %v2180
  %3158 = vmatpush.bf16.msra.mxu0 %v2172
  %3159 = vmatpush.bf16.msra.mxu0 %v2164
  %3160 = vmatpush.bf16.msra.mxu0 %v2156
  %3161 = vmatpush.bf16.msra.mxu0 %v2148
  %3162 = vmatpush.bf16.msra.mxu0 %v2140
  %3163 = vmatpush.bf16.msra.mxu0 %v2132
  %3164 = vmatmul.bf16.gmra.mxu0 %v580
  %v3165 = vpop.f32.mrf.mxu0
  %v3166 = vadd.f32 %v552, %v3165
  %v3167 = vpop.f32.mrf.mxu0
  %3168 = vdwg.mxu0
  %3169 = vmatpush.bf16.msra.mxu0 %v2252
  %3170 = vmatpush.bf16.msra.mxu0 %v2244
  %3171 = vmatpush.bf16.msra.mxu0 %v2236
  %3172 = vmatpush.bf16.msra.mxu0 %v2228
  %3173 = vmatpush.bf16.msra.mxu0 %v2220
  %3174 = vmatpush.bf16.msra.mxu0 %v2212
  %3175 = vmatpush.bf16.msra.mxu0 %v2204
  %3176 = vmatpush.bf16.msra.mxu0 %v2196
  %3177 = vmatmul.bf16.gmra.mxu0 %v581
  %v3178 = vpop.f32.mrf.mxu0
  %v3179 = vadd.f32 %v3166, %v3178
  %v3180 = vpop.f32.mrf.mxu0
  %3181 = vdwg.mxu0
  %3182 = vmatpush.bf16.msra.mxu0 %v2316
  %3183 = vmatpush.bf16.msra.mxu0 %v2308
  %3184 = vmatpush.bf16.msra.mxu0 %v2300
  %3185 = vmatpush.bf16.msra.mxu0 %v2292
  %3186 = vmatpush.bf16.msra.mxu0 %v2284
  %3187 = vmatpush.bf16.msra.mxu0 %v2276
  %3188 = vmatpush.bf16.msra.mxu0 %v2268
  %3189 = vmatpush.bf16.msra.mxu0 %v2260
  %3190 = vmatmul.bf16.gmra.mxu0 %v582
  %v3191 = vpop.f32.mrf.mxu0
  %v3192 = vadd.f32 %v3179, %v3191
  %v3193 = vpop.f32.mrf.mxu0
  %3194 = vdwg.mxu0
  %3195 = vmatpush.bf16.msra.mxu0 %v2380
  %3196 = vmatpush.bf16.msra.mxu0 %v2372
  %3197 = vmatpush.bf16.msra.mxu0 %v2364
  %3198 = vmatpush.bf16.msra.mxu0 %v2356
  %3199 = vmatpush.bf16.msra.mxu0 %v2348
  %3200 = vmatpush.bf16.msra.mxu0 %v2340
  %3201 = vmatpush.bf16.msra.mxu0 %v2332
  %3202 = vmatpush.bf16.msra.mxu0 %v2324
  %3203 = vmatmul.bf16.gmra.mxu0 %v583
  %v3204 = vpop.f32.mrf.mxu0
  %v3205 = vadd.f32 %v3192, %v3204
  %v3206 = vpop.f32.mrf.mxu0
  %3207 = vdwg.mxu0
  %3208 = vmatpush.bf16.msra.mxu0 %v2444
  %3209 = vmatpush.bf16.msra.mxu0 %v2436
  %3210 = vmatpush.bf16.msra.mxu0 %v2428
  %3211 = vmatpush.bf16.msra.mxu0 %v2420
  %3212 = vmatpush.bf16.msra.mxu0 %v2412
  %3213 = vmatpush.bf16.msra.mxu0 %v2404
  %3214 = vmatpush.bf16.msra.mxu0 %v2396
  %3215 = vmatpush.bf16.msra.mxu0 %v2388
  %3216 = vmatmul.bf16.gmra.mxu0 %v584
  %v3217 = vpop.f32.mrf.mxu0
  %v3218 = vadd.f32 %v3205, %v3217
  %v3219 = vpop.f32.mrf.mxu0
  %3220 = vdwg.mxu0
  %3221 = vmatpush.bf16.msra.mxu0 %v2508
  %3222 = vmatpush.bf16.msra.mxu0 %v2500
  %3223 = vmatpush.bf16.msra.mxu0 %v2492
  %3224 = vmatpush.bf16.msra.mxu0 %v2484
  %3225 = vmatpush.bf16.msra.mxu0 %v2476
  %3226 = vmatpush.bf16.msra.mxu0 %v2468
  %3227 = vmatpush.bf16.msra.mxu0 %v2460
  %3228 = vmatpush.bf16.msra.mxu0 %v2452
  %3229 = vmatmul.bf16.gmra.mxu0 %v585
  %v3230 = vpop.f32.mrf.mxu0
  %v3231 = vadd.f32 %v3218, %v3230
  %v3232 = vpop.f32.mrf.mxu0
  %3233 = vdwg.mxu0
  %3234 = vmatpush.bf16.msra.mxu0 %v2572
  %3235 = vmatpush.bf16.msra.mxu0 %v2564
  %3236 = vmatpush.bf16.msra.mxu0 %v2556
  %3237 = vmatpush.bf16.msra.mxu0 %v2548
  %3238 = vmatpush.bf16.msra.mxu0 %v2540
  %3239 = vmatpush.bf16.msra.mxu0 %v2532
  %3240 = vmatpush.bf16.msra.mxu0 %v2524
  %3241 = vmatpush.bf16.msra.mxu0 %v2516
  %3242 = vmatmul.bf16.gmra.mxu0 %v586
  %v3243 = vpop.f32.mrf.mxu0
  %v3244 = vadd.f32 %v3231, %v3243
  %v3245 = vpop.f32.mrf.mxu0
  %3246 = vdwg.mxu0
  %3247 = vmatpush.bf16.msra.mxu0 %v2636
  %3248 = vmatpush.bf16.msra.mxu0 %v2628
  %3249 = vmatpush.bf16.msra.mxu0 %v2620
  %3250 = vmatpush.bf16.msra.mxu0 %v2612
  %3251 = vmatpush.bf16.msra.mxu0 %v2604
  %3252 = vmatpush.bf16.msra.mxu0 %v2596
  %3253 = vmatpush.bf16.msra.mxu0 %v2588
  %3254 = vmatpush.bf16.msra.mxu0 %v2580
  %3255 = vmatmul.bf16.gmra.mxu0 %v587
  %v3256 = vpop.f32.mrf.mxu0
  %v3257 = vadd.f32 %v3244, %v3256
  %v3258 = vpop.f32.mrf.mxu0
  %3259 = vdwg.mxu0
  %3260 = vmatpush.bf16.msra.mxu0 %v2189
  %3261 = vmatpush.bf16.msra.mxu0 %v2181
  %3262 = vmatpush.bf16.msra.mxu0 %v2173
  %3263 = vmatpush.bf16.msra.mxu0 %v2165
  %3264 = vmatpush.bf16.msra.mxu0 %v2157
  %3265 = vmatpush.bf16.msra.mxu0 %v2149
  %3266 = vmatpush.bf16.msra.mxu0 %v2141
  %3267 = vmatpush.bf16.msra.mxu0 %v2133
  %3268 = vmatmul.bf16.gmra.mxu0 %v580
  %v3269 = vpop.f32.mrf.mxu0
  %v3270 = vadd.f32 %v553, %v3269
  %v3271 = vpop.f32.mrf.mxu0
  %3272 = vdwg.mxu0
  %3273 = vmatpush.bf16.msra.mxu0 %v2253
  %3274 = vmatpush.bf16.msra.mxu0 %v2245
  %3275 = vmatpush.bf16.msra.mxu0 %v2237
  %3276 = vmatpush.bf16.msra.mxu0 %v2229
  %3277 = vmatpush.bf16.msra.mxu0 %v2221
  %3278 = vmatpush.bf16.msra.mxu0 %v2213
  %3279 = vmatpush.bf16.msra.mxu0 %v2205
  %3280 = vmatpush.bf16.msra.mxu0 %v2197
  %3281 = vmatmul.bf16.gmra.mxu0 %v581
  %v3282 = vpop.f32.mrf.mxu0
  %v3283 = vadd.f32 %v3270, %v3282
  %v3284 = vpop.f32.mrf.mxu0
  %3285 = vdwg.mxu0
  %3286 = vmatpush.bf16.msra.mxu0 %v2317
  %3287 = vmatpush.bf16.msra.mxu0 %v2309
  %3288 = vmatpush.bf16.msra.mxu0 %v2301
  %3289 = vmatpush.bf16.msra.mxu0 %v2293
  %3290 = vmatpush.bf16.msra.mxu0 %v2285
  %3291 = vmatpush.bf16.msra.mxu0 %v2277
  %3292 = vmatpush.bf16.msra.mxu0 %v2269
  %3293 = vmatpush.bf16.msra.mxu0 %v2261
  %3294 = vmatmul.bf16.gmra.mxu0 %v582
  %v3295 = vpop.f32.mrf.mxu0
  %v3296 = vadd.f32 %v3283, %v3295
  %v3297 = vpop.f32.mrf.mxu0
  %3298 = vdwg.mxu0
  %3299 = vmatpush.bf16.msra.mxu0 %v2381
  %3300 = vmatpush.bf16.msra.mxu0 %v2373
  %3301 = vmatpush.bf16.msra.mxu0 %v2365
  %3302 = vmatpush.bf16.msra.mxu0 %v2357
  %3303 = vmatpush.bf16.msra.mxu0 %v2349
  %3304 = vmatpush.bf16.msra.mxu0 %v2341
  %3305 = vmatpush.bf16.msra.mxu0 %v2333
  %3306 = vmatpush.bf16.msra.mxu0 %v2325
  %3307 = vmatmul.bf16.gmra.mxu0 %v583
  %v3308 = vpop.f32.mrf.mxu0
  %v3309 = vadd.f32 %v3296, %v3308
  %v3310 = vpop.f32.mrf.mxu0
  %3311 = vdwg.mxu0
  %3312 = vmatpush.bf16.msra.mxu0 %v2445
  %3313 = vmatpush.bf16.msra.mxu0 %v2437
  %3314 = vmatpush.bf16.msra.mxu0 %v2429
  %3315 = vmatpush.bf16.msra.mxu0 %v2421
  %3316 = vmatpush.bf16.msra.mxu0 %v2413
  %3317 = vmatpush.bf16.msra.mxu0 %v2405
  %3318 = vmatpush.bf16.msra.mxu0 %v2397
  %3319 = vmatpush.bf16.msra.mxu0 %v2389
  %3320 = vmatmul.bf16.gmra.mxu0 %v584
  %v3321 = vpop.f32.mrf.mxu0
  %v3322 = vadd.f32 %v3309, %v3321
  %v3323 = vpop.f32.mrf.mxu0
  %3324 = vdwg.mxu0
  %3325 = vmatpush.bf16.msra.mxu0 %v2509
  %3326 = vmatpush.bf16.msra.mxu0 %v2501
  %3327 = vmatpush.bf16.msra.mxu0 %v2493
  %3328 = vmatpush.bf16.msra.mxu0 %v2485
  %3329 = vmatpush.bf16.msra.mxu0 %v2477
  %3330 = vmatpush.bf16.msra.mxu0 %v2469
  %3331 = vmatpush.bf16.msra.mxu0 %v2461
  %3332 = vmatpush.bf16.msra.mxu0 %v2453
  %3333 = vmatmul.bf16.gmra.mxu0 %v585
  %v3334 = vpop.f32.mrf.mxu0
  %v3335 = vadd.f32 %v3322, %v3334
  %v3336 = vpop.f32.mrf.mxu0
  %3337 = vdwg.mxu0
  %3338 = vmatpush.bf16.msra.mxu0 %v2573
  %3339 = vmatpush.bf16.msra.mxu0 %v2565
  %3340 = vmatpush.bf16.msra.mxu0 %v2557
  %3341 = vmatpush.bf16.msra.mxu0 %v2549
  %3342 = vmatpush.bf16.msra.mxu0 %v2541
  %3343 = vmatpush.bf16.msra.mxu0 %v2533
  %3344 = vmatpush.bf16.msra.mxu0 %v2525
  %3345 = vmatpush.bf16.msra.mxu0 %v2517
  %3346 = vmatmul.bf16.gmra.mxu0 %v586
  %v3347 = vpop.f32.mrf.mxu0
  %v3348 = vadd.f32 %v3335, %v3347
  %v3349 = vpop.f32.mrf.mxu0
  %3350 = vdwg.mxu0
  %3351 = vmatpush.bf16.msra.mxu0 %v2637
  %3352 = vmatpush.bf16.msra.mxu0 %v2629
  %3353 = vmatpush.bf16.msra.mxu0 %v2621
  %3354 = vmatpush.bf16.msra.mxu0 %v2613
  %3355 = vmatpush.bf16.msra.mxu0 %v2605
  %3356 = vmatpush.bf16.msra.mxu0 %v2597
  %3357 = vmatpush.bf16.msra.mxu0 %v2589
  %3358 = vmatpush.bf16.msra.mxu0 %v2581
  %3359 = vmatmul.bf16.gmra.mxu0 %v587
  %v3360 = vpop.f32.mrf.mxu0
  %v3361 = vadd.f32 %v3348, %v3360
  %v3362 = vpop.f32.mrf.mxu0
  %3363 = vdwg.mxu0
  %3364 = vmatpush.bf16.msra.mxu0 %v2190
  %3365 = vmatpush.bf16.msra.mxu0 %v2182
  %3366 = vmatpush.bf16.msra.mxu0 %v2174
  %3367 = vmatpush.bf16.msra.mxu0 %v2166
  %3368 = vmatpush.bf16.msra.mxu0 %v2158
  %3369 = vmatpush.bf16.msra.mxu0 %v2150
  %3370 = vmatpush.bf16.msra.mxu0 %v2142
  %3371 = vmatpush.bf16.msra.mxu0 %v2134
  %3372 = vmatmul.bf16.gmra.mxu0 %v580
  %v3373 = vpop.f32.mrf.mxu0
  %v3374 = vadd.f32 %v554, %v3373
  %v3375 = vpop.f32.mrf.mxu0
  %3376 = vdwg.mxu0
  %3377 = vmatpush.bf16.msra.mxu0 %v2254
  %3378 = vmatpush.bf16.msra.mxu0 %v2246
  %3379 = vmatpush.bf16.msra.mxu0 %v2238
  %3380 = vmatpush.bf16.msra.mxu0 %v2230
  %3381 = vmatpush.bf16.msra.mxu0 %v2222
  %3382 = vmatpush.bf16.msra.mxu0 %v2214
  %3383 = vmatpush.bf16.msra.mxu0 %v2206
  %3384 = vmatpush.bf16.msra.mxu0 %v2198
  %3385 = vmatmul.bf16.gmra.mxu0 %v581
  %v3386 = vpop.f32.mrf.mxu0
  %v3387 = vadd.f32 %v3374, %v3386
  %v3388 = vpop.f32.mrf.mxu0
  %3389 = vdwg.mxu0
  %3390 = vmatpush.bf16.msra.mxu0 %v2318
  %3391 = vmatpush.bf16.msra.mxu0 %v2310
  %3392 = vmatpush.bf16.msra.mxu0 %v2302
  %3393 = vmatpush.bf16.msra.mxu0 %v2294
  %3394 = vmatpush.bf16.msra.mxu0 %v2286
  %3395 = vmatpush.bf16.msra.mxu0 %v2278
  %3396 = vmatpush.bf16.msra.mxu0 %v2270
  %3397 = vmatpush.bf16.msra.mxu0 %v2262
  %3398 = vmatmul.bf16.gmra.mxu0 %v582
  %v3399 = vpop.f32.mrf.mxu0
  %v3400 = vadd.f32 %v3387, %v3399
  %v3401 = vpop.f32.mrf.mxu0
  %3402 = vdwg.mxu0
  %3403 = vmatpush.bf16.msra.mxu0 %v2382
  %3404 = vmatpush.bf16.msra.mxu0 %v2374
  %3405 = vmatpush.bf16.msra.mxu0 %v2366
  %3406 = vmatpush.bf16.msra.mxu0 %v2358
  %3407 = vmatpush.bf16.msra.mxu0 %v2350
  %3408 = vmatpush.bf16.msra.mxu0 %v2342
  %3409 = vmatpush.bf16.msra.mxu0 %v2334
  %3410 = vmatpush.bf16.msra.mxu0 %v2326
  %3411 = vmatmul.bf16.gmra.mxu0 %v583
  %v3412 = vpop.f32.mrf.mxu0
  %v3413 = vadd.f32 %v3400, %v3412
  %v3414 = vpop.f32.mrf.mxu0
  %3415 = vdwg.mxu0
  %3416 = vmatpush.bf16.msra.mxu0 %v2446
  %3417 = vmatpush.bf16.msra.mxu0 %v2438
  %3418 = vmatpush.bf16.msra.mxu0 %v2430
  %3419 = vmatpush.bf16.msra.mxu0 %v2422
  %3420 = vmatpush.bf16.msra.mxu0 %v2414
  %3421 = vmatpush.bf16.msra.mxu0 %v2406
  %3422 = vmatpush.bf16.msra.mxu0 %v2398
  %3423 = vmatpush.bf16.msra.mxu0 %v2390
  %3424 = vmatmul.bf16.gmra.mxu0 %v584
  %v3425 = vpop.f32.mrf.mxu0
  %v3426 = vadd.f32 %v3413, %v3425
  %v3427 = vpop.f32.mrf.mxu0
  %3428 = vdwg.mxu0
  %3429 = vmatpush.bf16.msra.mxu0 %v2510
  %3430 = vmatpush.bf16.msra.mxu0 %v2502
  %3431 = vmatpush.bf16.msra.mxu0 %v2494
  %3432 = vmatpush.bf16.msra.mxu0 %v2486
  %3433 = vmatpush.bf16.msra.mxu0 %v2478
  %3434 = vmatpush.bf16.msra.mxu0 %v2470
  %3435 = vmatpush.bf16.msra.mxu0 %v2462
  %3436 = vmatpush.bf16.msra.mxu0 %v2454
  %3437 = vmatmul.bf16.gmra.mxu0 %v585
  %v3438 = vpop.f32.mrf.mxu0
  %v3439 = vadd.f32 %v3426, %v3438
  %v3440 = vpop.f32.mrf.mxu0
  %3441 = vdwg.mxu0
  %3442 = vmatpush.bf16.msra.mxu0 %v2574
  %3443 = vmatpush.bf16.msra.mxu0 %v2566
  %3444 = vmatpush.bf16.msra.mxu0 %v2558
  %3445 = vmatpush.bf16.msra.mxu0 %v2550
  %3446 = vmatpush.bf16.msra.mxu0 %v2542
  %3447 = vmatpush.bf16.msra.mxu0 %v2534
  %3448 = vmatpush.bf16.msra.mxu0 %v2526
  %3449 = vmatpush.bf16.msra.mxu0 %v2518
  %3450 = vmatmul.bf16.gmra.mxu0 %v586
  %v3451 = vpop.f32.mrf.mxu0
  %v3452 = vadd.f32 %v3439, %v3451
  %v3453 = vpop.f32.mrf.mxu0
  %3454 = vdwg.mxu0
  %3455 = vmatpush.bf16.msra.mxu0 %v2638
  %3456 = vmatpush.bf16.msra.mxu0 %v2630
  %3457 = vmatpush.bf16.msra.mxu0 %v2622
  %3458 = vmatpush.bf16.msra.mxu0 %v2614
  %3459 = vmatpush.bf16.msra.mxu0 %v2606
  %3460 = vmatpush.bf16.msra.mxu0 %v2598
  %3461 = vmatpush.bf16.msra.mxu0 %v2590
  %3462 = vmatpush.bf16.msra.mxu0 %v2582
  %3463 = vmatmul.bf16.gmra.mxu0 %v587
  %v3464 = vpop.f32.mrf.mxu0
  %v3465 = vadd.f32 %v3452, %v3464
  %v3466 = vpop.f32.mrf.mxu0
  %3467 = vdwg.mxu0
  %3468 = vmatpush.bf16.msra.mxu0 %v2191
  %3469 = vmatpush.bf16.msra.mxu0 %v2183
  %3470 = vmatpush.bf16.msra.mxu0 %v2175
  %3471 = vmatpush.bf16.msra.mxu0 %v2167
  %3472 = vmatpush.bf16.msra.mxu0 %v2159
  %3473 = vmatpush.bf16.msra.mxu0 %v2151
  %3474 = vmatpush.bf16.msra.mxu0 %v2143
  %3475 = vmatpush.bf16.msra.mxu0 %v2135
  %3476 = vmatmul.bf16.gmra.mxu0 %v580
  %v3477 = vpop.f32.mrf.mxu0
  %v3478 = vadd.f32 %v555, %v3477
  %v3479 = vpop.f32.mrf.mxu0
  %3480 = vdwg.mxu0
  %3481 = vmatpush.bf16.msra.mxu0 %v2255
  %3482 = vmatpush.bf16.msra.mxu0 %v2247
  %3483 = vmatpush.bf16.msra.mxu0 %v2239
  %3484 = vmatpush.bf16.msra.mxu0 %v2231
  %3485 = vmatpush.bf16.msra.mxu0 %v2223
  %3486 = vmatpush.bf16.msra.mxu0 %v2215
  %3487 = vmatpush.bf16.msra.mxu0 %v2207
  %3488 = vmatpush.bf16.msra.mxu0 %v2199
  %3489 = vmatmul.bf16.gmra.mxu0 %v581
  %v3490 = vpop.f32.mrf.mxu0
  %v3491 = vadd.f32 %v3478, %v3490
  %v3492 = vpop.f32.mrf.mxu0
  %3493 = vdwg.mxu0
  %3494 = vmatpush.bf16.msra.mxu0 %v2319
  %3495 = vmatpush.bf16.msra.mxu0 %v2311
  %3496 = vmatpush.bf16.msra.mxu0 %v2303
  %3497 = vmatpush.bf16.msra.mxu0 %v2295
  %3498 = vmatpush.bf16.msra.mxu0 %v2287
  %3499 = vmatpush.bf16.msra.mxu0 %v2279
  %3500 = vmatpush.bf16.msra.mxu0 %v2271
  %3501 = vmatpush.bf16.msra.mxu0 %v2263
  %3502 = vmatmul.bf16.gmra.mxu0 %v582
  %v3503 = vpop.f32.mrf.mxu0
  %v3504 = vadd.f32 %v3491, %v3503
  %v3505 = vpop.f32.mrf.mxu0
  %3506 = vdwg.mxu0
  %3507 = vmatpush.bf16.msra.mxu0 %v2383
  %3508 = vmatpush.bf16.msra.mxu0 %v2375
  %3509 = vmatpush.bf16.msra.mxu0 %v2367
  %3510 = vmatpush.bf16.msra.mxu0 %v2359
  %3511 = vmatpush.bf16.msra.mxu0 %v2351
  %3512 = vmatpush.bf16.msra.mxu0 %v2343
  %3513 = vmatpush.bf16.msra.mxu0 %v2335
  %3514 = vmatpush.bf16.msra.mxu0 %v2327
  %3515 = vmatmul.bf16.gmra.mxu0 %v583
  %v3516 = vpop.f32.mrf.mxu0
  %v3517 = vadd.f32 %v3504, %v3516
  %v3518 = vpop.f32.mrf.mxu0
  %3519 = vdwg.mxu0
  %3520 = vmatpush.bf16.msra.mxu0 %v2447
  %3521 = vmatpush.bf16.msra.mxu0 %v2439
  %3522 = vmatpush.bf16.msra.mxu0 %v2431
  %3523 = vmatpush.bf16.msra.mxu0 %v2423
  %3524 = vmatpush.bf16.msra.mxu0 %v2415
  %3525 = vmatpush.bf16.msra.mxu0 %v2407
  %3526 = vmatpush.bf16.msra.mxu0 %v2399
  %3527 = vmatpush.bf16.msra.mxu0 %v2391
  %3528 = vmatmul.bf16.gmra.mxu0 %v584
  %v3529 = vpop.f32.mrf.mxu0
  %v3530 = vadd.f32 %v3517, %v3529
  %v3531 = vpop.f32.mrf.mxu0
  %3532 = vdwg.mxu0
  %3533 = vmatpush.bf16.msra.mxu0 %v2511
  %3534 = vmatpush.bf16.msra.mxu0 %v2503
  %3535 = vmatpush.bf16.msra.mxu0 %v2495
  %3536 = vmatpush.bf16.msra.mxu0 %v2487
  %3537 = vmatpush.bf16.msra.mxu0 %v2479
  %3538 = vmatpush.bf16.msra.mxu0 %v2471
  %3539 = vmatpush.bf16.msra.mxu0 %v2463
  %3540 = vmatpush.bf16.msra.mxu0 %v2455
  %3541 = vmatmul.bf16.gmra.mxu0 %v585
  %v3542 = vpop.f32.mrf.mxu0
  %v3543 = vadd.f32 %v3530, %v3542
  %v3544 = vpop.f32.mrf.mxu0
  %3545 = vdwg.mxu0
  %3546 = vmatpush.bf16.msra.mxu0 %v2575
  %3547 = vmatpush.bf16.msra.mxu0 %v2567
  %3548 = vmatpush.bf16.msra.mxu0 %v2559
  %3549 = vmatpush.bf16.msra.mxu0 %v2551
  %3550 = vmatpush.bf16.msra.mxu0 %v2543
  %3551 = vmatpush.bf16.msra.mxu0 %v2535
  %3552 = vmatpush.bf16.msra.mxu0 %v2527
  %3553 = vmatpush.bf16.msra.mxu0 %v2519
  %3554 = vmatmul.bf16.gmra.mxu0 %v586
  %v3555 = vpop.f32.mrf.mxu0
  %v3556 = vadd.f32 %v3543, %v3555
  %v3557 = vpop.f32.mrf.mxu0
  %3558 = vdwg.mxu0
  %3559 = vmatpush.bf16.msra.mxu0 %v2639
  %3560 = vmatpush.bf16.msra.mxu0 %v2631
  %3561 = vmatpush.bf16.msra.mxu0 %v2623
  %3562 = vmatpush.bf16.msra.mxu0 %v2615
  %3563 = vmatpush.bf16.msra.mxu0 %v2607
  %3564 = vmatpush.bf16.msra.mxu0 %v2599
  %3565 = vmatpush.bf16.msra.mxu0 %v2591
  %3566 = vmatpush.bf16.msra.mxu0 %v2583
  %3567 = vmatmul.bf16.gmra.mxu0 %v587
  %v3568 = vpop.f32.mrf.mxu0
  %v3569 = vadd.f32 %v3556, %v3568
  %v3570 = vpop.f32.mrf.mxu0
  %3571 = vdwg.mxu0
  %3572 = vmatpush.bf16.msra.mxu0 %v2192
  %3573 = vmatpush.bf16.msra.mxu0 %v2184
  %3574 = vmatpush.bf16.msra.mxu0 %v2176
  %3575 = vmatpush.bf16.msra.mxu0 %v2168
  %3576 = vmatpush.bf16.msra.mxu0 %v2160
  %3577 = vmatpush.bf16.msra.mxu0 %v2152
  %3578 = vmatpush.bf16.msra.mxu0 %v2144
  %3579 = vmatpush.bf16.msra.mxu0 %v2136
  %3580 = vmatmul.bf16.gmra.mxu0 %v580
  %v3581 = vpop.f32.mrf.mxu0
  %v3582 = vadd.f32 %v556, %v3581
  %v3583 = vpop.f32.mrf.mxu0
  %3584 = vdwg.mxu0
  %3585 = vmatpush.bf16.msra.mxu0 %v2256
  %3586 = vmatpush.bf16.msra.mxu0 %v2248
  %3587 = vmatpush.bf16.msra.mxu0 %v2240
  %3588 = vmatpush.bf16.msra.mxu0 %v2232
  %3589 = vmatpush.bf16.msra.mxu0 %v2224
  %3590 = vmatpush.bf16.msra.mxu0 %v2216
  %3591 = vmatpush.bf16.msra.mxu0 %v2208
  %3592 = vmatpush.bf16.msra.mxu0 %v2200
  %3593 = vmatmul.bf16.gmra.mxu0 %v581
  %v3594 = vpop.f32.mrf.mxu0
  %v3595 = vadd.f32 %v3582, %v3594
  %v3596 = vpop.f32.mrf.mxu0
  %3597 = vdwg.mxu0
  %3598 = vmatpush.bf16.msra.mxu0 %v2320
  %3599 = vmatpush.bf16.msra.mxu0 %v2312
  %3600 = vmatpush.bf16.msra.mxu0 %v2304
  %3601 = vmatpush.bf16.msra.mxu0 %v2296
  %3602 = vmatpush.bf16.msra.mxu0 %v2288
  %3603 = vmatpush.bf16.msra.mxu0 %v2280
  %3604 = vmatpush.bf16.msra.mxu0 %v2272
  %3605 = vmatpush.bf16.msra.mxu0 %v2264
  %3606 = vmatmul.bf16.gmra.mxu0 %v582
  %v3607 = vpop.f32.mrf.mxu0
  %v3608 = vadd.f32 %v3595, %v3607
  %v3609 = vpop.f32.mrf.mxu0
  %3610 = vdwg.mxu0
  %3611 = vmatpush.bf16.msra.mxu0 %v2384
  %3612 = vmatpush.bf16.msra.mxu0 %v2376
  %3613 = vmatpush.bf16.msra.mxu0 %v2368
  %3614 = vmatpush.bf16.msra.mxu0 %v2360
  %3615 = vmatpush.bf16.msra.mxu0 %v2352
  %3616 = vmatpush.bf16.msra.mxu0 %v2344
  %3617 = vmatpush.bf16.msra.mxu0 %v2336
  %3618 = vmatpush.bf16.msra.mxu0 %v2328
  %3619 = vmatmul.bf16.gmra.mxu0 %v583
  %v3620 = vpop.f32.mrf.mxu0
  %v3621 = vadd.f32 %v3608, %v3620
  %v3622 = vpop.f32.mrf.mxu0
  %3623 = vdwg.mxu0
  %3624 = vmatpush.bf16.msra.mxu0 %v2448
  %3625 = vmatpush.bf16.msra.mxu0 %v2440
  %3626 = vmatpush.bf16.msra.mxu0 %v2432
  %3627 = vmatpush.bf16.msra.mxu0 %v2424
  %3628 = vmatpush.bf16.msra.mxu0 %v2416
  %3629 = vmatpush.bf16.msra.mxu0 %v2408
  %3630 = vmatpush.bf16.msra.mxu0 %v2400
  %3631 = vmatpush.bf16.msra.mxu0 %v2392
  %3632 = vmatmul.bf16.gmra.mxu0 %v584
  %v3633 = vpop.f32.mrf.mxu0
  %v3634 = vadd.f32 %v3621, %v3633
  %v3635 = vpop.f32.mrf.mxu0
  %3636 = vdwg.mxu0
  %3637 = vmatpush.bf16.msra.mxu0 %v2512
  %3638 = vmatpush.bf16.msra.mxu0 %v2504
  %3639 = vmatpush.bf16.msra.mxu0 %v2496
  %3640 = vmatpush.bf16.msra.mxu0 %v2488
  %3641 = vmatpush.bf16.msra.mxu0 %v2480
  %3642 = vmatpush.bf16.msra.mxu0 %v2472
  %3643 = vmatpush.bf16.msra.mxu0 %v2464
  %3644 = vmatpush.bf16.msra.mxu0 %v2456
  %3645 = vmatmul.bf16.gmra.mxu0 %v585
  %v3646 = vpop.f32.mrf.mxu0
  %v3647 = vadd.f32 %v3634, %v3646
  %v3648 = vpop.f32.mrf.mxu0
  %3649 = vdwg.mxu0
  %3650 = vmatpush.bf16.msra.mxu0 %v2576
  %3651 = vmatpush.bf16.msra.mxu0 %v2568
  %3652 = vmatpush.bf16.msra.mxu0 %v2560
  %3653 = vmatpush.bf16.msra.mxu0 %v2552
  %3654 = vmatpush.bf16.msra.mxu0 %v2544
  %3655 = vmatpush.bf16.msra.mxu0 %v2536
  %3656 = vmatpush.bf16.msra.mxu0 %v2528
  %3657 = vmatpush.bf16.msra.mxu0 %v2520
  %3658 = vmatmul.bf16.gmra.mxu0 %v586
  %v3659 = vpop.f32.mrf.mxu0
  %v3660 = vadd.f32 %v3647, %v3659
  %v3661 = vpop.f32.mrf.mxu0
  %3662 = vdwg.mxu0
  %3663 = vmatpush.bf16.msra.mxu0 %v2640
  %3664 = vmatpush.bf16.msra.mxu0 %v2632
  %3665 = vmatpush.bf16.msra.mxu0 %v2624
  %3666 = vmatpush.bf16.msra.mxu0 %v2616
  %3667 = vmatpush.bf16.msra.mxu0 %v2608
  %3668 = vmatpush.bf16.msra.mxu0 %v2600
  %3669 = vmatpush.bf16.msra.mxu0 %v2592
  %3670 = vmatpush.bf16.msra.mxu0 %v2584
  %3671 = vmatmul.bf16.gmra.mxu0 %v587
  %v3672 = vpop.f32.mrf.mxu0
  %v3673 = vadd.f32 %v3660, %v3672
  %v3674 = vpop.f32.mrf.mxu0
  %3675 = vdwg.mxu0
  %3676 = vmatpush.bf16.msra.mxu0 %v2193
  %3677 = vmatpush.bf16.msra.mxu0 %v2185
  %3678 = vmatpush.bf16.msra.mxu0 %v2177
  %3679 = vmatpush.bf16.msra.mxu0 %v2169
  %3680 = vmatpush.bf16.msra.mxu0 %v2161
  %3681 = vmatpush.bf16.msra.mxu0 %v2153
  %3682 = vmatpush.bf16.msra.mxu0 %v2145
  %3683 = vmatpush.bf16.msra.mxu0 %v2137
  %3684 = vmatmul.bf16.gmra.mxu0 %v580
  %v3685 = vpop.f32.mrf.mxu0
  %v3686 = vadd.f32 %v557, %v3685
  %v3687 = vpop.f32.mrf.mxu0
  %3688 = vdwg.mxu0
  %3689 = vmatpush.bf16.msra.mxu0 %v2257
  %3690 = vmatpush.bf16.msra.mxu0 %v2249
  %3691 = vmatpush.bf16.msra.mxu0 %v2241
  %3692 = vmatpush.bf16.msra.mxu0 %v2233
  %3693 = vmatpush.bf16.msra.mxu0 %v2225
  %3694 = vmatpush.bf16.msra.mxu0 %v2217
  %3695 = vmatpush.bf16.msra.mxu0 %v2209
  %3696 = vmatpush.bf16.msra.mxu0 %v2201
  %3697 = vmatmul.bf16.gmra.mxu0 %v581
  %v3698 = vpop.f32.mrf.mxu0
  %v3699 = vadd.f32 %v3686, %v3698
  %v3700 = vpop.f32.mrf.mxu0
  %3701 = vdwg.mxu0
  %3702 = vmatpush.bf16.msra.mxu0 %v2321
  %3703 = vmatpush.bf16.msra.mxu0 %v2313
  %3704 = vmatpush.bf16.msra.mxu0 %v2305
  %3705 = vmatpush.bf16.msra.mxu0 %v2297
  %3706 = vmatpush.bf16.msra.mxu0 %v2289
  %3707 = vmatpush.bf16.msra.mxu0 %v2281
  %3708 = vmatpush.bf16.msra.mxu0 %v2273
  %3709 = vmatpush.bf16.msra.mxu0 %v2265
  %3710 = vmatmul.bf16.gmra.mxu0 %v582
  %v3711 = vpop.f32.mrf.mxu0
  %v3712 = vadd.f32 %v3699, %v3711
  %v3713 = vpop.f32.mrf.mxu0
  %3714 = vdwg.mxu0
  %3715 = vmatpush.bf16.msra.mxu0 %v2385
  %3716 = vmatpush.bf16.msra.mxu0 %v2377
  %3717 = vmatpush.bf16.msra.mxu0 %v2369
  %3718 = vmatpush.bf16.msra.mxu0 %v2361
  %3719 = vmatpush.bf16.msra.mxu0 %v2353
  %3720 = vmatpush.bf16.msra.mxu0 %v2345
  %3721 = vmatpush.bf16.msra.mxu0 %v2337
  %3722 = vmatpush.bf16.msra.mxu0 %v2329
  %3723 = vmatmul.bf16.gmra.mxu0 %v583
  %v3724 = vpop.f32.mrf.mxu0
  %v3725 = vadd.f32 %v3712, %v3724
  %v3726 = vpop.f32.mrf.mxu0
  %3727 = vdwg.mxu0
  %3728 = vmatpush.bf16.msra.mxu0 %v2449
  %3729 = vmatpush.bf16.msra.mxu0 %v2441
  %3730 = vmatpush.bf16.msra.mxu0 %v2433
  %3731 = vmatpush.bf16.msra.mxu0 %v2425
  %3732 = vmatpush.bf16.msra.mxu0 %v2417
  %3733 = vmatpush.bf16.msra.mxu0 %v2409
  %3734 = vmatpush.bf16.msra.mxu0 %v2401
  %3735 = vmatpush.bf16.msra.mxu0 %v2393
  %3736 = vmatmul.bf16.gmra.mxu0 %v584
  %v3737 = vpop.f32.mrf.mxu0
  %v3738 = vadd.f32 %v3725, %v3737
  %v3739 = vpop.f32.mrf.mxu0
  %3740 = vdwg.mxu0
  %3741 = vmatpush.bf16.msra.mxu0 %v2513
  %3742 = vmatpush.bf16.msra.mxu0 %v2505
  %3743 = vmatpush.bf16.msra.mxu0 %v2497
  %3744 = vmatpush.bf16.msra.mxu0 %v2489
  %3745 = vmatpush.bf16.msra.mxu0 %v2481
  %3746 = vmatpush.bf16.msra.mxu0 %v2473
  %3747 = vmatpush.bf16.msra.mxu0 %v2465
  %3748 = vmatpush.bf16.msra.mxu0 %v2457
  %3749 = vmatmul.bf16.gmra.mxu0 %v585
  %v3750 = vpop.f32.mrf.mxu0
  %v3751 = vadd.f32 %v3738, %v3750
  %v3752 = vpop.f32.mrf.mxu0
  %3753 = vdwg.mxu0
  %3754 = vmatpush.bf16.msra.mxu0 %v2577
  %3755 = vmatpush.bf16.msra.mxu0 %v2569
  %3756 = vmatpush.bf16.msra.mxu0 %v2561
  %3757 = vmatpush.bf16.msra.mxu0 %v2553
  %3758 = vmatpush.bf16.msra.mxu0 %v2545
  %3759 = vmatpush.bf16.msra.mxu0 %v2537
  %3760 = vmatpush.bf16.msra.mxu0 %v2529
  %3761 = vmatpush.bf16.msra.mxu0 %v2521
  %3762 = vmatmul.bf16.gmra.mxu0 %v586
  %v3763 = vpop.f32.mrf.mxu0
  %v3764 = vadd.f32 %v3751, %v3763
  %v3765 = vpop.f32.mrf.mxu0
  %3766 = vdwg.mxu0
  %3767 = vmatpush.bf16.msra.mxu0 %v2641
  %3768 = vmatpush.bf16.msra.mxu0 %v2633
  %3769 = vmatpush.bf16.msra.mxu0 %v2625
  %3770 = vmatpush.bf16.msra.mxu0 %v2617
  %3771 = vmatpush.bf16.msra.mxu0 %v2609
  %3772 = vmatpush.bf16.msra.mxu0 %v2601
  %3773 = vmatpush.bf16.msra.mxu0 %v2593
  %3774 = vmatpush.bf16.msra.mxu0 %v2585
  %3775 = vmatmul.bf16.gmra.mxu0 %v587
  %v3776 = vpop.f32.mrf.mxu0
  %v3777 = vadd.f32 %v3764, %v3776
  %v3778 = vpop.f32.mrf.mxu0
  %3779 = vdwg.mxu0
  %3780 = vmatpush.bf16.msra.mxu0 %v2194
  %3781 = vmatpush.bf16.msra.mxu0 %v2186
  %3782 = vmatpush.bf16.msra.mxu0 %v2178
  %3783 = vmatpush.bf16.msra.mxu0 %v2170
  %3784 = vmatpush.bf16.msra.mxu0 %v2162
  %3785 = vmatpush.bf16.msra.mxu0 %v2154
  %3786 = vmatpush.bf16.msra.mxu0 %v2146
  %3787 = vmatpush.bf16.msra.mxu0 %v2138
  %3788 = vmatmul.bf16.gmra.mxu0 %v580
  %v3789 = vpop.f32.mrf.mxu0
  %v3790 = vadd.f32 %v558, %v3789
  %v3791 = vpop.f32.mrf.mxu0
  %3792 = vdwg.mxu0
  %3793 = vmatpush.bf16.msra.mxu0 %v2258
  %3794 = vmatpush.bf16.msra.mxu0 %v2250
  %3795 = vmatpush.bf16.msra.mxu0 %v2242
  %3796 = vmatpush.bf16.msra.mxu0 %v2234
  %3797 = vmatpush.bf16.msra.mxu0 %v2226
  %3798 = vmatpush.bf16.msra.mxu0 %v2218
  %3799 = vmatpush.bf16.msra.mxu0 %v2210
  %3800 = vmatpush.bf16.msra.mxu0 %v2202
  %3801 = vmatmul.bf16.gmra.mxu0 %v581
  %v3802 = vpop.f32.mrf.mxu0
  %v3803 = vadd.f32 %v3790, %v3802
  %v3804 = vpop.f32.mrf.mxu0
  %3805 = vdwg.mxu0
  %3806 = vmatpush.bf16.msra.mxu0 %v2322
  %3807 = vmatpush.bf16.msra.mxu0 %v2314
  %3808 = vmatpush.bf16.msra.mxu0 %v2306
  %3809 = vmatpush.bf16.msra.mxu0 %v2298
  %3810 = vmatpush.bf16.msra.mxu0 %v2290
  %3811 = vmatpush.bf16.msra.mxu0 %v2282
  %3812 = vmatpush.bf16.msra.mxu0 %v2274
  %3813 = vmatpush.bf16.msra.mxu0 %v2266
  %3814 = vmatmul.bf16.gmra.mxu0 %v582
  %v3815 = vpop.f32.mrf.mxu0
  %v3816 = vadd.f32 %v3803, %v3815
  %v3817 = vpop.f32.mrf.mxu0
  %3818 = vdwg.mxu0
  %3819 = vmatpush.bf16.msra.mxu0 %v2386
  %3820 = vmatpush.bf16.msra.mxu0 %v2378
  %3821 = vmatpush.bf16.msra.mxu0 %v2370
  %3822 = vmatpush.bf16.msra.mxu0 %v2362
  %3823 = vmatpush.bf16.msra.mxu0 %v2354
  %3824 = vmatpush.bf16.msra.mxu0 %v2346
  %3825 = vmatpush.bf16.msra.mxu0 %v2338
  %3826 = vmatpush.bf16.msra.mxu0 %v2330
  %3827 = vmatmul.bf16.gmra.mxu0 %v583
  %v3828 = vpop.f32.mrf.mxu0
  %v3829 = vadd.f32 %v3816, %v3828
  %v3830 = vpop.f32.mrf.mxu0
  %3831 = vdwg.mxu0
  %3832 = vmatpush.bf16.msra.mxu0 %v2450
  %3833 = vmatpush.bf16.msra.mxu0 %v2442
  %3834 = vmatpush.bf16.msra.mxu0 %v2434
  %3835 = vmatpush.bf16.msra.mxu0 %v2426
  %3836 = vmatpush.bf16.msra.mxu0 %v2418
  %3837 = vmatpush.bf16.msra.mxu0 %v2410
  %3838 = vmatpush.bf16.msra.mxu0 %v2402
  %3839 = vmatpush.bf16.msra.mxu0 %v2394
  %3840 = vmatmul.bf16.gmra.mxu0 %v584
  %v3841 = vpop.f32.mrf.mxu0
  %v3842 = vadd.f32 %v3829, %v3841
  %v3843 = vpop.f32.mrf.mxu0
  %3844 = vdwg.mxu0
  %3845 = vmatpush.bf16.msra.mxu0 %v2514
  %3846 = vmatpush.bf16.msra.mxu0 %v2506
  %3847 = vmatpush.bf16.msra.mxu0 %v2498
  %3848 = vmatpush.bf16.msra.mxu0 %v2490
  %3849 = vmatpush.bf16.msra.mxu0 %v2482
  %3850 = vmatpush.bf16.msra.mxu0 %v2474
  %3851 = vmatpush.bf16.msra.mxu0 %v2466
  %3852 = vmatpush.bf16.msra.mxu0 %v2458
  %3853 = vmatmul.bf16.gmra.mxu0 %v585
  %v3854 = vpop.f32.mrf.mxu0
  %v3855 = vadd.f32 %v3842, %v3854
  %v3856 = vpop.f32.mrf.mxu0
  %3857 = vdwg.mxu0
  %3858 = vmatpush.bf16.msra.mxu0 %v2578
  %3859 = vmatpush.bf16.msra.mxu0 %v2570
  %3860 = vmatpush.bf16.msra.mxu0 %v2562
  %3861 = vmatpush.bf16.msra.mxu0 %v2554
  %3862 = vmatpush.bf16.msra.mxu0 %v2546
  %3863 = vmatpush.bf16.msra.mxu0 %v2538
  %3864 = vmatpush.bf16.msra.mxu0 %v2530
  %3865 = vmatpush.bf16.msra.mxu0 %v2522
  %3866 = vmatmul.bf16.gmra.mxu0 %v586
  %v3867 = vpop.f32.mrf.mxu0
  %v3868 = vadd.f32 %v3855, %v3867
  %v3869 = vpop.f32.mrf.mxu0
  %3870 = vdwg.mxu0
  %3871 = vmatpush.bf16.msra.mxu0 %v2642
  %3872 = vmatpush.bf16.msra.mxu0 %v2634
  %3873 = vmatpush.bf16.msra.mxu0 %v2626
  %3874 = vmatpush.bf16.msra.mxu0 %v2618
  %3875 = vmatpush.bf16.msra.mxu0 %v2610
  %3876 = vmatpush.bf16.msra.mxu0 %v2602
  %3877 = vmatpush.bf16.msra.mxu0 %v2594
  %3878 = vmatpush.bf16.msra.mxu0 %v2586
  %3879 = vmatmul.bf16.gmra.mxu0 %v587
  %v3880 = vpop.f32.mrf.mxu0
  %v3881 = vadd.f32 %v3868, %v3880
  %v3882 = vpop.f32.mrf.mxu0
  %3883 = vdwg.mxu0
  %3884 = vmatpush.bf16.msra.mxu0 %v2195
  %3885 = vmatpush.bf16.msra.mxu0 %v2187
  %3886 = vmatpush.bf16.msra.mxu0 %v2179
  %3887 = vmatpush.bf16.msra.mxu0 %v2171
  %3888 = vmatpush.bf16.msra.mxu0 %v2163
  %3889 = vmatpush.bf16.msra.mxu0 %v2155
  %3890 = vmatpush.bf16.msra.mxu0 %v2147
  %3891 = vmatpush.bf16.msra.mxu0 %v2139
  %3892 = vmatmul.bf16.gmra.mxu0 %v580
  %v3893 = vpop.f32.mrf.mxu0
  %v3894 = vadd.f32 %v559, %v3893
  %v3895 = vpop.f32.mrf.mxu0
  %3896 = vdwg.mxu0
  %3897 = vmatpush.bf16.msra.mxu0 %v2259
  %3898 = vmatpush.bf16.msra.mxu0 %v2251
  %3899 = vmatpush.bf16.msra.mxu0 %v2243
  %3900 = vmatpush.bf16.msra.mxu0 %v2235
  %3901 = vmatpush.bf16.msra.mxu0 %v2227
  %3902 = vmatpush.bf16.msra.mxu0 %v2219
  %3903 = vmatpush.bf16.msra.mxu0 %v2211
  %3904 = vmatpush.bf16.msra.mxu0 %v2203
  %3905 = vmatmul.bf16.gmra.mxu0 %v581
  %v3906 = vpop.f32.mrf.mxu0
  %v3907 = vadd.f32 %v3894, %v3906
  %v3908 = vpop.f32.mrf.mxu0
  %3909 = vdwg.mxu0
  %3910 = vmatpush.bf16.msra.mxu0 %v2323
  %3911 = vmatpush.bf16.msra.mxu0 %v2315
  %3912 = vmatpush.bf16.msra.mxu0 %v2307
  %3913 = vmatpush.bf16.msra.mxu0 %v2299
  %3914 = vmatpush.bf16.msra.mxu0 %v2291
  %3915 = vmatpush.bf16.msra.mxu0 %v2283
  %3916 = vmatpush.bf16.msra.mxu0 %v2275
  %3917 = vmatpush.bf16.msra.mxu0 %v2267
  %3918 = vmatmul.bf16.gmra.mxu0 %v582
  %v3919 = vpop.f32.mrf.mxu0
  %v3920 = vadd.f32 %v3907, %v3919
  %v3921 = vpop.f32.mrf.mxu0
  %3922 = vdwg.mxu0
  %3923 = vmatpush.bf16.msra.mxu0 %v2387
  %3924 = vmatpush.bf16.msra.mxu0 %v2379
  %3925 = vmatpush.bf16.msra.mxu0 %v2371
  %3926 = vmatpush.bf16.msra.mxu0 %v2363
  %3927 = vmatpush.bf16.msra.mxu0 %v2355
  %3928 = vmatpush.bf16.msra.mxu0 %v2347
  %3929 = vmatpush.bf16.msra.mxu0 %v2339
  %3930 = vmatpush.bf16.msra.mxu0 %v2331
  %3931 = vmatmul.bf16.gmra.mxu0 %v583
  %v3932 = vpop.f32.mrf.mxu0
  %v3933 = vadd.f32 %v3920, %v3932
  %v3934 = vpop.f32.mrf.mxu0
  %3935 = vdwg.mxu0
  %3936 = vmatpush.bf16.msra.mxu0 %v2451
  %3937 = vmatpush.bf16.msra.mxu0 %v2443
  %3938 = vmatpush.bf16.msra.mxu0 %v2435
  %3939 = vmatpush.bf16.msra.mxu0 %v2427
  %3940 = vmatpush.bf16.msra.mxu0 %v2419
  %3941 = vmatpush.bf16.msra.mxu0 %v2411
  %3942 = vmatpush.bf16.msra.mxu0 %v2403
  %3943 = vmatpush.bf16.msra.mxu0 %v2395
  %3944 = vmatmul.bf16.gmra.mxu0 %v584
  %v3945 = vpop.f32.mrf.mxu0
  %v3946 = vadd.f32 %v3933, %v3945
  %v3947 = vpop.f32.mrf.mxu0
  %3948 = vdwg.mxu0
  %3949 = vmatpush.bf16.msra.mxu0 %v2515
  %3950 = vmatpush.bf16.msra.mxu0 %v2507
  %3951 = vmatpush.bf16.msra.mxu0 %v2499
  %3952 = vmatpush.bf16.msra.mxu0 %v2491
  %3953 = vmatpush.bf16.msra.mxu0 %v2483
  %3954 = vmatpush.bf16.msra.mxu0 %v2475
  %3955 = vmatpush.bf16.msra.mxu0 %v2467
  %3956 = vmatpush.bf16.msra.mxu0 %v2459
  %3957 = vmatmul.bf16.gmra.mxu0 %v585
  %v3958 = vpop.f32.mrf.mxu0
  %v3959 = vadd.f32 %v3946, %v3958
  %v3960 = vpop.f32.mrf.mxu0
  %3961 = vdwg.mxu0
  %3962 = vmatpush.bf16.msra.mxu0 %v2579
  %3963 = vmatpush.bf16.msra.mxu0 %v2571
  %3964 = vmatpush.bf16.msra.mxu0 %v2563
  %3965 = vmatpush.bf16.msra.mxu0 %v2555
  %3966 = vmatpush.bf16.msra.mxu0 %v2547
  %3967 = vmatpush.bf16.msra.mxu0 %v2539
  %3968 = vmatpush.bf16.msra.mxu0 %v2531
  %3969 = vmatpush.bf16.msra.mxu0 %v2523
  %3970 = vmatmul.bf16.gmra.mxu0 %v586
  %v3971 = vpop.f32.mrf.mxu0
  %v3972 = vadd.f32 %v3959, %v3971
  %v3973 = vpop.f32.mrf.mxu0
  %3974 = vdwg.mxu0
  %3975 = vmatpush.bf16.msra.mxu0 %v2643
  %3976 = vmatpush.bf16.msra.mxu0 %v2635
  %3977 = vmatpush.bf16.msra.mxu0 %v2627
  %3978 = vmatpush.bf16.msra.mxu0 %v2619
  %3979 = vmatpush.bf16.msra.mxu0 %v2611
  %3980 = vmatpush.bf16.msra.mxu0 %v2603
  %3981 = vmatpush.bf16.msra.mxu0 %v2595
  %3982 = vmatpush.bf16.msra.mxu0 %v2587
  %3983 = vmatmul.bf16.gmra.mxu0 %v587
  %v3984 = vpop.f32.mrf.mxu0
  %v3985 = vadd.f32 %v3972, %v3984
  %v3986 = vpop.f32.mrf.mxu0
  %3987 = vdwg.mxu0
  %v3988 = vmax.f32 %v3257, 0.0
  %v3989 = vmax.f32 %v3361, 0.0
  %v3990 = vmax.f32 %v3465, 0.0
  %v3991 = vmax.f32 %v3569, 0.0
  %v3992 = vmax.f32 %v3673, 0.0
  %v3993 = vmax.f32 %v3777, 0.0
  %v3994 = vmax.f32 %v3881, 0.0
  %v3995 = vmax.f32 %v3985, 0.0
  %v3996 = vpack.c.bf16 %v3988, %v3988
  %v3997 = vpack.c.bf16 %v3989, %v3989
  %v3998 = vpack.c.bf16 %v3990, %v3990
  %v3999 = vpack.c.bf16 %v3991, %v3991
  %v4000 = vpack.c.bf16 %v3992, %v3992
  %v4001 = vpack.c.bf16 %v3993, %v3993
  %v4002 = vpack.c.bf16 %v3994, %v3994
  %v4003 = vpack.c.bf16 %v3995, %v3995
  %v4004 = vld [vmem:[%s3] sm:$0xff]
  %v4005 = vld [vmem:[%s3 + $0x8] sm:$0xff]
  %v4006 = vld [vmem:[%s3 + $0x10] sm:$0xff]
  %v4007 = vld [vmem:[%s3 + $0x18] sm:$0xff]
  %v4008 = vld [vmem:[%s3 + $0x20] sm:$0xff]
  %v4009 = vld [vmem:[%s3 + $0x28] sm:$0xff]
  %v4010 = vld [vmem:[%s3 + $0x30] sm:$0xff]
  %v4011 = vld [vmem:[%s3 + $0x38] sm:$0xff]
  %v4012 = vld [vmem:[%s3 + $0x40] sm:$0xff]
  %v4013 = vld [vmem:[%s3 + $0x48] sm:$0xff]
  %v4014 = vld [vmem:[%s3 + $0x50] sm:$0xff]
  %v4015 = vld [vmem:[%s3 + $0x58] sm:$0xff]
  %v4016 = vld [vmem:[%s3 + $0x60] sm:$0xff]
  %v4017 = vld [vmem:[%s3 + $0x68] sm:$0xff]
  %v4018 = vld [vmem:[%s3 + $0x70] sm:$0xff]
  %v4019 = vld [vmem:[%s3 + $0x78] sm:$0xff]
  %v4020 = vld [vmem:[%s3 + $0x80] sm:$0xff]
  %v4021 = vld [vmem:[%s3 + $0x88] sm:$0xff]
  %v4022 = vld [vmem:[%s3 + $0x90] sm:$0xff]
  %v4023 = vld [vmem:[%s3 + $0x98] sm:$0xff]
  %v4024 = vld [vmem:[%s3 + $0xa0] sm:$0xff]
  %v4025 = vld [vmem:[%s3 + $0xa8] sm:$0xff]
  %v4026 = vld [vmem:[%s3 + $0xb0] sm:$0xff]
  %v4027 = vld [vmem:[%s3 + $0xb8] sm:$0xff]
  %v4028 = vld [vmem:[%s3 + $0xc0] sm:$0xff]
  %v4029 = vld [vmem:[%s3 + $0xc8] sm:$0xff]
  %v4030 = vld [vmem:[%s3 + $0xd0] sm:$0xff]
  %v4031 = vld [vmem:[%s3 + $0xd8] sm:$0xff]
  %v4032 = vld [vmem:[%s3 + $0xe0] sm:$0xff]
  %v4033 = vld [vmem:[%s3 + $0xe8] sm:$0xff]
  %v4034 = vld [vmem:[%s3 + $0xf0] sm:$0xff]
  %v4035 = vld [vmem:[%s3 + $0xf8] sm:$0xff]
  %v4036 = vld [vmem:[%s3 + $0x100] sm:$0xff]
  %v4037 = vld [vmem:[%s3 + $0x108] sm:$0xff]
  %v4038 = vld [vmem:[%s3 + $0x110] sm:$0xff]
  %v4039 = vld [vmem:[%s3 + $0x118] sm:$0xff]
  %v4040 = vld [vmem:[%s3 + $0x120] sm:$0xff]
  %v4041 = vld [vmem:[%s3 + $0x128] sm:$0xff]
  %v4042 = vld [vmem:[%s3 + $0x130] sm:$0xff]
  %v4043 = vld [vmem:[%s3 + $0x138] sm:$0xff]
  %v4044 = vld [vmem:[%s3 + $0x140] sm:$0xff]
  %v4045 = vld [vmem:[%s3 + $0x148] sm:$0xff]
  %v4046 = vld [vmem:[%s3 + $0x150] sm:$0xff]
  %v4047 = vld [vmem:[%s3 + $0x158] sm:$0xff]
  %v4048 = vld [vmem:[%s3 + $0x160] sm:$0xff]
  %v4049 = vld [vmem:[%s3 + $0x168] sm:$0xff]
  %v4050 = vld [vmem:[%s3 + $0x170] sm:$0xff]
  %v4051 = vld [vmem:[%s3 + $0x178] sm:$0xff]
  %v4052 = vld [vmem:[%s3 + $0x180] sm:$0xff]
  %v4053 = vld [vmem:[%s3 + $0x188] sm:$0xff]
  %v4054 = vld [vmem:[%s3 + $0x190] sm:$0xff]
  %v4055 = vld [vmem:[%s3 + $0x198] sm:$0xff]
  %v4056 = vld [vmem:[%s3 + $0x1a0] sm:$0xff]
  %v4057 = vld [vmem:[%s3 + $0x1a8] sm:$0xff]
  %v4058 = vld [vmem:[%s3 + $0x1b0] sm:$0xff]
  %v4059 = vld [vmem:[%s3 + $0x1b8] sm:$0xff]
  %v4060 = vld [vmem:[%s3 + $0x1c0] sm:$0xff]
  %v4061 = vld [vmem:[%s3 + $0x1c8] sm:$0xff]
  %v4062 = vld [vmem:[%s3 + $0x1d0] sm:$0xff]
  %v4063 = vld [vmem:[%s3 + $0x1d8] sm:$0xff]
  %v4064 = vld [vmem:[%s3 + $0x1e0] sm:$0xff]
  %v4065 = vld [vmem:[%s3 + $0x1e8] sm:$0xff]
  %v4066 = vld [vmem:[%s3 + $0x1f0] sm:$0xff]
  %v4067 = vld [vmem:[%s3 + $0x1f8] sm:$0xff]
  %v4068 = vld [vmem:[%s3 + $0x200] sm:$0xff]
  %v4069 = vld [vmem:[%s3 + $0x208] sm:$0xff]
  %v4070 = vld [vmem:[%s3 + $0x210] sm:$0xff]
  %v4071 = vld [vmem:[%s3 + $0x218] sm:$0xff]
  %v4072 = vld [vmem:[%s3 + $0x220] sm:$0xff]
  %v4073 = vld [vmem:[%s3 + $0x228] sm:$0xff]
  %v4074 = vld [vmem:[%s3 + $0x230] sm:$0xff]
  %v4075 = vld [vmem:[%s3 + $0x238] sm:$0xff]
  %v4076 = vld [vmem:[%s3 + $0x240] sm:$0xff]
  %v4077 = vld [vmem:[%s3 + $0x248] sm:$0xff]
  %v4078 = vld [vmem:[%s3 + $0x250] sm:$0xff]
  %v4079 = vld [vmem:[%s3 + $0x258] sm:$0xff]
  %v4080 = vld [vmem:[%s3 + $0x260] sm:$0xff]
  %v4081 = vld [vmem:[%s3 + $0x268] sm:$0xff]
  %v4082 = vld [vmem:[%s3 + $0x270] sm:$0xff]
  %v4083 = vld [vmem:[%s3 + $0x278] sm:$0xff]
  %v4084 = vld [vmem:[%s3 + $0x280] sm:$0xff]
  %v4085 = vld [vmem:[%s3 + $0x288] sm:$0xff]
  %v4086 = vld [vmem:[%s3 + $0x290] sm:$0xff]
  %v4087 = vld [vmem:[%s3 + $0x298] sm:$0xff]
  %v4088 = vld [vmem:[%s3 + $0x2a0] sm:$0xff]
  %v4089 = vld [vmem:[%s3 + $0x2a8] sm:$0xff]
  %v4090 = vld [vmem:[%s3 + $0x2b0] sm:$0xff]
  %v4091 = vld [vmem:[%s3 + $0x2b8] sm:$0xff]
  %v4092 = vld [vmem:[%s3 + $0x2c0] sm:$0xff]
  %v4093 = vld [vmem:[%s3 + $0x2c8] sm:$0xff]
  %v4094 = vld [vmem:[%s3 + $0x2d0] sm:$0xff]
  %v4095 = vld [vmem:[%s3 + $0x2d8] sm:$0xff]
  %v4096 = vld [vmem:[%s3 + $0x2e0] sm:$0xff]
  %v4097 = vld [vmem:[%s3 + $0x2e8] sm:$0xff]
  %v4098 = vld [vmem:[%s3 + $0x2f0] sm:$0xff]
  %v4099 = vld [vmem:[%s3 + $0x2f8] sm:$0xff]
  %v4100 = vld [vmem:[%s3 + $0x300] sm:$0xff]
  %v4101 = vld [vmem:[%s3 + $0x308] sm:$0xff]
  %v4102 = vld [vmem:[%s3 + $0x310] sm:$0xff]
  %v4103 = vld [vmem:[%s3 + $0x318] sm:$0xff]
  %v4104 = vld [vmem:[%s3 + $0x320] sm:$0xff]
  %v4105 = vld [vmem:[%s3 + $0x328] sm:$0xff]
  %v4106 = vld [vmem:[%s3 + $0x330] sm:$0xff]
  %v4107 = vld [vmem:[%s3 + $0x338] sm:$0xff]
  %v4108 = vld [vmem:[%s3 + $0x340] sm:$0xff]
  %v4109 = vld [vmem:[%s3 + $0x348] sm:$0xff]
  %v4110 = vld [vmem:[%s3 + $0x350] sm:$0xff]
  %v4111 = vld [vmem:[%s3 + $0x358] sm:$0xff]
  %v4112 = vld [vmem:[%s3 + $0x360] sm:$0xff]
  %v4113 = vld [vmem:[%s3 + $0x368] sm:$0xff]
  %v4114 = vld [vmem:[%s3 + $0x370] sm:$0xff]
  %v4115 = vld [vmem:[%s3 + $0x378] sm:$0xff]
  %v4116 = vld [vmem:[%s3 + $0x380] sm:$0xff]
  %v4117 = vld [vmem:[%s3 + $0x388] sm:$0xff]
  %v4118 = vld [vmem:[%s3 + $0x390] sm:$0xff]
  %v4119 = vld [vmem:[%s3 + $0x398] sm:$0xff]
  %v4120 = vld [vmem:[%s3 + $0x3a0] sm:$0xff]
  %v4121 = vld [vmem:[%s3 + $0x3a8] sm:$0xff]
  %v4122 = vld [vmem:[%s3 + $0x3b0] sm:$0xff]
  %v4123 = vld [vmem:[%s3 + $0x3b8] sm:$0xff]
  %v4124 = vld [vmem:[%s3 + $0x3c0] sm:$0xff]
  %v4125 = vld [vmem:[%s3 + $0x3c8] sm:$0xff]
  %v4126 = vld [vmem:[%s3 + $0x3d0] sm:$0xff]
  %v4127 = vld [vmem:[%s3 + $0x3d8] sm:$0xff]
  %v4128 = vld [vmem:[%s3 + $0x3e0] sm:$0xff]
  %v4129 = vld [vmem:[%s3 + $0x3e8] sm:$0xff]
  %v4130 = vld [vmem:[%s3 + $0x3f0] sm:$0xff]
  %v4131 = vld [vmem:[%s3 + $0x3f8] sm:$0xff]
  %v4132 = vld [vmem:[%s3 + $0x400] sm:$0xff]
  %v4133 = vld [vmem:[%s3 + $0x408] sm:$0xff]
  %v4134 = vld [vmem:[%s3 + $0x410] sm:$0xff]
  %v4135 = vld [vmem:[%s3 + $0x418] sm:$0xff]
  %v4136 = vld [vmem:[%s3 + $0x420] sm:$0xff]
  %v4137 = vld [vmem:[%s3 + $0x428] sm:$0xff]
  %v4138 = vld [vmem:[%s3 + $0x430] sm:$0xff]
  %v4139 = vld [vmem:[%s3 + $0x438] sm:$0xff]
  %v4140 = vld [vmem:[%s3 + $0x440] sm:$0xff]
  %v4141 = vld [vmem:[%s3 + $0x448] sm:$0xff]
  %v4142 = vld [vmem:[%s3 + $0x450] sm:$0xff]
  %v4143 = vld [vmem:[%s3 + $0x458] sm:$0xff]
  %v4144 = vld [vmem:[%s3 + $0x460] sm:$0xff]
  %v4145 = vld [vmem:[%s3 + $0x468] sm:$0xff]
  %v4146 = vld [vmem:[%s3 + $0x470] sm:$0xff]
  %v4147 = vld [vmem:[%s3 + $0x478] sm:$0xff]
  %v4148 = vld [vmem:[%s3 + $0x480] sm:$0xff]
  %v4149 = vld [vmem:[%s3 + $0x488] sm:$0xff]
  %v4150 = vld [vmem:[%s3 + $0x490] sm:$0xff]
  %v4151 = vld [vmem:[%s3 + $0x498] sm:$0xff]
  %v4152 = vld [vmem:[%s3 + $0x4a0] sm:$0xff]
  %v4153 = vld [vmem:[%s3 + $0x4a8] sm:$0xff]
  %v4154 = vld [vmem:[%s3 + $0x4b0] sm:$0xff]
  %v4155 = vld [vmem:[%s3 + $0x4b8] sm:$0xff]
  %v4156 = vld [vmem:[%s3 + $0x4c0] sm:$0xff]
  %v4157 = vld [vmem:[%s3 + $0x4c8] sm:$0xff]
  %v4158 = vld [vmem:[%s3 + $0x4d0] sm:$0xff]
  %v4159 = vld [vmem:[%s3 + $0x4d8] sm:$0xff]
  %v4160 = vld [vmem:[%s3 + $0x4e0] sm:$0xff]
  %v4161 = vld [vmem:[%s3 + $0x4e8] sm:$0xff]
  %v4162 = vld [vmem:[%s3 + $0x4f0] sm:$0xff]
  %v4163 = vld [vmem:[%s3 + $0x4f8] sm:$0xff]
  %v4164 = vld [vmem:[%s3 + $0x500] sm:$0xff]
  %v4165 = vld [vmem:[%s3 + $0x508] sm:$0xff]
  %v4166 = vld [vmem:[%s3 + $0x510] sm:$0xff]
  %v4167 = vld [vmem:[%s3 + $0x518] sm:$0xff]
  %v4168 = vld [vmem:[%s3 + $0x520] sm:$0xff]
  %v4169 = vld [vmem:[%s3 + $0x528] sm:$0xff]
  %v4170 = vld [vmem:[%s3 + $0x530] sm:$0xff]
  %v4171 = vld [vmem:[%s3 + $0x538] sm:$0xff]
  %v4172 = vld [vmem:[%s3 + $0x540] sm:$0xff]
  %v4173 = vld [vmem:[%s3 + $0x548] sm:$0xff]
  %v4174 = vld [vmem:[%s3 + $0x550] sm:$0xff]
  %v4175 = vld [vmem:[%s3 + $0x558] sm:$0xff]
  %v4176 = vld [vmem:[%s3 + $0x560] sm:$0xff]
  %v4177 = vld [vmem:[%s3 + $0x568] sm:$0xff]
  %v4178 = vld [vmem:[%s3 + $0x570] sm:$0xff]
  %v4179 = vld [vmem:[%s3 + $0x578] sm:$0xff]
  %v4180 = vld [vmem:[%s3 + $0x580] sm:$0xff]
  %v4181 = vld [vmem:[%s3 + $0x588] sm:$0xff]
  %v4182 = vld [vmem:[%s3 + $0x590] sm:$0xff]
  %v4183 = vld [vmem:[%s3 + $0x598] sm:$0xff]
  %v4184 = vld [vmem:[%s3 + $0x5a0] sm:$0xff]
  %v4185 = vld [vmem:[%s3 + $0x5a8] sm:$0xff]
  %v4186 = vld [vmem:[%s3 + $0x5b0] sm:$0xff]
  %v4187 = vld [vmem:[%s3 + $0x5b8] sm:$0xff]
  %v4188 = vld [vmem:[%s3 + $0x5c0] sm:$0xff]
  %v4189 = vld [vmem:[%s3 + $0x5c8] sm:$0xff]
  %v4190 = vld [vmem:[%s3 + $0x5d0] sm:$0xff]
  %v4191 = vld [vmem:[%s3 + $0x5d8] sm:$0xff]
  %v4192 = vld [vmem:[%s3 + $0x5e0] sm:$0xff]
  %v4193 = vld [vmem:[%s3 + $0x5e8] sm:$0xff]
  %v4194 = vld [vmem:[%s3 + $0x5f0] sm:$0xff]
  %v4195 = vld [vmem:[%s3 + $0x5f8] sm:$0xff]
  %v4196 = vld [vmem:[%s3 + $0x600] sm:$0xff]
  %v4197 = vld [vmem:[%s3 + $0x608] sm:$0xff]
  %v4198 = vld [vmem:[%s3 + $0x610] sm:$0xff]
  %v4199 = vld [vmem:[%s3 + $0x618] sm:$0xff]
  %v4200 = vld [vmem:[%s3 + $0x620] sm:$0xff]
  %v4201 = vld [vmem:[%s3 + $0x628] sm:$0xff]
  %v4202 = vld [vmem:[%s3 + $0x630] sm:$0xff]
  %v4203 = vld [vmem:[%s3 + $0x638] sm:$0xff]
  %v4204 = vld [vmem:[%s3 + $0x640] sm:$0xff]
  %v4205 = vld [vmem:[%s3 + $0x648] sm:$0xff]
  %v4206 = vld [vmem:[%s3 + $0x650] sm:$0xff]
  %v4207 = vld [vmem:[%s3 + $0x658] sm:$0xff]
  %v4208 = vld [vmem:[%s3 + $0x660] sm:$0xff]
  %v4209 = vld [vmem:[%s3 + $0x668] sm:$0xff]
  %v4210 = vld [vmem:[%s3 + $0x670] sm:$0xff]
  %v4211 = vld [vmem:[%s3 + $0x678] sm:$0xff]
  %v4212 = vld [vmem:[%s3 + $0x680] sm:$0xff]
  %v4213 = vld [vmem:[%s3 + $0x688] sm:$0xff]
  %v4214 = vld [vmem:[%s3 + $0x690] sm:$0xff]
  %v4215 = vld [vmem:[%s3 + $0x698] sm:$0xff]
  %v4216 = vld [vmem:[%s3 + $0x6a0] sm:$0xff]
  %v4217 = vld [vmem:[%s3 + $0x6a8] sm:$0xff]
  %v4218 = vld [vmem:[%s3 + $0x6b0] sm:$0xff]
  %v4219 = vld [vmem:[%s3 + $0x6b8] sm:$0xff]
  %v4220 = vld [vmem:[%s3 + $0x6c0] sm:$0xff]
  %v4221 = vld [vmem:[%s3 + $0x6c8] sm:$0xff]
  %v4222 = vld [vmem:[%s3 + $0x6d0] sm:$0xff]
  %v4223 = vld [vmem:[%s3 + $0x6d8] sm:$0xff]
  %v4224 = vld [vmem:[%s3 + $0x6e0] sm:$0xff]
  %v4225 = vld [vmem:[%s3 + $0x6e8] sm:$0xff]
  %v4226 = vld [vmem:[%s3 + $0x6f0] sm:$0xff]
  %v4227 = vld [vmem:[%s3 + $0x6f8] sm:$0xff]
  %v4228 = vld [vmem:[%s3 + $0x700] sm:$0xff]
  %v4229 = vld [vmem:[%s3 + $0x708] sm:$0xff]
  %v4230 = vld [vmem:[%s3 + $0x710] sm:$0xff]
  %v4231 = vld [vmem:[%s3 + $0x718] sm:$0xff]
  %v4232 = vld [vmem:[%s3 + $0x720] sm:$0xff]
  %v4233 = vld [vmem:[%s3 + $0x728] sm:$0xff]
  %v4234 = vld [vmem:[%s3 + $0x730] sm:$0xff]
  %v4235 = vld [vmem:[%s3 + $0x738] sm:$0xff]
  %v4236 = vld [vmem:[%s3 + $0x740] sm:$0xff]
  %v4237 = vld [vmem:[%s3 + $0x748] sm:$0xff]
  %v4238 = vld [vmem:[%s3 + $0x750] sm:$0xff]
  %v4239 = vld [vmem:[%s3 + $0x758] sm:$0xff]
  %v4240 = vld [vmem:[%s3 + $0x760] sm:$0xff]
  %v4241 = vld [vmem:[%s3 + $0x768] sm:$0xff]
  %v4242 = vld [vmem:[%s3 + $0x770] sm:$0xff]
  %v4243 = vld [vmem:[%s3 + $0x778] sm:$0xff]
  %v4244 = vld [vmem:[%s3 + $0x780] sm:$0xff]
  %v4245 = vld [vmem:[%s3 + $0x788] sm:$0xff]
  %v4246 = vld [vmem:[%s3 + $0x790] sm:$0xff]
  %v4247 = vld [vmem:[%s3 + $0x798] sm:$0xff]
  %v4248 = vld [vmem:[%s3 + $0x7a0] sm:$0xff]
  %v4249 = vld [vmem:[%s3 + $0x7a8] sm:$0xff]
  %v4250 = vld [vmem:[%s3 + $0x7b0] sm:$0xff]
  %v4251 = vld [vmem:[%s3 + $0x7b8] sm:$0xff]
  %v4252 = vld [vmem:[%s3 + $0x7c0] sm:$0xff]
  %v4253 = vld [vmem:[%s3 + $0x7c8] sm:$0xff]
  %v4254 = vld [vmem:[%s3 + $0x7d0] sm:$0xff]
  %v4255 = vld [vmem:[%s3 + $0x7d8] sm:$0xff]
  %v4256 = vld [vmem:[%s3 + $0x7e0] sm:$0xff]
  %v4257 = vld [vmem:[%s3 + $0x7e8] sm:$0xff]
  %v4258 = vld [vmem:[%s3 + $0x7f0] sm:$0xff]
  %v4259 = vld [vmem:[%s3 + $0x7f8] sm:$0xff]
  %v4260 = vld [vmem:[%s4] sm:$0xf]
  %v4262 = vperm.slane %v4260, 0
  %v4263 = vperm.slane %v4260, 1
  %v4264 = vperm.slane %v4260, 2
  %v4265 = vperm.slane %v4260, 3
  %v4526 = vunpack.c.l.b16 %v4004
  %v4527 = vunpack.c.h.b16 %v4004
  %v4528 = vunpack.c.l.b16 %v4005
  %v4529 = vunpack.c.h.b16 %v4005
  %v4530 = vunpack.c.l.b16 %v4006
  %v4531 = vunpack.c.h.b16 %v4006
  %v4532 = vunpack.c.l.b16 %v4007
  %v4533 = vunpack.c.h.b16 %v4007
  %v4534 = vunpack.c.l.b16 %v4008
  %v4535 = vunpack.c.h.b16 %v4008
  %v4536 = vunpack.c.l.b16 %v4009
  %v4537 = vunpack.c.h.b16 %v4009
  %v4538 = vunpack.c.l.b16 %v4010
  %v4539 = vunpack.c.h.b16 %v4010
  %v4540 = vunpack.c.l.b16 %v4011
  %v4541 = vunpack.c.h.b16 %v4011
  %v4542 = vunpack.c.l.b16 %v4012
  %v4543 = vunpack.c.h.b16 %v4012
  %v4544 = vunpack.c.l.b16 %v4013
  %v4545 = vunpack.c.h.b16 %v4013
  %v4546 = vunpack.c.l.b16 %v4014
  %v4547 = vunpack.c.h.b16 %v4014
  %v4548 = vunpack.c.l.b16 %v4015
  %v4549 = vunpack.c.h.b16 %v4015
  %v4550 = vunpack.c.l.b16 %v4016
  %v4551 = vunpack.c.h.b16 %v4016
  %v4552 = vunpack.c.l.b16 %v4017
  %v4553 = vunpack.c.h.b16 %v4017
  %v4554 = vunpack.c.l.b16 %v4018
  %v4555 = vunpack.c.h.b16 %v4018
  %v4556 = vunpack.c.l.b16 %v4019
  %v4557 = vunpack.c.h.b16 %v4019
  %v4558 = vunpack.c.l.b16 %v4020
  %v4559 = vunpack.c.h.b16 %v4020
  %v4560 = vunpack.c.l.b16 %v4021
  %v4561 = vunpack.c.h.b16 %v4021
  %v4562 = vunpack.c.l.b16 %v4022
  %v4563 = vunpack.c.h.b16 %v4022
  %v4564 = vunpack.c.l.b16 %v4023
  %v4565 = vunpack.c.h.b16 %v4023
  %v4566 = vunpack.c.l.b16 %v4024
  %v4567 = vunpack.c.h.b16 %v4024
  %v4568 = vunpack.c.l.b16 %v4025
  %v4569 = vunpack.c.h.b16 %v4025
  %v4570 = vunpack.c.l.b16 %v4026
  %v4571 = vunpack.c.h.b16 %v4026
  %v4572 = vunpack.c.l.b16 %v4027
  %v4573 = vunpack.c.h.b16 %v4027
  %v4574 = vunpack.c.l.b16 %v4028
  %v4575 = vunpack.c.h.b16 %v4028
  %v4576 = vunpack.c.l.b16 %v4029
  %v4577 = vunpack.c.h.b16 %v4029
  %v4578 = vunpack.c.l.b16 %v4030
  %v4579 = vunpack.c.h.b16 %v4030
  %v4580 = vunpack.c.l.b16 %v4031
  %v4581 = vunpack.c.h.b16 %v4031
  %v4582 = vunpack.c.l.b16 %v4032
  %v4583 = vunpack.c.h.b16 %v4032
  %v4584 = vunpack.c.l.b16 %v4033
  %v4585 = vunpack.c.h.b16 %v4033
  %v4586 = vunpack.c.l.b16 %v4034
  %v4587 = vunpack.c.h.b16 %v4034
  %v4588 = vunpack.c.l.b16 %v4035
  %v4589 = vunpack.c.h.b16 %v4035
  %v4590 = vunpack.c.l.b16 %v4036
  %v4591 = vunpack.c.h.b16 %v4036
  %v4592 = vunpack.c.l.b16 %v4037
  %v4593 = vunpack.c.h.b16 %v4037
  %v4594 = vunpack.c.l.b16 %v4038
  %v4595 = vunpack.c.h.b16 %v4038
  %v4596 = vunpack.c.l.b16 %v4039
  %v4597 = vunpack.c.h.b16 %v4039
  %v4598 = vunpack.c.l.b16 %v4040
  %v4599 = vunpack.c.h.b16 %v4040
  %v4600 = vunpack.c.l.b16 %v4041
  %v4601 = vunpack.c.h.b16 %v4041
  %v4602 = vunpack.c.l.b16 %v4042
  %v4603 = vunpack.c.h.b16 %v4042
  %v4604 = vunpack.c.l.b16 %v4043
  %v4605 = vunpack.c.h.b16 %v4043
  %v4606 = vunpack.c.l.b16 %v4044
  %v4607 = vunpack.c.h.b16 %v4044
  %v4608 = vunpack.c.l.b16 %v4045
  %v4609 = vunpack.c.h.b16 %v4045
  %v4610 = vunpack.c.l.b16 %v4046
  %v4611 = vunpack.c.h.b16 %v4046
  %v4612 = vunpack.c.l.b16 %v4047
  %v4613 = vunpack.c.h.b16 %v4047
  %v4614 = vunpack.c.l.b16 %v4048
  %v4615 = vunpack.c.h.b16 %v4048
  %v4616 = vunpack.c.l.b16 %v4049
  %v4617 = vunpack.c.h.b16 %v4049
  %v4618 = vunpack.c.l.b16 %v4050
  %v4619 = vunpack.c.h.b16 %v4050
  %v4620 = vunpack.c.l.b16 %v4051
  %v4621 = vunpack.c.h.b16 %v4051
  %v4622 = vunpack.c.l.b16 %v4052
  %v4623 = vunpack.c.h.b16 %v4052
  %v4624 = vunpack.c.l.b16 %v4053
  %v4625 = vunpack.c.h.b16 %v4053
  %v4626 = vunpack.c.l.b16 %v4054
  %v4627 = vunpack.c.h.b16 %v4054
  %v4628 = vunpack.c.l.b16 %v4055
  %v4629 = vunpack.c.h.b16 %v4055
  %v4630 = vunpack.c.l.b16 %v4056
  %v4631 = vunpack.c.h.b16 %v4056
  %v4632 = vunpack.c.l.b16 %v4057
  %v4633 = vunpack.c.h.b16 %v4057
  %v4634 = vunpack.c.l.b16 %v4058
  %v4635 = vunpack.c.h.b16 %v4058
  %v4636 = vunpack.c.l.b16 %v4059
  %v4637 = vunpack.c.h.b16 %v4059
  %v4638 = vunpack.c.l.b16 %v4060
  %v4639 = vunpack.c.h.b16 %v4060
  %v4640 = vunpack.c.l.b16 %v4061
  %v4641 = vunpack.c.h.b16 %v4061
  %v4642 = vunpack.c.l.b16 %v4062
  %v4643 = vunpack.c.h.b16 %v4062
  %v4644 = vunpack.c.l.b16 %v4063
  %v4645 = vunpack.c.h.b16 %v4063
  %v4646 = vunpack.c.l.b16 %v4064
  %v4647 = vunpack.c.h.b16 %v4064
  %v4648 = vunpack.c.l.b16 %v4065
  %v4649 = vunpack.c.h.b16 %v4065
  %v4650 = vunpack.c.l.b16 %v4066
  %v4651 = vunpack.c.h.b16 %v4066
  %v4652 = vunpack.c.l.b16 %v4067
  %v4653 = vunpack.c.h.b16 %v4067
  %v4654 = vunpack.c.l.b16 %v4068
  %v4655 = vunpack.c.h.b16 %v4068
  %v4656 = vunpack.c.l.b16 %v4069
  %v4657 = vunpack.c.h.b16 %v4069
  %v4658 = vunpack.c.l.b16 %v4070
  %v4659 = vunpack.c.h.b16 %v4070
  %v4660 = vunpack.c.l.b16 %v4071
  %v4661 = vunpack.c.h.b16 %v4071
  %v4662 = vunpack.c.l.b16 %v4072
  %v4663 = vunpack.c.h.b16 %v4072
  %v4664 = vunpack.c.l.b16 %v4073
  %v4665 = vunpack.c.h.b16 %v4073
  %v4666 = vunpack.c.l.b16 %v4074
  %v4667 = vunpack.c.h.b16 %v4074
  %v4668 = vunpack.c.l.b16 %v4075
  %v4669 = vunpack.c.h.b16 %v4075
  %v4670 = vunpack.c.l.b16 %v4076
  %v4671 = vunpack.c.h.b16 %v4076
  %v4672 = vunpack.c.l.b16 %v4077
  %v4673 = vunpack.c.h.b16 %v4077
  %v4674 = vunpack.c.l.b16 %v4078
  %v4675 = vunpack.c.h.b16 %v4078
  %v4676 = vunpack.c.l.b16 %v4079
  %v4677 = vunpack.c.h.b16 %v4079
  %v4678 = vunpack.c.l.b16 %v4080
  %v4679 = vunpack.c.h.b16 %v4080
  %v4680 = vunpack.c.l.b16 %v4081
  %v4681 = vunpack.c.h.b16 %v4081
  %v4682 = vunpack.c.l.b16 %v4082
  %v4683 = vunpack.c.h.b16 %v4082
  %v4684 = vunpack.c.l.b16 %v4083
  %v4685 = vunpack.c.h.b16 %v4083
  %v4686 = vunpack.c.l.b16 %v4084
  %v4687 = vunpack.c.h.b16 %v4084
  %v4688 = vunpack.c.l.b16 %v4085
  %v4689 = vunpack.c.h.b16 %v4085
  %v4690 = vunpack.c.l.b16 %v4086
  %v4691 = vunpack.c.h.b16 %v4086
  %v4692 = vunpack.c.l.b16 %v4087
  %v4693 = vunpack.c.h.b16 %v4087
  %v4694 = vunpack.c.l.b16 %v4088
  %v4695 = vunpack.c.h.b16 %v4088
  %v4696 = vunpack.c.l.b16 %v4089
  %v4697 = vunpack.c.h.b16 %v4089
  %v4698 = vunpack.c.l.b16 %v4090
  %v4699 = vunpack.c.h.b16 %v4090
  %v4700 = vunpack.c.l.b16 %v4091
  %v4701 = vunpack.c.h.b16 %v4091
  %v4702 = vunpack.c.l.b16 %v4092
  %v4703 = vunpack.c.h.b16 %v4092
  %v4704 = vunpack.c.l.b16 %v4093
  %v4705 = vunpack.c.h.b16 %v4093
  %v4706 = vunpack.c.l.b16 %v4094
  %v4707 = vunpack.c.h.b16 %v4094
  %v4708 = vunpack.c.l.b16 %v4095
  %v4709 = vunpack.c.h.b16 %v4095
  %v4710 = vunpack.c.l.b16 %v4096
  %v4711 = vunpack.c.h.b16 %v4096
  %v4712 = vunpack.c.l.b16 %v4097
  %v4713 = vunpack.c.h.b16 %v4097
  %v4714 = vunpack.c.l.b16 %v4098
  %v4715 = vunpack.c.h.b16 %v4098
  %v4716 = vunpack.c.l.b16 %v4099
  %v4717 = vunpack.c.h.b16 %v4099
  %v4718 = vunpack.c.l.b16 %v4100
  %v4719 = vunpack.c.h.b16 %v4100
  %v4720 = vunpack.c.l.b16 %v4101
  %v4721 = vunpack.c.h.b16 %v4101
  %v4722 = vunpack.c.l.b16 %v4102
  %v4723 = vunpack.c.h.b16 %v4102
  %v4724 = vunpack.c.l.b16 %v4103
  %v4725 = vunpack.c.h.b16 %v4103
  %v4726 = vunpack.c.l.b16 %v4104
  %v4727 = vunpack.c.h.b16 %v4104
  %v4728 = vunpack.c.l.b16 %v4105
  %v4729 = vunpack.c.h.b16 %v4105
  %v4730 = vunpack.c.l.b16 %v4106
  %v4731 = vunpack.c.h.b16 %v4106
  %v4732 = vunpack.c.l.b16 %v4107
  %v4733 = vunpack.c.h.b16 %v4107
  %v4734 = vunpack.c.l.b16 %v4108
  %v4735 = vunpack.c.h.b16 %v4108
  %v4736 = vunpack.c.l.b16 %v4109
  %v4737 = vunpack.c.h.b16 %v4109
  %v4738 = vunpack.c.l.b16 %v4110
  %v4739 = vunpack.c.h.b16 %v4110
  %v4740 = vunpack.c.l.b16 %v4111
  %v4741 = vunpack.c.h.b16 %v4111
  %v4742 = vunpack.c.l.b16 %v4112
  %v4743 = vunpack.c.h.b16 %v4112
  %v4744 = vunpack.c.l.b16 %v4113
  %v4745 = vunpack.c.h.b16 %v4113
  %v4746 = vunpack.c.l.b16 %v4114
  %v4747 = vunpack.c.h.b16 %v4114
  %v4748 = vunpack.c.l.b16 %v4115
  %v4749 = vunpack.c.h.b16 %v4115
  %v4750 = vunpack.c.l.b16 %v4116
  %v4751 = vunpack.c.h.b16 %v4116
  %v4752 = vunpack.c.l.b16 %v4117
  %v4753 = vunpack.c.h.b16 %v4117
  %v4754 = vunpack.c.l.b16 %v4118
  %v4755 = vunpack.c.h.b16 %v4118
  %v4756 = vunpack.c.l.b16 %v4119
  %v4757 = vunpack.c.h.b16 %v4119
  %v4758 = vunpack.c.l.b16 %v4120
  %v4759 = vunpack.c.h.b16 %v4120
  %v4760 = vunpack.c.l.b16 %v4121
  %v4761 = vunpack.c.h.b16 %v4121
  %v4762 = vunpack.c.l.b16 %v4122
  %v4763 = vunpack.c.h.b16 %v4122
  %v4764 = vunpack.c.l.b16 %v4123
  %v4765 = vunpack.c.h.b16 %v4123
  %v4766 = vunpack.c.l.b16 %v4124
  %v4767 = vunpack.c.h.b16 %v4124
  %v4768 = vunpack.c.l.b16 %v4125
  %v4769 = vunpack.c.h.b16 %v4125
  %v4770 = vunpack.c.l.b16 %v4126
  %v4771 = vunpack.c.h.b16 %v4126
  %v4772 = vunpack.c.l.b16 %v4127
  %v4773 = vunpack.c.h.b16 %v4127
  %v4774 = vunpack.c.l.b16 %v4128
  %v4775 = vunpack.c.h.b16 %v4128
  %v4776 = vunpack.c.l.b16 %v4129
  %v4777 = vunpack.c.h.b16 %v4129
  %v4778 = vunpack.c.l.b16 %v4130
  %v4779 = vunpack.c.h.b16 %v4130
  %v4780 = vunpack.c.l.b16 %v4131
  %v4781 = vunpack.c.h.b16 %v4131
  %v4782 = vunpack.c.l.b16 %v4132
  %v4783 = vunpack.c.h.b16 %v4132
  %v4784 = vunpack.c.l.b16 %v4133
  %v4785 = vunpack.c.h.b16 %v4133
  %v4786 = vunpack.c.l.b16 %v4134
  %v4787 = vunpack.c.h.b16 %v4134
  %v4788 = vunpack.c.l.b16 %v4135
  %v4789 = vunpack.c.h.b16 %v4135
  %v4790 = vunpack.c.l.b16 %v4136
  %v4791 = vunpack.c.h.b16 %v4136
  %v4792 = vunpack.c.l.b16 %v4137
  %v4793 = vunpack.c.h.b16 %v4137
  %v4794 = vunpack.c.l.b16 %v4138
  %v4795 = vunpack.c.h.b16 %v4138
  %v4796 = vunpack.c.l.b16 %v4139
  %v4797 = vunpack.c.h.b16 %v4139
  %v4798 = vunpack.c.l.b16 %v4140
  %v4799 = vunpack.c.h.b16 %v4140
  %v4800 = vunpack.c.l.b16 %v4141
  %v4801 = vunpack.c.h.b16 %v4141
  %v4802 = vunpack.c.l.b16 %v4142
  %v4803 = vunpack.c.h.b16 %v4142
  %v4804 = vunpack.c.l.b16 %v4143
  %v4805 = vunpack.c.h.b16 %v4143
  %v4806 = vunpack.c.l.b16 %v4144
  %v4807 = vunpack.c.h.b16 %v4144
  %v4808 = vunpack.c.l.b16 %v4145
  %v4809 = vunpack.c.h.b16 %v4145
  %v4810 = vunpack.c.l.b16 %v4146
  %v4811 = vunpack.c.h.b16 %v4146
  %v4812 = vunpack.c.l.b16 %v4147
  %v4813 = vunpack.c.h.b16 %v4147
  %v4814 = vunpack.c.l.b16 %v4148
  %v4815 = vunpack.c.h.b16 %v4148
  %v4816 = vunpack.c.l.b16 %v4149
  %v4817 = vunpack.c.h.b16 %v4149
  %v4818 = vunpack.c.l.b16 %v4150
  %v4819 = vunpack.c.h.b16 %v4150
  %v4820 = vunpack.c.l.b16 %v4151
  %v4821 = vunpack.c.h.b16 %v4151
  %v4822 = vunpack.c.l.b16 %v4152
  %v4823 = vunpack.c.h.b16 %v4152
  %v4824 = vunpack.c.l.b16 %v4153
  %v4825 = vunpack.c.h.b16 %v4153
  %v4826 = vunpack.c.l.b16 %v4154
  %v4827 = vunpack.c.h.b16 %v4154
  %v4828 = vunpack.c.l.b16 %v4155
  %v4829 = vunpack.c.h.b16 %v4155
  %v4830 = vunpack.c.l.b16 %v4156
  %v4831 = vunpack.c.h.b16 %v4156
  %v4832 = vunpack.c.l.b16 %v4157
  %v4833 = vunpack.c.h.b16 %v4157
  %v4834 = vunpack.c.l.b16 %v4158
  %v4835 = vunpack.c.h.b16 %v4158
  %v4836 = vunpack.c.l.b16 %v4159
  %v4837 = vunpack.c.h.b16 %v4159
  %v4838 = vunpack.c.l.b16 %v4160
  %v4839 = vunpack.c.h.b16 %v4160
  %v4840 = vunpack.c.l.b16 %v4161
  %v4841 = vunpack.c.h.b16 %v4161
  %v4842 = vunpack.c.l.b16 %v4162
  %v4843 = vunpack.c.h.b16 %v4162
  %v4844 = vunpack.c.l.b16 %v4163
  %v4845 = vunpack.c.h.b16 %v4163
  %v4846 = vunpack.c.l.b16 %v4164
  %v4847 = vunpack.c.h.b16 %v4164
  %v4848 = vunpack.c.l.b16 %v4165
  %v4849 = vunpack.c.h.b16 %v4165
  %v4850 = vunpack.c.l.b16 %v4166
  %v4851 = vunpack.c.h.b16 %v4166
  %v4852 = vunpack.c.l.b16 %v4167
  %v4853 = vunpack.c.h.b16 %v4167
  %v4854 = vunpack.c.l.b16 %v4168
  %v4855 = vunpack.c.h.b16 %v4168
  %v4856 = vunpack.c.l.b16 %v4169
  %v4857 = vunpack.c.h.b16 %v4169
  %v4858 = vunpack.c.l.b16 %v4170
  %v4859 = vunpack.c.h.b16 %v4170
  %v4860 = vunpack.c.l.b16 %v4171
  %v4861 = vunpack.c.h.b16 %v4171
  %v4862 = vunpack.c.l.b16 %v4172
  %v4863 = vunpack.c.h.b16 %v4172
  %v4864 = vunpack.c.l.b16 %v4173
  %v4865 = vunpack.c.h.b16 %v4173
  %v4866 = vunpack.c.l.b16 %v4174
  %v4867 = vunpack.c.h.b16 %v4174
  %v4868 = vunpack.c.l.b16 %v4175
  %v4869 = vunpack.c.h.b16 %v4175
  %v4870 = vunpack.c.l.b16 %v4176
  %v4871 = vunpack.c.h.b16 %v4176
  %v4872 = vunpack.c.l.b16 %v4177
  %v4873 = vunpack.c.h.b16 %v4177
  %v4874 = vunpack.c.l.b16 %v4178
  %v4875 = vunpack.c.h.b16 %v4178
  %v4876 = vunpack.c.l.b16 %v4179
  %v4877 = vunpack.c.h.b16 %v4179
  %v4878 = vunpack.c.l.b16 %v4180
  %v4879 = vunpack.c.h.b16 %v4180
  %v4880 = vunpack.c.l.b16 %v4181
  %v4881 = vunpack.c.h.b16 %v4181
  %v4882 = vunpack.c.l.b16 %v4182
  %v4883 = vunpack.c.h.b16 %v4182
  %v4884 = vunpack.c.l.b16 %v4183
  %v4885 = vunpack.c.h.b16 %v4183
  %v4886 = vunpack.c.l.b16 %v4184
  %v4887 = vunpack.c.h.b16 %v4184
  %v4888 = vunpack.c.l.b16 %v4185
  %v4889 = vunpack.c.h.b16 %v4185
  %v4890 = vunpack.c.l.b16 %v4186
  %v4891 = vunpack.c.h.b16 %v4186
  %v4892 = vunpack.c.l.b16 %v4187
  %v4893 = vunpack.c.h.b16 %v4187
  %v4894 = vunpack.c.l.b16 %v4188
  %v4895 = vunpack.c.h.b16 %v4188
  %v4896 = vunpack.c.l.b16 %v4189
  %v4897 = vunpack.c.h.b16 %v4189
  %v4898 = vunpack.c.l.b16 %v4190
  %v4899 = vunpack.c.h.b16 %v4190
  %v4900 = vunpack.c.l.b16 %v4191
  %v4901 = vunpack.c.h.b16 %v4191
  %v4902 = vunpack.c.l.b16 %v4192
  %v4903 = vunpack.c.h.b16 %v4192
  %v4904 = vunpack.c.l.b16 %v4193
  %v4905 = vunpack.c.h.b16 %v4193
  %v4906 = vunpack.c.l.b16 %v4194
  %v4907 = vunpack.c.h.b16 %v4194
  %v4908 = vunpack.c.l.b16 %v4195
  %v4909 = vunpack.c.h.b16 %v4195
  %v4910 = vunpack.c.l.b16 %v4196
  %v4911 = vunpack.c.h.b16 %v4196
  %v4912 = vunpack.c.l.b16 %v4197
  %v4913 = vunpack.c.h.b16 %v4197
  %v4914 = vunpack.c.l.b16 %v4198
  %v4915 = vunpack.c.h.b16 %v4198
  %v4916 = vunpack.c.l.b16 %v4199
  %v4917 = vunpack.c.h.b16 %v4199
  %v4918 = vunpack.c.l.b16 %v4200
  %v4919 = vunpack.c.h.b16 %v4200
  %v4920 = vunpack.c.l.b16 %v4201
  %v4921 = vunpack.c.h.b16 %v4201
  %v4922 = vunpack.c.l.b16 %v4202
  %v4923 = vunpack.c.h.b16 %v4202
  %v4924 = vunpack.c.l.b16 %v4203
  %v4925 = vunpack.c.h.b16 %v4203
  %v4926 = vunpack.c.l.b16 %v4204
  %v4927 = vunpack.c.h.b16 %v4204
  %v4928 = vunpack.c.l.b16 %v4205
  %v4929 = vunpack.c.h.b16 %v4205
  %v4930 = vunpack.c.l.b16 %v4206
  %v4931 = vunpack.c.h.b16 %v4206
  %v4932 = vunpack.c.l.b16 %v4207
  %v4933 = vunpack.c.h.b16 %v4207
  %v4934 = vunpack.c.l.b16 %v4208
  %v4935 = vunpack.c.h.b16 %v4208
  %v4936 = vunpack.c.l.b16 %v4209
  %v4937 = vunpack.c.h.b16 %v4209
  %v4938 = vunpack.c.l.b16 %v4210
  %v4939 = vunpack.c.h.b16 %v4210
  %v4940 = vunpack.c.l.b16 %v4211
  %v4941 = vunpack.c.h.b16 %v4211
  %v4942 = vunpack.c.l.b16 %v4212
  %v4943 = vunpack.c.h.b16 %v4212
  %v4944 = vunpack.c.l.b16 %v4213
  %v4945 = vunpack.c.h.b16 %v4213
  %v4946 = vunpack.c.l.b16 %v4214
  %v4947 = vunpack.c.h.b16 %v4214
  %v4948 = vunpack.c.l.b16 %v4215
  %v4949 = vunpack.c.h.b16 %v4215
  %v4950 = vunpack.c.l.b16 %v4216
  %v4951 = vunpack.c.h.b16 %v4216
  %v4952 = vunpack.c.l.b16 %v4217
  %v4953 = vunpack.c.h.b16 %v4217
  %v4954 = vunpack.c.l.b16 %v4218
  %v4955 = vunpack.c.h.b16 %v4218
  %v4956 = vunpack.c.l.b16 %v4219
  %v4957 = vunpack.c.h.b16 %v4219
  %v4958 = vunpack.c.l.b16 %v4220
  %v4959 = vunpack.c.h.b16 %v4220
  %v4960 = vunpack.c.l.b16 %v4221
  %v4961 = vunpack.c.h.b16 %v4221
  %v4962 = vunpack.c.l.b16 %v4222
  %v4963 = vunpack.c.h.b16 %v4222
  %v4964 = vunpack.c.l.b16 %v4223
  %v4965 = vunpack.c.h.b16 %v4223
  %v4966 = vunpack.c.l.b16 %v4224
  %v4967 = vunpack.c.h.b16 %v4224
  %v4968 = vunpack.c.l.b16 %v4225
  %v4969 = vunpack.c.h.b16 %v4225
  %v4970 = vunpack.c.l.b16 %v4226
  %v4971 = vunpack.c.h.b16 %v4226
  %v4972 = vunpack.c.l.b16 %v4227
  %v4973 = vunpack.c.h.b16 %v4227
  %v4974 = vunpack.c.l.b16 %v4228
  %v4975 = vunpack.c.h.b16 %v4228
  %v4976 = vunpack.c.l.b16 %v4229
  %v4977 = vunpack.c.h.b16 %v4229
  %v4978 = vunpack.c.l.b16 %v4230
  %v4979 = vunpack.c.h.b16 %v4230
  %v4980 = vunpack.c.l.b16 %v4231
  %v4981 = vunpack.c.h.b16 %v4231
  %v4982 = vunpack.c.l.b16 %v4232
  %v4983 = vunpack.c.h.b16 %v4232
  %v4984 = vunpack.c.l.b16 %v4233
  %v4985 = vunpack.c.h.b16 %v4233
  %v4986 = vunpack.c.l.b16 %v4234
  %v4987 = vunpack.c.h.b16 %v4234
  %v4988 = vunpack.c.l.b16 %v4235
  %v4989 = vunpack.c.h.b16 %v4235
  %v4990 = vunpack.c.l.b16 %v4236
  %v4991 = vunpack.c.h.b16 %v4236
  %v4992 = vunpack.c.l.b16 %v4237
  %v4993 = vunpack.c.h.b16 %v4237
  %v4994 = vunpack.c.l.b16 %v4238
  %v4995 = vunpack.c.h.b16 %v4238
  %v4996 = vunpack.c.l.b16 %v4239
  %v4997 = vunpack.c.h.b16 %v4239
  %v4998 = vunpack.c.l.b16 %v4240
  %v4999 = vunpack.c.h.b16 %v4240
  %v5000 = vunpack.c.l.b16 %v4241
  %v5001 = vunpack.c.h.b16 %v4241
  %v5002 = vunpack.c.l.b16 %v4242
  %v5003 = vunpack.c.h.b16 %v4242
  %v5004 = vunpack.c.l.b16 %v4243
  %v5005 = vunpack.c.h.b16 %v4243
  %v5006 = vunpack.c.l.b16 %v4244
  %v5007 = vunpack.c.h.b16 %v4244
  %v5008 = vunpack.c.l.b16 %v4245
  %v5009 = vunpack.c.h.b16 %v4245
  %v5010 = vunpack.c.l.b16 %v4246
  %v5011 = vunpack.c.h.b16 %v4246
  %v5012 = vunpack.c.l.b16 %v4247
  %v5013 = vunpack.c.h.b16 %v4247
  %v5014 = vunpack.c.l.b16 %v4248
  %v5015 = vunpack.c.h.b16 %v4248
  %v5016 = vunpack.c.l.b16 %v4249
  %v5017 = vunpack.c.h.b16 %v4249
  %v5018 = vunpack.c.l.b16 %v4250
  %v5019 = vunpack.c.h.b16 %v4250
  %v5020 = vunpack.c.l.b16 %v4251
  %v5021 = vunpack.c.h.b16 %v4251
  %v5022 = vunpack.c.l.b16 %v4252
  %v5023 = vunpack.c.h.b16 %v4252
  %v5024 = vunpack.c.l.b16 %v4253
  %v5025 = vunpack.c.h.b16 %v4253
  %v5026 = vunpack.c.l.b16 %v4254
  %v5027 = vunpack.c.h.b16 %v4254
  %v5028 = vunpack.c.l.b16 %v4255
  %v5029 = vunpack.c.h.b16 %v4255
  %v5030 = vunpack.c.l.b16 %v4256
  %v5031 = vunpack.c.h.b16 %v4256
  %v5032 = vunpack.c.l.b16 %v4257
  %v5033 = vunpack.c.h.b16 %v4257
  %v5034 = vunpack.c.l.b16 %v4258
  %v5035 = vunpack.c.h.b16 %v4258
  %v5036 = vunpack.c.l.b16 %v4259
  %v5037 = vunpack.c.h.b16 %v4259
  %v5038 = vpack.c.b16 %v4530, %v4526
  %v5039 = vpack.c.b16 %v4531, %v4527
  %v5040 = vpack.c.b16 %v4532, %v4528
  %v5041 = vpack.c.b16 %v4533, %v4529
  %v5042 = vpack.c.b16 %v4538, %v4534
  %v5043 = vpack.c.b16 %v4539, %v4535
  %v5044 = vpack.c.b16 %v4540, %v4536
  %v5045 = vpack.c.b16 %v4541, %v4537
  %v5046 = vpack.c.b16 %v4546, %v4542
  %v5047 = vpack.c.b16 %v4547, %v4543
  %v5048 = vpack.c.b16 %v4548, %v4544
  %v5049 = vpack.c.b16 %v4549, %v4545
  %v5050 = vpack.c.b16 %v4554, %v4550
  %v5051 = vpack.c.b16 %v4555, %v4551
  %v5052 = vpack.c.b16 %v4556, %v4552
  %v5053 = vpack.c.b16 %v4557, %v4553
  %v5054 = vpack.c.b16 %v4562, %v4558
  %v5055 = vpack.c.b16 %v4563, %v4559
  %v5056 = vpack.c.b16 %v4564, %v4560
  %v5057 = vpack.c.b16 %v4565, %v4561
  %v5058 = vpack.c.b16 %v4570, %v4566
  %v5059 = vpack.c.b16 %v4571, %v4567
  %v5060 = vpack.c.b16 %v4572, %v4568
  %v5061 = vpack.c.b16 %v4573, %v4569
  %v5062 = vpack.c.b16 %v4578, %v4574
  %v5063 = vpack.c.b16 %v4579, %v4575
  %v5064 = vpack.c.b16 %v4580, %v4576
  %v5065 = vpack.c.b16 %v4581, %v4577
  %v5066 = vpack.c.b16 %v4586, %v4582
  %v5067 = vpack.c.b16 %v4587, %v4583
  %v5068 = vpack.c.b16 %v4588, %v4584
  %v5069 = vpack.c.b16 %v4589, %v4585
  %v5070 = vpack.c.b16 %v4594, %v4590
  %v5071 = vpack.c.b16 %v4595, %v4591
  %v5072 = vpack.c.b16 %v4596, %v4592
  %v5073 = vpack.c.b16 %v4597, %v4593
  %v5074 = vpack.c.b16 %v4602, %v4598
  %v5075 = vpack.c.b16 %v4603, %v4599
  %v5076 = vpack.c.b16 %v4604, %v4600
  %v5077 = vpack.c.b16 %v4605, %v4601
  %v5078 = vpack.c.b16 %v4610, %v4606
  %v5079 = vpack.c.b16 %v4611, %v4607
  %v5080 = vpack.c.b16 %v4612, %v4608
  %v5081 = vpack.c.b16 %v4613, %v4609
  %v5082 = vpack.c.b16 %v4618, %v4614
  %v5083 = vpack.c.b16 %v4619, %v4615
  %v5084 = vpack.c.b16 %v4620, %v4616
  %v5085 = vpack.c.b16 %v4621, %v4617
  %v5086 = vpack.c.b16 %v4626, %v4622
  %v5087 = vpack.c.b16 %v4627, %v4623
  %v5088 = vpack.c.b16 %v4628, %v4624
  %v5089 = vpack.c.b16 %v4629, %v4625
  %v5090 = vpack.c.b16 %v4634, %v4630
  %v5091 = vpack.c.b16 %v4635, %v4631
  %v5092 = vpack.c.b16 %v4636, %v4632
  %v5093 = vpack.c.b16 %v4637, %v4633
  %v5094 = vpack.c.b16 %v4642, %v4638
  %v5095 = vpack.c.b16 %v4643, %v4639
  %v5096 = vpack.c.b16 %v4644, %v4640
  %v5097 = vpack.c.b16 %v4645, %v4641
  %v5098 = vpack.c.b16 %v4650, %v4646
  %v5099 = vpack.c.b16 %v4651, %v4647
  %v5100 = vpack.c.b16 %v4652, %v4648
  %v5101 = vpack.c.b16 %v4653, %v4649
  %v5102 = vpack.c.b16 %v4658, %v4654
  %v5103 = vpack.c.b16 %v4659, %v4655
  %v5104 = vpack.c.b16 %v4660, %v4656
  %v5105 = vpack.c.b16 %v4661, %v4657
  %v5106 = vpack.c.b16 %v4666, %v4662
  %v5107 = vpack.c.b16 %v4667, %v4663
  %v5108 = vpack.c.b16 %v4668, %v4664
  %v5109 = vpack.c.b16 %v4669, %v4665
  %v5110 = vpack.c.b16 %v4674, %v4670
  %v5111 = vpack.c.b16 %v4675, %v4671
  %v5112 = vpack.c.b16 %v4676, %v4672
  %v5113 = vpack.c.b16 %v4677, %v4673
  %v5114 = vpack.c.b16 %v4682, %v4678
  %v5115 = vpack.c.b16 %v4683, %v4679
  %v5116 = vpack.c.b16 %v4684, %v4680
  %v5117 = vpack.c.b16 %v4685, %v4681
  %v5118 = vpack.c.b16 %v4690, %v4686
  %v5119 = vpack.c.b16 %v4691, %v4687
  %v5120 = vpack.c.b16 %v4692, %v4688
  %v5121 = vpack.c.b16 %v4693, %v4689
  %v5122 = vpack.c.b16 %v4698, %v4694
  %v5123 = vpack.c.b16 %v4699, %v4695
  %v5124 = vpack.c.b16 %v4700, %v4696
  %v5125 = vpack.c.b16 %v4701, %v4697
  %v5126 = vpack.c.b16 %v4706, %v4702
  %v5127 = vpack.c.b16 %v4707, %v4703
  %v5128 = vpack.c.b16 %v4708, %v4704
  %v5129 = vpack.c.b16 %v4709, %v4705
  %v5130 = vpack.c.b16 %v4714, %v4710
  %v5131 = vpack.c.b16 %v4715, %v4711
  %v5132 = vpack.c.b16 %v4716, %v4712
  %v5133 = vpack.c.b16 %v4717, %v4713
  %v5134 = vpack.c.b16 %v4722, %v4718
  %v5135 = vpack.c.b16 %v4723, %v4719
  %v5136 = vpack.c.b16 %v4724, %v4720
  %v5137 = vpack.c.b16 %v4725, %v4721
  %v5138 = vpack.c.b16 %v4730, %v4726
  %v5139 = vpack.c.b16 %v4731, %v4727
  %v5140 = vpack.c.b16 %v4732, %v4728
  %v5141 = vpack.c.b16 %v4733, %v4729
  %v5142 = vpack.c.b16 %v4738, %v4734
  %v5143 = vpack.c.b16 %v4739, %v4735
  %v5144 = vpack.c.b16 %v4740, %v4736
  %v5145 = vpack.c.b16 %v4741, %v4737
  %v5146 = vpack.c.b16 %v4746, %v4742
  %v5147 = vpack.c.b16 %v4747, %v4743
  %v5148 = vpack.c.b16 %v4748, %v4744
  %v5149 = vpack.c.b16 %v4749, %v4745
  %v5150 = vpack.c.b16 %v4754, %v4750
  %v5151 = vpack.c.b16 %v4755, %v4751
  %v5152 = vpack.c.b16 %v4756, %v4752
  %v5153 = vpack.c.b16 %v4757, %v4753
  %v5154 = vpack.c.b16 %v4762, %v4758
  %v5155 = vpack.c.b16 %v4763, %v4759
  %v5156 = vpack.c.b16 %v4764, %v4760
  %v5157 = vpack.c.b16 %v4765, %v4761
  %v5158 = vpack.c.b16 %v4770, %v4766
  %v5159 = vpack.c.b16 %v4771, %v4767
  %v5160 = vpack.c.b16 %v4772, %v4768
  %v5161 = vpack.c.b16 %v4773, %v4769
  %v5162 = vpack.c.b16 %v4778, %v4774
  %v5163 = vpack.c.b16 %v4779, %v4775
  %v5164 = vpack.c.b16 %v4780, %v4776
  %v5165 = vpack.c.b16 %v4781, %v4777
  %v5166 = vpack.c.b16 %v4786, %v4782
  %v5167 = vpack.c.b16 %v4787, %v4783
  %v5168 = vpack.c.b16 %v4788, %v4784
  %v5169 = vpack.c.b16 %v4789, %v4785
  %v5170 = vpack.c.b16 %v4794, %v4790
  %v5171 = vpack.c.b16 %v4795, %v4791
  %v5172 = vpack.c.b16 %v4796, %v4792
  %v5173 = vpack.c.b16 %v4797, %v4793
  %v5174 = vpack.c.b16 %v4802, %v4798
  %v5175 = vpack.c.b16 %v4803, %v4799
  %v5176 = vpack.c.b16 %v4804, %v4800
  %v5177 = vpack.c.b16 %v4805, %v4801
  %v5178 = vpack.c.b16 %v4810, %v4806
  %v5179 = vpack.c.b16 %v4811, %v4807
  %v5180 = vpack.c.b16 %v4812, %v4808
  %v5181 = vpack.c.b16 %v4813, %v4809
  %v5182 = vpack.c.b16 %v4818, %v4814
  %v5183 = vpack.c.b16 %v4819, %v4815
  %v5184 = vpack.c.b16 %v4820, %v4816
  %v5185 = vpack.c.b16 %v4821, %v4817
  %v5186 = vpack.c.b16 %v4826, %v4822
  %v5187 = vpack.c.b16 %v4827, %v4823
  %v5188 = vpack.c.b16 %v4828, %v4824
  %v5189 = vpack.c.b16 %v4829, %v4825
  %v5190 = vpack.c.b16 %v4834, %v4830
  %v5191 = vpack.c.b16 %v4835, %v4831
  %v5192 = vpack.c.b16 %v4836, %v4832
  %v5193 = vpack.c.b16 %v4837, %v4833
  %v5194 = vpack.c.b16 %v4842, %v4838
  %v5195 = vpack.c.b16 %v4843, %v4839
  %v5196 = vpack.c.b16 %v4844, %v4840
  %v5197 = vpack.c.b16 %v4845, %v4841
  %v5198 = vpack.c.b16 %v4850, %v4846
  %v5199 = vpack.c.b16 %v4851, %v4847
  %v5200 = vpack.c.b16 %v4852, %v4848
  %v5201 = vpack.c.b16 %v4853, %v4849
  %v5202 = vpack.c.b16 %v4858, %v4854
  %v5203 = vpack.c.b16 %v4859, %v4855
  %v5204 = vpack.c.b16 %v4860, %v4856
  %v5205 = vpack.c.b16 %v4861, %v4857
  %v5206 = vpack.c.b16 %v4866, %v4862
  %v5207 = vpack.c.b16 %v4867, %v4863
  %v5208 = vpack.c.b16 %v4868, %v4864
  %v5209 = vpack.c.b16 %v4869, %v4865
  %v5210 = vpack.c.b16 %v4874, %v4870
  %v5211 = vpack.c.b16 %v4875, %v4871
  %v5212 = vpack.c.b16 %v4876, %v4872
  %v5213 = vpack.c.b16 %v4877, %v4873
  %v5214 = vpack.c.b16 %v4882, %v4878
  %v5215 = vpack.c.b16 %v4883, %v4879
  %v5216 = vpack.c.b16 %v4884, %v4880
  %v5217 = vpack.c.b16 %v4885, %v4881
  %v5218 = vpack.c.b16 %v4890, %v4886
  %v5219 = vpack.c.b16 %v4891, %v4887
  %v5220 = vpack.c.b16 %v4892, %v4888
  %v5221 = vpack.c.b16 %v4893, %v4889
  %v5222 = vpack.c.b16 %v4898, %v4894
  %v5223 = vpack.c.b16 %v4899, %v4895
  %v5224 = vpack.c.b16 %v4900, %v4896
  %v5225 = vpack.c.b16 %v4901, %v4897
  %v5226 = vpack.c.b16 %v4906, %v4902
  %v5227 = vpack.c.b16 %v4907, %v4903
  %v5228 = vpack.c.b16 %v4908, %v4904
  %v5229 = vpack.c.b16 %v4909, %v4905
  %v5230 = vpack.c.b16 %v4914, %v4910
  %v5231 = vpack.c.b16 %v4915, %v4911
  %v5232 = vpack.c.b16 %v4916, %v4912
  %v5233 = vpack.c.b16 %v4917, %v4913
  %v5234 = vpack.c.b16 %v4922, %v4918
  %v5235 = vpack.c.b16 %v4923, %v4919
  %v5236 = vpack.c.b16 %v4924, %v4920
  %v5237 = vpack.c.b16 %v4925, %v4921
  %v5238 = vpack.c.b16 %v4930, %v4926
  %v5239 = vpack.c.b16 %v4931, %v4927
  %v5240 = vpack.c.b16 %v4932, %v4928
  %v5241 = vpack.c.b16 %v4933, %v4929
  %v5242 = vpack.c.b16 %v4938, %v4934
  %v5243 = vpack.c.b16 %v4939, %v4935
  %v5244 = vpack.c.b16 %v4940, %v4936
  %v5245 = vpack.c.b16 %v4941, %v4937
  %v5246 = vpack.c.b16 %v4946, %v4942
  %v5247 = vpack.c.b16 %v4947, %v4943
  %v5248 = vpack.c.b16 %v4948, %v4944
  %v5249 = vpack.c.b16 %v4949, %v4945
  %v5250 = vpack.c.b16 %v4954, %v4950
  %v5251 = vpack.c.b16 %v4955, %v4951
  %v5252 = vpack.c.b16 %v4956, %v4952
  %v5253 = vpack.c.b16 %v4957, %v4953
  %v5254 = vpack.c.b16 %v4962, %v4958
  %v5255 = vpack.c.b16 %v4963, %v4959
  %v5256 = vpack.c.b16 %v4964, %v4960
  %v5257 = vpack.c.b16 %v4965, %v4961
  %v5258 = vpack.c.b16 %v4970, %v4966
  %v5259 = vpack.c.b16 %v4971, %v4967
  %v5260 = vpack.c.b16 %v4972, %v4968
  %v5261 = vpack.c.b16 %v4973, %v4969
  %v5262 = vpack.c.b16 %v4978, %v4974
  %v5263 = vpack.c.b16 %v4979, %v4975
  %v5264 = vpack.c.b16 %v4980, %v4976
  %v5265 = vpack.c.b16 %v4981, %v4977
  %v5266 = vpack.c.b16 %v4986, %v4982
  %v5267 = vpack.c.b16 %v4987, %v4983
  %v5268 = vpack.c.b16 %v4988, %v4984
  %v5269 = vpack.c.b16 %v4989, %v4985
  %v5270 = vpack.c.b16 %v4994, %v4990
  %v5271 = vpack.c.b16 %v4995, %v4991
  %v5272 = vpack.c.b16 %v4996, %v4992
  %v5273 = vpack.c.b16 %v4997, %v4993
  %v5274 = vpack.c.b16 %v5002, %v4998
  %v5275 = vpack.c.b16 %v5003, %v4999
  %v5276 = vpack.c.b16 %v5004, %v5000
  %v5277 = vpack.c.b16 %v5005, %v5001
  %v5278 = vpack.c.b16 %v5010, %v5006
  %v5279 = vpack.c.b16 %v5011, %v5007
  %v5280 = vpack.c.b16 %v5012, %v5008
  %v5281 = vpack.c.b16 %v5013, %v5009
  %v5282 = vpack.c.b16 %v5018, %v5014
  %v5283 = vpack.c.b16 %v5019, %v5015
  %v5284 = vpack.c.b16 %v5020, %v5016
  %v5285 = vpack.c.b16 %v5021, %v5017
  %v5286 = vpack.c.b16 %v5026, %v5022
  %v5287 = vpack.c.b16 %v5027, %v5023
  %v5288 = vpack.c.b16 %v5028, %v5024
  %v5289 = vpack.c.b16 %v5029, %v5025
  %v5290 = vpack.c.b16 %v5034, %v5030
  %v5291 = vpack.c.b16 %v5035, %v5031
  %v5292 = vpack.c.b16 %v5036, %v5032
  %v5293 = vpack.c.b16 %v5037, %v5033
  %5550 = vmatpush.bf16.msra.mxu0 %v5066
  %5551 = vmatpush.bf16.msra.mxu0 %v5062
  %5552 = vmatpush.bf16.msra.mxu0 %v5058
  %5553 = vmatpush.bf16.msra.mxu0 %v5054
  %5554 = vmatpush.bf16.msra.mxu0 %v5050
  %5555 = vmatpush.bf16.msra.mxu0 %v5046
  %5556 = vmatpush.bf16.msra.mxu0 %v5042
  %5557 = vmatpush.bf16.msra.mxu0 %v5038
  %5558 = vmatmul.bf16.gmra.mxu0 %v3996
  %v5559 = vpop.f32.mrf.mxu0
  %v5560 = vadd.f32 %v4262, %v5559
  %v5561 = vpop.f32.mrf.mxu0
  %5562 = vdwg.mxu0
  %5563 = vmatpush.bf16.msra.mxu0 %v5098
  %5564 = vmatpush.bf16.msra.mxu0 %v5094
  %5565 = vmatpush.bf16.msra.mxu0 %v5090
  %5566 = vmatpush.bf16.msra.mxu0 %v5086
  %5567 = vmatpush.bf16.msra.mxu0 %v5082
  %5568 = vmatpush.bf16.msra.mxu0 %v5078
  %5569 = vmatpush.bf16.msra.mxu0 %v5074
  %5570 = vmatpush.bf16.msra.mxu0 %v5070
  %5571 = vmatmul.bf16.gmra.mxu0 %v3997
  %v5572 = vpop.f32.mrf.mxu0
  %v5573 = vadd.f32 %v5560, %v5572
  %v5574 = vpop.f32.mrf.mxu0
  %5575 = vdwg.mxu0
  %5576 = vmatpush.bf16.msra.mxu0 %v5130
  %5577 = vmatpush.bf16.msra.mxu0 %v5126
  %5578 = vmatpush.bf16.msra.mxu0 %v5122
  %5579 = vmatpush.bf16.msra.mxu0 %v5118
  %5580 = vmatpush.bf16.msra.mxu0 %v5114
  %5581 = vmatpush.bf16.msra.mxu0 %v5110
  %5582 = vmatpush.bf16.msra.mxu0 %v5106
  %5583 = vmatpush.bf16.msra.mxu0 %v5102
  %5584 = vmatmul.bf16.gmra.mxu0 %v3998
  %v5585 = vpop.f32.mrf.mxu0
  %v5586 = vadd.f32 %v5573, %v5585
  %v5587 = vpop.f32.mrf.mxu0
  %5588 = vdwg.mxu0
  %5589 = vmatpush.bf16.msra.mxu0 %v5162
  %5590 = vmatpush.bf16.msra.mxu0 %v5158
  %5591 = vmatpush.bf16.msra.mxu0 %v5154
  %5592 = vmatpush.bf16.msra.mxu0 %v5150
  %5593 = vmatpush.bf16.msra.mxu0 %v5146
  %5594 = vmatpush.bf16.msra.mxu0 %v5142
  %5595 = vmatpush.bf16.msra.mxu0 %v5138
  %5596 = vmatpush.bf16.msra.mxu0 %v5134
  %5597 = vmatmul.bf16.gmra.mxu0 %v3999
  %v5598 = vpop.f32.mrf.mxu0
  %v5599 = vadd.f32 %v5586, %v5598
  %v5600 = vpop.f32.mrf.mxu0
  %5601 = vdwg.mxu0
  %5602 = vmatpush.bf16.msra.mxu0 %v5194
  %5603 = vmatpush.bf16.msra.mxu0 %v5190
  %5604 = vmatpush.bf16.msra.mxu0 %v5186
  %5605 = vmatpush.bf16.msra.mxu0 %v5182
  %5606 = vmatpush.bf16.msra.mxu0 %v5178
  %5607 = vmatpush.bf16.msra.mxu0 %v5174
  %5608 = vmatpush.bf16.msra.mxu0 %v5170
  %5609 = vmatpush.bf16.msra.mxu0 %v5166
  %5610 = vmatmul.bf16.gmra.mxu0 %v4000
  %v5611 = vpop.f32.mrf.mxu0
  %v5612 = vadd.f32 %v5599, %v5611
  %v5613 = vpop.f32.mrf.mxu0
  %5614 = vdwg.mxu0
  %5615 = vmatpush.bf16.msra.mxu0 %v5226
  %5616 = vmatpush.bf16.msra.mxu0 %v5222
  %5617 = vmatpush.bf16.msra.mxu0 %v5218
  %5618 = vmatpush.bf16.msra.mxu0 %v5214
  %5619 = vmatpush.bf16.msra.mxu0 %v5210
  %5620 = vmatpush.bf16.msra.mxu0 %v5206
  %5621 = vmatpush.bf16.msra.mxu0 %v5202
  %5622 = vmatpush.bf16.msra.mxu0 %v5198
  %5623 = vmatmul.bf16.gmra.mxu0 %v4001
  %v5624 = vpop.f32.mrf.mxu0
  %v5625 = vadd.f32 %v5612, %v5624
  %v5626 = vpop.f32.mrf.mxu0
  %5627 = vdwg.mxu0
  %5628 = vmatpush.bf16.msra.mxu0 %v5258
  %5629 = vmatpush.bf16.msra.mxu0 %v5254
  %5630 = vmatpush.bf16.msra.mxu0 %v5250
  %5631 = vmatpush.bf16.msra.mxu0 %v5246
  %5632 = vmatpush.bf16.msra.mxu0 %v5242
  %5633 = vmatpush.bf16.msra.mxu0 %v5238
  %5634 = vmatpush.bf16.msra.mxu0 %v5234
  %5635 = vmatpush.bf16.msra.mxu0 %v5230
  %5636 = vmatmul.bf16.gmra.mxu0 %v4002
  %v5637 = vpop.f32.mrf.mxu0
  %v5638 = vadd.f32 %v5625, %v5637
  %v5639 = vpop.f32.mrf.mxu0
  %5640 = vdwg.mxu0
  %5641 = vmatpush.bf16.msra.mxu0 %v5290
  %5642 = vmatpush.bf16.msra.mxu0 %v5286
  %5643 = vmatpush.bf16.msra.mxu0 %v5282
  %5644 = vmatpush.bf16.msra.mxu0 %v5278
  %5645 = vmatpush.bf16.msra.mxu0 %v5274
  %5646 = vmatpush.bf16.msra.mxu0 %v5270
  %5647 = vmatpush.bf16.msra.mxu0 %v5266
  %5648 = vmatpush.bf16.msra.mxu0 %v5262
  %5649 = vmatmul.bf16.gmra.mxu0 %v4003
  %v5650 = vpop.f32.mrf.mxu0
  %v5651 = vadd.f32 %v5638, %v5650
  %v5652 = vpop.f32.mrf.mxu0
  %5653 = vdwg.mxu0
  %5654 = vmatpush.bf16.msra.mxu0 %v5067
  %5655 = vmatpush.bf16.msra.mxu0 %v5063
  %5656 = vmatpush.bf16.msra.mxu0 %v5059
  %5657 = vmatpush.bf16.msra.mxu0 %v5055
  %5658 = vmatpush.bf16.msra.mxu0 %v5051
  %5659 = vmatpush.bf16.msra.mxu0 %v5047
  %5660 = vmatpush.bf16.msra.mxu0 %v5043
  %5661 = vmatpush.bf16.msra.mxu0 %v5039
  %5662 = vmatmul.bf16.gmra.mxu0 %v3996
  %v5663 = vpop.f32.mrf.mxu0
  %v5664 = vadd.f32 %v4263, %v5663
  %v5665 = vpop.f32.mrf.mxu0
  %5666 = vdwg.mxu0
  %5667 = vmatpush.bf16.msra.mxu0 %v5099
  %5668 = vmatpush.bf16.msra.mxu0 %v5095
  %5669 = vmatpush.bf16.msra.mxu0 %v5091
  %5670 = vmatpush.bf16.msra.mxu0 %v5087
  %5671 = vmatpush.bf16.msra.mxu0 %v5083
  %5672 = vmatpush.bf16.msra.mxu0 %v5079
  %5673 = vmatpush.bf16.msra.mxu0 %v5075
  %5674 = vmatpush.bf16.msra.mxu0 %v5071
  %5675 = vmatmul.bf16.gmra.mxu0 %v3997
  %v5676 = vpop.f32.mrf.mxu0
  %v5677 = vadd.f32 %v5664, %v5676
  %v5678 = vpop.f32.mrf.mxu0
  %5679 = vdwg.mxu0
  %5680 = vmatpush.bf16.msra.mxu0 %v5131
  %5681 = vmatpush.bf16.msra.mxu0 %v5127
  %5682 = vmatpush.bf16.msra.mxu0 %v5123
  %5683 = vmatpush.bf16.msra.mxu0 %v5119
  %5684 = vmatpush.bf16.msra.mxu0 %v5115
  %5685 = vmatpush.bf16.msra.mxu0 %v5111
  %5686 = vmatpush.bf16.msra.mxu0 %v5107
  %5687 = vmatpush.bf16.msra.mxu0 %v5103
  %5688 = vmatmul.bf16.gmra.mxu0 %v3998
  %v5689 = vpop.f32.mrf.mxu0
  %v5690 = vadd.f32 %v5677, %v5689
  %v5691 = vpop.f32.mrf.mxu0
  %5692 = vdwg.mxu0
  %5693 = vmatpush.bf16.msra.mxu0 %v5163
  %5694 = vmatpush.bf16.msra.mxu0 %v5159
  %5695 = vmatpush.bf16.msra.mxu0 %v5155
  %5696 = vmatpush.bf16.msra.mxu0 %v5151
  %5697 = vmatpush.bf16.msra.mxu0 %v5147
  %5698 = vmatpush.bf16.msra.mxu0 %v5143
  %5699 = vmatpush.bf16.msra.mxu0 %v5139
  %5700 = vmatpush.bf16.msra.mxu0 %v5135
  %5701 = vmatmul.bf16.gmra.mxu0 %v3999
  %v5702 = vpop.f32.mrf.mxu0
  %v5703 = vadd.f32 %v5690, %v5702
  %v5704 = vpop.f32.mrf.mxu0
  %5705 = vdwg.mxu0
  %5706 = vmatpush.bf16.msra.mxu0 %v5195
  %5707 = vmatpush.bf16.msra.mxu0 %v5191
  %5708 = vmatpush.bf16.msra.mxu0 %v5187
  %5709 = vmatpush.bf16.msra.mxu0 %v5183
  %5710 = vmatpush.bf16.msra.mxu0 %v5179
  %5711 = vmatpush.bf16.msra.mxu0 %v5175
  %5712 = vmatpush.bf16.msra.mxu0 %v5171
  %5713 = vmatpush.bf16.msra.mxu0 %v5167
  %5714 = vmatmul.bf16.gmra.mxu0 %v4000
  %v5715 = vpop.f32.mrf.mxu0
  %v5716 = vadd.f32 %v5703, %v5715
  %v5717 = vpop.f32.mrf.mxu0
  %5718 = vdwg.mxu0
  %5719 = vmatpush.bf16.msra.mxu0 %v5227
  %5720 = vmatpush.bf16.msra.mxu0 %v5223
  %5721 = vmatpush.bf16.msra.mxu0 %v5219
  %5722 = vmatpush.bf16.msra.mxu0 %v5215
  %5723 = vmatpush.bf16.msra.mxu0 %v5211
  %5724 = vmatpush.bf16.msra.mxu0 %v5207
  %5725 = vmatpush.bf16.msra.mxu0 %v5203
  %5726 = vmatpush.bf16.msra.mxu0 %v5199
  %5727 = vmatmul.bf16.gmra.mxu0 %v4001
  %v5728 = vpop.f32.mrf.mxu0
  %v5729 = vadd.f32 %v5716, %v5728
  %v5730 = vpop.f32.mrf.mxu0
  %5731 = vdwg.mxu0
  %5732 = vmatpush.bf16.msra.mxu0 %v5259
  %5733 = vmatpush.bf16.msra.mxu0 %v5255
  %5734 = vmatpush.bf16.msra.mxu0 %v5251
  %5735 = vmatpush.bf16.msra.mxu0 %v5247
  %5736 = vmatpush.bf16.msra.mxu0 %v5243
  %5737 = vmatpush.bf16.msra.mxu0 %v5239
  %5738 = vmatpush.bf16.msra.mxu0 %v5235
  %5739 = vmatpush.bf16.msra.mxu0 %v5231
  %5740 = vmatmul.bf16.gmra.mxu0 %v4002
  %v5741 = vpop.f32.mrf.mxu0
  %v5742 = vadd.f32 %v5729, %v5741
  %v5743 = vpop.f32.mrf.mxu0
  %5744 = vdwg.mxu0
  %5745 = vmatpush.bf16.msra.mxu0 %v5291
  %5746 = vmatpush.bf16.msra.mxu0 %v5287
  %5747 = vmatpush.bf16.msra.mxu0 %v5283
  %5748 = vmatpush.bf16.msra.mxu0 %v5279
  %5749 = vmatpush.bf16.msra.mxu0 %v5275
  %5750 = vmatpush.bf16.msra.mxu0 %v5271
  %5751 = vmatpush.bf16.msra.mxu0 %v5267
  %5752 = vmatpush.bf16.msra.mxu0 %v5263
  %5753 = vmatmul.bf16.gmra.mxu0 %v4003
  %v5754 = vpop.f32.mrf.mxu0
  %v5755 = vadd.f32 %v5742, %v5754
  %v5756 = vpop.f32.mrf.mxu0
  %5757 = vdwg.mxu0
  %5758 = vmatpush.bf16.msra.mxu0 %v5068
  %5759 = vmatpush.bf16.msra.mxu0 %v5064
  %5760 = vmatpush.bf16.msra.mxu0 %v5060
  %5761 = vmatpush.bf16.msra.mxu0 %v5056
  %5762 = vmatpush.bf16.msra.mxu0 %v5052
  %5763 = vmatpush.bf16.msra.mxu0 %v5048
  %5764 = vmatpush.bf16.msra.mxu0 %v5044
  %5765 = vmatpush.bf16.msra.mxu0 %v5040
  %5766 = vmatmul.bf16.gmra.mxu0 %v3996
  %v5767 = vpop.f32.mrf.mxu0
  %v5768 = vadd.f32 %v4264, %v5767
  %v5769 = vpop.f32.mrf.mxu0
  %5770 = vdwg.mxu0
  %5771 = vmatpush.bf16.msra.mxu0 %v5100
  %5772 = vmatpush.bf16.msra.mxu0 %v5096
  %5773 = vmatpush.bf16.msra.mxu0 %v5092
  %5774 = vmatpush.bf16.msra.mxu0 %v5088
  %5775 = vmatpush.bf16.msra.mxu0 %v5084
  %5776 = vmatpush.bf16.msra.mxu0 %v5080
  %5777 = vmatpush.bf16.msra.mxu0 %v5076
  %5778 = vmatpush.bf16.msra.mxu0 %v5072
  %5779 = vmatmul.bf16.gmra.mxu0 %v3997
  %v5780 = vpop.f32.mrf.mxu0
  %v5781 = vadd.f32 %v5768, %v5780
  %v5782 = vpop.f32.mrf.mxu0
  %5783 = vdwg.mxu0
  %5784 = vmatpush.bf16.msra.mxu0 %v5132
  %5785 = vmatpush.bf16.msra.mxu0 %v5128
  %5786 = vmatpush.bf16.msra.mxu0 %v5124
  %5787 = vmatpush.bf16.msra.mxu0 %v5120
  %5788 = vmatpush.bf16.msra.mxu0 %v5116
  %5789 = vmatpush.bf16.msra.mxu0 %v5112
  %5790 = vmatpush.bf16.msra.mxu0 %v5108
  %5791 = vmatpush.bf16.msra.mxu0 %v5104
  %5792 = vmatmul.bf16.gmra.mxu0 %v3998
  %v5793 = vpop.f32.mrf.mxu0
  %v5794 = vadd.f32 %v5781, %v5793
  %v5795 = vpop.f32.mrf.mxu0
  %5796 = vdwg.mxu0
  %5797 = vmatpush.bf16.msra.mxu0 %v5164
  %5798 = vmatpush.bf16.msra.mxu0 %v5160
  %5799 = vmatpush.bf16.msra.mxu0 %v5156
  %5800 = vmatpush.bf16.msra.mxu0 %v5152
  %5801 = vmatpush.bf16.msra.mxu0 %v5148
  %5802 = vmatpush.bf16.msra.mxu0 %v5144
  %5803 = vmatpush.bf16.msra.mxu0 %v5140
  %5804 = vmatpush.bf16.msra.mxu0 %v5136
  %5805 = vmatmul.bf16.gmra.mxu0 %v3999
  %v5806 = vpop.f32.mrf.mxu0
  %v5807 = vadd.f32 %v5794, %v5806
  %v5808 = vpop.f32.mrf.mxu0
  %5809 = vdwg.mxu0
  %5810 = vmatpush.bf16.msra.mxu0 %v5196
  %5811 = vmatpush.bf16.msra.mxu0 %v5192
  %5812 = vmatpush.bf16.msra.mxu0 %v5188
  %5813 = vmatpush.bf16.msra.mxu0 %v5184
  %5814 = vmatpush.bf16.msra.mxu0 %v5180
  %5815 = vmatpush.bf16.msra.mxu0 %v5176
  %5816 = vmatpush.bf16.msra.mxu0 %v5172
  %5817 = vmatpush.bf16.msra.mxu0 %v5168
  %5818 = vmatmul.bf16.gmra.mxu0 %v4000
  %v5819 = vpop.f32.mrf.mxu0
  %v5820 = vadd.f32 %v5807, %v5819
  %v5821 = vpop.f32.mrf.mxu0
  %5822 = vdwg.mxu0
  %5823 = vmatpush.bf16.msra.mxu0 %v5228
  %5824 = vmatpush.bf16.msra.mxu0 %v5224
  %5825 = vmatpush.bf16.msra.mxu0 %v5220
  %5826 = vmatpush.bf16.msra.mxu0 %v5216
  %5827 = vmatpush.bf16.msra.mxu0 %v5212
  %5828 = vmatpush.bf16.msra.mxu0 %v5208
  %5829 = vmatpush.bf16.msra.mxu0 %v5204
  %5830 = vmatpush.bf16.msra.mxu0 %v5200
  %5831 = vmatmul.bf16.gmra.mxu0 %v4001
  %v5832 = vpop.f32.mrf.mxu0
  %v5833 = vadd.f32 %v5820, %v5832
  %v5834 = vpop.f32.mrf.mxu0
  %5835 = vdwg.mxu0
  %5836 = vmatpush.bf16.msra.mxu0 %v5260
  %5837 = vmatpush.bf16.msra.mxu0 %v5256
  %5838 = vmatpush.bf16.msra.mxu0 %v5252
  %5839 = vmatpush.bf16.msra.mxu0 %v5248
  %5840 = vmatpush.bf16.msra.mxu0 %v5244
  %5841 = vmatpush.bf16.msra.mxu0 %v5240
  %5842 = vmatpush.bf16.msra.mxu0 %v5236
  %5843 = vmatpush.bf16.msra.mxu0 %v5232
  %5844 = vmatmul.bf16.gmra.mxu0 %v4002
  %v5845 = vpop.f32.mrf.mxu0
  %v5846 = vadd.f32 %v5833, %v5845
  %v5847 = vpop.f32.mrf.mxu0
  %5848 = vdwg.mxu0
  %5849 = vmatpush.bf16.msra.mxu0 %v5292
  %5850 = vmatpush.bf16.msra.mxu0 %v5288
  %5851 = vmatpush.bf16.msra.mxu0 %v5284
  %5852 = vmatpush.bf16.msra.mxu0 %v5280
  %5853 = vmatpush.bf16.msra.mxu0 %v5276
  %5854 = vmatpush.bf16.msra.mxu0 %v5272
  %5855 = vmatpush.bf16.msra.mxu0 %v5268
  %5856 = vmatpush.bf16.msra.mxu0 %v5264
  %5857 = vmatmul.bf16.gmra.mxu0 %v4003
  %v5858 = vpop.f32.mrf.mxu0
  %v5859 = vadd.f32 %v5846, %v5858
  %v5860 = vpop.f32.mrf.mxu0
  %5861 = vdwg.mxu0
  %5862 = vmatpush.bf16.msra.mxu0 %v5069
  %5863 = vmatpush.bf16.msra.mxu0 %v5065
  %5864 = vmatpush.bf16.msra.mxu0 %v5061
  %5865 = vmatpush.bf16.msra.mxu0 %v5057
  %5866 = vmatpush.bf16.msra.mxu0 %v5053
  %5867 = vmatpush.bf16.msra.mxu0 %v5049
  %5868 = vmatpush.bf16.msra.mxu0 %v5045
  %5869 = vmatpush.bf16.msra.mxu0 %v5041
  %5870 = vmatmul.bf16.gmra.mxu0 %v3996
  %v5871 = vpop.f32.mrf.mxu0
  %v5872 = vadd.f32 %v4265, %v5871
  %v5873 = vpop.f32.mrf.mxu0
  %5874 = vdwg.mxu0
  %5875 = vmatpush.bf16.msra.mxu0 %v5101
  %5876 = vmatpush.bf16.msra.mxu0 %v5097
  %5877 = vmatpush.bf16.msra.mxu0 %v5093
  %5878 = vmatpush.bf16.msra.mxu0 %v5089
  %5879 = vmatpush.bf16.msra.mxu0 %v5085
  %5880 = vmatpush.bf16.msra.mxu0 %v5081
  %5881 = vmatpush.bf16.msra.mxu0 %v5077
  %5882 = vmatpush.bf16.msra.mxu0 %v5073
  %5883 = vmatmul.bf16.gmra.mxu0 %v3997
  %v5884 = vpop.f32.mrf.mxu0
  %v5885 = vadd.f32 %v5872, %v5884
  %v5886 = vpop.f32.mrf.mxu0
  %5887 = vdwg.mxu0
  %5888 = vmatpush.bf16.msra.mxu0 %v5133
  %5889 = vmatpush.bf16.msra.mxu0 %v5129
  %5890 = vmatpush.bf16.msra.mxu0 %v5125
  %5891 = vmatpush.bf16.msra.mxu0 %v5121
  %5892 = vmatpush.bf16.msra.mxu0 %v5117
  %5893 = vmatpush.bf16.msra.mxu0 %v5113
  %5894 = vmatpush.bf16.msra.mxu0 %v5109
  %5895 = vmatpush.bf16.msra.mxu0 %v5105
  %5896 = vmatmul.bf16.gmra.mxu0 %v3998
  %v5897 = vpop.f32.mrf.mxu0
  %v5898 = vadd.f32 %v5885, %v5897
  %v5899 = vpop.f32.mrf.mxu0
  %5900 = vdwg.mxu0
  %5901 = vmatpush.bf16.msra.mxu0 %v5165
  %5902 = vmatpush.bf16.msra.mxu0 %v5161
  %5903 = vmatpush.bf16.msra.mxu0 %v5157
  %5904 = vmatpush.bf16.msra.mxu0 %v5153
  %5905 = vmatpush.bf16.msra.mxu0 %v5149
  %5906 = vmatpush.bf16.msra.mxu0 %v5145
  %5907 = vmatpush.bf16.msra.mxu0 %v5141
  %5908 = vmatpush.bf16.msra.mxu0 %v5137
  %5909 = vmatmul.bf16.gmra.mxu0 %v3999
  %v5910 = vpop.f32.mrf.mxu0
  %v5911 = vadd.f32 %v5898, %v5910
  %v5912 = vpop.f32.mrf.mxu0
  %5913 = vdwg.mxu0
  %5914 = vmatpush.bf16.msra.mxu0 %v5197
  %5915 = vmatpush.bf16.msra.mxu0 %v5193
  %5916 = vmatpush.bf16.msra.mxu0 %v5189
  %5917 = vmatpush.bf16.msra.mxu0 %v5185
  %5918 = vmatpush.bf16.msra.mxu0 %v5181
  %5919 = vmatpush.bf16.msra.mxu0 %v5177
  %5920 = vmatpush.bf16.msra.mxu0 %v5173
  %5921 = vmatpush.bf16.msra.mxu0 %v5169
  %5922 = vmatmul.bf16.gmra.mxu0 %v4000
  %v5923 = vpop.f32.mrf.mxu0
  %v5924 = vadd.f32 %v5911, %v5923
  %v5925 = vpop.f32.mrf.mxu0
  %5926 = vdwg.mxu0
  %5927 = vmatpush.bf16.msra.mxu0 %v5229
  %5928 = vmatpush.bf16.msra.mxu0 %v5225
  %5929 = vmatpush.bf16.msra.mxu0 %v5221
  %5930 = vmatpush.bf16.msra.mxu0 %v5217
  %5931 = vmatpush.bf16.msra.mxu0 %v5213
  %5932 = vmatpush.bf16.msra.mxu0 %v5209
  %5933 = vmatpush.bf16.msra.mxu0 %v5205
  %5934 = vmatpush.bf16.msra.mxu0 %v5201
  %5935 = vmatmul.bf16.gmra.mxu0 %v4001
  %v5936 = vpop.f32.mrf.mxu0
  %v5937 = vadd.f32 %v5924, %v5936
  %v5938 = vpop.f32.mrf.mxu0
  %5939 = vdwg.mxu0
  %5940 = vmatpush.bf16.msra.mxu0 %v5261
  %5941 = vmatpush.bf16.msra.mxu0 %v5257
  %5942 = vmatpush.bf16.msra.mxu0 %v5253
  %5943 = vmatpush.bf16.msra.mxu0 %v5249
  %5944 = vmatpush.bf16.msra.mxu0 %v5245
  %5945 = vmatpush.bf16.msra.mxu0 %v5241
  %5946 = vmatpush.bf16.msra.mxu0 %v5237
  %5947 = vmatpush.bf16.msra.mxu0 %v5233
  %5948 = vmatmul.bf16.gmra.mxu0 %v4002
  %v5949 = vpop.f32.mrf.mxu0
  %v5950 = vadd.f32 %v5937, %v5949
  %v5951 = vpop.f32.mrf.mxu0
  %5952 = vdwg.mxu0
  %5953 = vmatpush.bf16.msra.mxu0 %v5293
  %5954 = vmatpush.bf16.msra.mxu0 %v5289
  %5955 = vmatpush.bf16.msra.mxu0 %v5285
  %5956 = vmatpush.bf16.msra.mxu0 %v5281
  %5957 = vmatpush.bf16.msra.mxu0 %v5277
  %5958 = vmatpush.bf16.msra.mxu0 %v5273
  %5959 = vmatpush.bf16.msra.mxu0 %v5269
  %5960 = vmatpush.bf16.msra.mxu0 %v5265
  %5961 = vmatmul.bf16.gmra.mxu0 %v4003
  %v5962 = vpop.f32.mrf.mxu0
  %v5963 = vadd.f32 %v5950, %v5962
  %v5964 = vpop.f32.mrf.mxu0
  %5965 = vdwg.mxu0
  %v5966 = vmax.f32 %v5651, 0.0
  %v5967 = vmax.f32 %v5755, 0.0
  %v5968 = vmax.f32 %v5859, 0.0
  %v5969 = vmax.f32 %v5963, 0.0
  %v5970 = vpack.c.bf16 %v5966, %v5966
  %v5971 = vpack.c.bf16 %v5967, %v5967
  %v5972 = vpack.c.bf16 %v5968, %v5968
  %v5973 = vpack.c.bf16 %v5969, %v5969
  %v5974 = vld [vmem:[%s5] sm:$0xff]
  %v5975 = vld [vmem:[%s5 + $0x8] sm:$0xff]
  %v5976 = vld [vmem:[%s5 + $0x10] sm:$0xff]
  %v5977 = vld [vmem:[%s5 + $0x18] sm:$0xff]
  %v5978 = vld [vmem:[%s5 + $0x20] sm:$0xff]
  %v5979 = vld [vmem:[%s5 + $0x28] sm:$0xff]
  %v5980 = vld [vmem:[%s5 + $0x30] sm:$0xff]
  %v5981 = vld [vmem:[%s5 + $0x38] sm:$0xff]
  %v5982 = vld [vmem:[%s5 + $0x40] sm:$0xff]
  %v5983 = vld [vmem:[%s5 + $0x48] sm:$0xff]
  %v5984 = vld [vmem:[%s5 + $0x50] sm:$0xff]
  %v5985 = vld [vmem:[%s5 + $0x58] sm:$0xff]
  %v5986 = vld [vmem:[%s5 + $0x60] sm:$0xff]
  %v5987 = vld [vmem:[%s5 + $0x68] sm:$0xff]
  %v5988 = vld [vmem:[%s5 + $0x70] sm:$0xff]
  %v5989 = vld [vmem:[%s5 + $0x78] sm:$0xff]
  %v5990 = vld [vmem:[%s5 + $0x80] sm:$0xff]
  %v5991 = vld [vmem:[%s5 + $0x88] sm:$0xff]
  %v5992 = vld [vmem:[%s5 + $0x90] sm:$0xff]
  %v5993 = vld [vmem:[%s5 + $0x98] sm:$0xff]
  %v5994 = vld [vmem:[%s5 + $0xa0] sm:$0xff]
  %v5995 = vld [vmem:[%s5 + $0xa8] sm:$0xff]
  %v5996 = vld [vmem:[%s5 + $0xb0] sm:$0xff]
  %v5997 = vld [vmem:[%s5 + $0xb8] sm:$0xff]
  %v5998 = vld [vmem:[%s5 + $0xc0] sm:$0xff]
  %v5999 = vld [vmem:[%s5 + $0xc8] sm:$0xff]
  %v6000 = vld [vmem:[%s5 + $0xd0] sm:$0xff]
  %v6001 = vld [vmem:[%s5 + $0xd8] sm:$0xff]
  %v6002 = vld [vmem:[%s5 + $0xe0] sm:$0xff]
  %v6003 = vld [vmem:[%s5 + $0xe8] sm:$0xff]
  %v6004 = vld [vmem:[%s5 + $0xf0] sm:$0xff]
  %v6005 = vld [vmem:[%s5 + $0xf8] sm:$0xff]
  %v6006 = vld [vmem:[%s5 + $0x100] sm:$0xff]
  %v6007 = vld [vmem:[%s5 + $0x108] sm:$0xff]
  %v6008 = vld [vmem:[%s5 + $0x110] sm:$0xff]
  %v6009 = vld [vmem:[%s5 + $0x118] sm:$0xff]
  %v6010 = vld [vmem:[%s5 + $0x120] sm:$0xff]
  %v6011 = vld [vmem:[%s5 + $0x128] sm:$0xff]
  %v6012 = vld [vmem:[%s5 + $0x130] sm:$0xff]
  %v6013 = vld [vmem:[%s5 + $0x138] sm:$0xff]
  %v6014 = vld [vmem:[%s5 + $0x140] sm:$0xff]
  %v6015 = vld [vmem:[%s5 + $0x148] sm:$0xff]
  %v6016 = vld [vmem:[%s5 + $0x150] sm:$0xff]
  %v6017 = vld [vmem:[%s5 + $0x158] sm:$0xff]
  %v6018 = vld [vmem:[%s5 + $0x160] sm:$0xff]
  %v6019 = vld [vmem:[%s5 + $0x168] sm:$0xff]
  %v6020 = vld [vmem:[%s5 + $0x170] sm:$0xff]
  %v6021 = vld [vmem:[%s5 + $0x178] sm:$0xff]
  %v6022 = vld [vmem:[%s5 + $0x180] sm:$0xff]
  %v6023 = vld [vmem:[%s5 + $0x188] sm:$0xff]
  %v6024 = vld [vmem:[%s5 + $0x190] sm:$0xff]
  %v6025 = vld [vmem:[%s5 + $0x198] sm:$0xff]
  %v6026 = vld [vmem:[%s5 + $0x1a0] sm:$0xff]
  %v6027 = vld [vmem:[%s5 + $0x1a8] sm:$0xff]
  %v6028 = vld [vmem:[%s5 + $0x1b0] sm:$0xff]
  %v6029 = vld [vmem:[%s5 + $0x1b8] sm:$0xff]
  %v6030 = vld [vmem:[%s5 + $0x1c0] sm:$0xff]
  %v6031 = vld [vmem:[%s5 + $0x1c8] sm:$0xff]
  %v6032 = vld [vmem:[%s5 + $0x1d0] sm:$0xff]
  %v6033 = vld [vmem:[%s5 + $0x1d8] sm:$0xff]
  %v6034 = vld [vmem:[%s5 + $0x1e0] sm:$0xff]
  %v6035 = vld [vmem:[%s5 + $0x1e8] sm:$0xff]
  %v6036 = vld [vmem:[%s5 + $0x1f0] sm:$0xff]
  %v6037 = vld [vmem:[%s5 + $0x1f8] sm:$0xff]
  %v6038 = vld [vmem:[%s6] sm:$0x3]
  %v6040 = vperm.slane %v6038, 0
  %v6041 = vperm.slane %v6038, 1
  %v6108 = vunpack.c.l.b16 %v5974
  %v6109 = vunpack.c.h.b16 %v5974
  %v6110 = vunpack.c.l.b16 %v5975
  %v6111 = vunpack.c.h.b16 %v5975
  %v6112 = vunpack.c.l.b16 %v5976
  %v6113 = vunpack.c.h.b16 %v5976
  %v6114 = vunpack.c.l.b16 %v5977
  %v6115 = vunpack.c.h.b16 %v5977
  %v6116 = vunpack.c.l.b16 %v5978
  %v6117 = vunpack.c.h.b16 %v5978
  %v6118 = vunpack.c.l.b16 %v5979
  %v6119 = vunpack.c.h.b16 %v5979
  %v6120 = vunpack.c.l.b16 %v5980
  %v6121 = vunpack.c.h.b16 %v5980
  %v6122 = vunpack.c.l.b16 %v5981
  %v6123 = vunpack.c.h.b16 %v5981
  %v6124 = vunpack.c.l.b16 %v5982
  %v6125 = vunpack.c.h.b16 %v5982
  %v6126 = vunpack.c.l.b16 %v5983
  %v6127 = vunpack.c.h.b16 %v5983
  %v6128 = vunpack.c.l.b16 %v5984
  %v6129 = vunpack.c.h.b16 %v5984
  %v6130 = vunpack.c.l.b16 %v5985
  %v6131 = vunpack.c.h.b16 %v5985
  %v6132 = vunpack.c.l.b16 %v5986
  %v6133 = vunpack.c.h.b16 %v5986
  %v6134 = vunpack.c.l.b16 %v5987
  %v6135 = vunpack.c.h.b16 %v5987
  %v6136 = vunpack.c.l.b16 %v5988
  %v6137 = vunpack.c.h.b16 %v5988
  %v6138 = vunpack.c.l.b16 %v5989
  %v6139 = vunpack.c.h.b16 %v5989
  %v6140 = vunpack.c.l.b16 %v5990
  %v6141 = vunpack.c.h.b16 %v5990
  %v6142 = vunpack.c.l.b16 %v5991
  %v6143 = vunpack.c.h.b16 %v5991
  %v6144 = vunpack.c.l.b16 %v5992
  %v6145 = vunpack.c.h.b16 %v5992
  %v6146 = vunpack.c.l.b16 %v5993
  %v6147 = vunpack.c.h.b16 %v5993
  %v6148 = vunpack.c.l.b16 %v5994
  %v6149 = vunpack.c.h.b16 %v5994
  %v6150 = vunpack.c.l.b16 %v5995
  %v6151 = vunpack.c.h.b16 %v5995
  %v6152 = vunpack.c.l.b16 %v5996
  %v6153 = vunpack.c.h.b16 %v5996
  %v6154 = vunpack.c.l.b16 %v5997
  %v6155 = vunpack.c.h.b16 %v5997
  %v6156 = vunpack.c.l.b16 %v5998
  %v6157 = vunpack.c.h.b16 %v5998
  %v6158 = vunpack.c.l.b16 %v5999
  %v6159 = vunpack.c.h.b16 %v5999
  %v6160 = vunpack.c.l.b16 %v6000
  %v6161 = vunpack.c.h.b16 %v6000
  %v6162 = vunpack.c.l.b16 %v6001
  %v6163 = vunpack.c.h.b16 %v6001
  %v6164 = vunpack.c.l.b16 %v6002
  %v6165 = vunpack.c.h.b16 %v6002
  %v6166 = vunpack.c.l.b16 %v6003
  %v6167 = vunpack.c.h.b16 %v6003
  %v6168 = vunpack.c.l.b16 %v6004
  %v6169 = vunpack.c.h.b16 %v6004
  %v6170 = vunpack.c.l.b16 %v6005
  %v6171 = vunpack.c.h.b16 %v6005
  %v6172 = vunpack.c.l.b16 %v6006
  %v6173 = vunpack.c.h.b16 %v6006
  %v6174 = vunpack.c.l.b16 %v6007
  %v6175 = vunpack.c.h.b16 %v6007
  %v6176 = vunpack.c.l.b16 %v6008
  %v6177 = vunpack.c.h.b16 %v6008
  %v6178 = vunpack.c.l.b16 %v6009
  %v6179 = vunpack.c.h.b16 %v6009
  %v6180 = vunpack.c.l.b16 %v6010
  %v6181 = vunpack.c.h.b16 %v6010
  %v6182 = vunpack.c.l.b16 %v6011
  %v6183 = vunpack.c.h.b16 %v6011
  %v6184 = vunpack.c.l.b16 %v6012
  %v6185 = vunpack.c.h.b16 %v6012
  %v6186 = vunpack.c.l.b16 %v6013
  %v6187 = vunpack.c.h.b16 %v6013
  %v6188 = vunpack.c.l.b16 %v6014
  %v6189 = vunpack.c.h.b16 %v6014
  %v6190 = vunpack.c.l.b16 %v6015
  %v6191 = vunpack.c.h.b16 %v6015
  %v6192 = vunpack.c.l.b16 %v6016
  %v6193 = vunpack.c.h.b16 %v6016
  %v6194 = vunpack.c.l.b16 %v6017
  %v6195 = vunpack.c.h.b16 %v6017
  %v6196 = vunpack.c.l.b16 %v6018
  %v6197 = vunpack.c.h.b16 %v6018
  %v6198 = vunpack.c.l.b16 %v6019
  %v6199 = vunpack.c.h.b16 %v6019
  %v6200 = vunpack.c.l.b16 %v6020
  %v6201 = vunpack.c.h.b16 %v6020
  %v6202 = vunpack.c.l.b16 %v6021
  %v6203 = vunpack.c.h.b16 %v6021
  %v6204 = vunpack.c.l.b16 %v6022
  %v6205 = vunpack.c.h.b16 %v6022
  %v6206 = vunpack.c.l.b16 %v6023
  %v6207 = vunpack.c.h.b16 %v6023
  %v6208 = vunpack.c.l.b16 %v6024
  %v6209 = vunpack.c.h.b16 %v6024
  %v6210 = vunpack.c.l.b16 %v6025
  %v6211 = vunpack.c.h.b16 %v6025
  %v6212 = vunpack.c.l.b16 %v6026
  %v6213 = vunpack.c.h.b16 %v6026
  %v6214 = vunpack.c.l.b16 %v6027
  %v6215 = vunpack.c.h.b16 %v6027
  %v6216 = vunpack.c.l.b16 %v6028
  %v6217 = vunpack.c.h.b16 %v6028
  %v6218 = vunpack.c.l.b16 %v6029
  %v6219 = vunpack.c.h.b16 %v6029
  %v6220 = vunpack.c.l.b16 %v6030
  %v6221 = vunpack.c.h.b16 %v6030
  %v6222 = vunpack.c.l.b16 %v6031
  %v6223 = vunpack.c.h.b16 %v6031
  %v6224 = vunpack.c.l.b16 %v6032
  %v6225 = vunpack.c.h.b16 %v6032
  %v6226 = vunpack.c.l.b16 %v6033
  %v6227 = vunpack.c.h.b16 %v6033
  %v6228 = vunpack.c.l.b16 %v6034
  %v6229 = vunpack.c.h.b16 %v6034
  %v6230 = vunpack.c.l.b16 %v6035
  %v6231 = vunpack.c.h.b16 %v6035
  %v6232 = vunpack.c.l.b16 %v6036
  %v6233 = vunpack.c.h.b16 %v6036
  %v6234 = vunpack.c.l.b16 %v6037
  %v6235 = vunpack.c.h.b16 %v6037
  %v6236 = vpack.c.b16 %v6110, %v6108
  %v6237 = vpack.c.b16 %v6111, %v6109
  %v6238 = vpack.c.b16 %v6114, %v6112
  %v6239 = vpack.c.b16 %v6115, %v6113
  %v6240 = vpack.c.b16 %v6118, %v6116
  %v6241 = vpack.c.b16 %v6119, %v6117
  %v6242 = vpack.c.b16 %v6122, %v6120
  %v6243 = vpack.c.b16 %v6123, %v6121
  %v6244 = vpack.c.b16 %v6126, %v6124
  %v6245 = vpack.c.b16 %v6127, %v6125
  %v6246 = vpack.c.b16 %v6130, %v6128
  %v6247 = vpack.c.b16 %v6131, %v6129
  %v6248 = vpack.c.b16 %v6134, %v6132
  %v6249 = vpack.c.b16 %v6135, %v6133
  %v6250 = vpack.c.b16 %v6138, %v6136
  %v6251 = vpack.c.b16 %v6139, %v6137
  %v6252 = vpack.c.b16 %v6142, %v6140
  %v6253 = vpack.c.b16 %v6143, %v6141
  %v6254 = vpack.c.b16 %v6146, %v6144
  %v6255 = vpack.c.b16 %v6147, %v6145
  %v6256 = vpack.c.b16 %v6150, %v6148
  %v6257 = vpack.c.b16 %v6151, %v6149
  %v6258 = vpack.c.b16 %v6154, %v6152
  %v6259 = vpack.c.b16 %v6155, %v6153
  %v6260 = vpack.c.b16 %v6158, %v6156
  %v6261 = vpack.c.b16 %v6159, %v6157
  %v6262 = vpack.c.b16 %v6162, %v6160
  %v6263 = vpack.c.b16 %v6163, %v6161
  %v6264 = vpack.c.b16 %v6166, %v6164
  %v6265 = vpack.c.b16 %v6167, %v6165
  %v6266 = vpack.c.b16 %v6170, %v6168
  %v6267 = vpack.c.b16 %v6171, %v6169
  %v6268 = vpack.c.b16 %v6174, %v6172
  %v6269 = vpack.c.b16 %v6175, %v6173
  %v6270 = vpack.c.b16 %v6178, %v6176
  %v6271 = vpack.c.b16 %v6179, %v6177
  %v6272 = vpack.c.b16 %v6182, %v6180
  %v6273 = vpack.c.b16 %v6183, %v6181
  %v6274 = vpack.c.b16 %v6186, %v6184
  %v6275 = vpack.c.b16 %v6187, %v6185
  %v6276 = vpack.c.b16 %v6190, %v6188
  %v6277 = vpack.c.b16 %v6191, %v6189
  %v6278 = vpack.c.b16 %v6194, %v6192
  %v6279 = vpack.c.b16 %v6195, %v6193
  %v6280 = vpack.c.b16 %v6198, %v6196
  %v6281 = vpack.c.b16 %v6199, %v6197
  %v6282 = vpack.c.b16 %v6202, %v6200
  %v6283 = vpack.c.b16 %v6203, %v6201
  %v6284 = vpack.c.b16 %v6206, %v6204
  %v6285 = vpack.c.b16 %v6207, %v6205
  %v6286 = vpack.c.b16 %v6210, %v6208
  %v6287 = vpack.c.b16 %v6211, %v6209
  %v6288 = vpack.c.b16 %v6214, %v6212
  %v6289 = vpack.c.b16 %v6215, %v6213
  %v6290 = vpack.c.b16 %v6218, %v6216
  %v6291 = vpack.c.b16 %v6219, %v6217
  %v6292 = vpack.c.b16 %v6222, %v6220
  %v6293 = vpack.c.b16 %v6223, %v6221
  %v6294 = vpack.c.b16 %v6226, %v6224
  %v6295 = vpack.c.b16 %v6227, %v6225
  %v6296 = vpack.c.b16 %v6230, %v6228
  %v6297 = vpack.c.b16 %v6231, %v6229
  %v6298 = vpack.c.b16 %v6234, %v6232
  %v6299 = vpack.c.b16 %v6235, %v6233
  %6364 = vmatpush.bf16.msra.mxu0 %v6250
  %6365 = vmatpush.bf16.msra.mxu0 %v6248
  %6366 = vmatpush.bf16.msra.mxu0 %v6246
  %6367 = vmatpush.bf16.msra.mxu0 %v6244
  %6368 = vmatpush.bf16.msra.mxu0 %v6242
  %6369 = vmatpush.bf16.msra.mxu0 %v6240
  %6370 = vmatpush.bf16.msra.mxu0 %v6238
  %6371 = vmatpush.bf16.msra.mxu0 %v6236
  %6372 = vmatmul.bf16.gmra.mxu0 %v5970
  %v6373 = vpop.f32.mrf.mxu0
  %v6374 = vadd.f32 %v6040, %v6373
  %v6375 = vpop.f32.mrf.mxu0
  %6376 = vdwg.mxu0
  %6377 = vmatpush.bf16.msra.mxu0 %v6266
  %6378 = vmatpush.bf16.msra.mxu0 %v6264
  %6379 = vmatpush.bf16.msra.mxu0 %v6262
  %6380 = vmatpush.bf16.msra.mxu0 %v6260
  %6381 = vmatpush.bf16.msra.mxu0 %v6258
  %6382 = vmatpush.bf16.msra.mxu0 %v6256
  %6383 = vmatpush.bf16.msra.mxu0 %v6254
  %6384 = vmatpush.bf16.msra.mxu0 %v6252
  %6385 = vmatmul.bf16.gmra.mxu0 %v5971
  %v6386 = vpop.f32.mrf.mxu0
  %v6387 = vadd.f32 %v6374, %v6386
  %v6388 = vpop.f32.mrf.mxu0
  %6389 = vdwg.mxu0
  %6390 = vmatpush.bf16.msra.mxu0 %v6282
  %6391 = vmatpush.bf16.msra.mxu0 %v6280
  %6392 = vmatpush.bf16.msra.mxu0 %v6278
  %6393 = vmatpush.bf16.msra.mxu0 %v6276
  %6394 = vmatpush.bf16.msra.mxu0 %v6274
  %6395 = vmatpush.bf16.msra.mxu0 %v6272
  %6396 = vmatpush.bf16.msra.mxu0 %v6270
  %6397 = vmatpush.bf16.msra.mxu0 %v6268
  %6398 = vmatmul.bf16.gmra.mxu0 %v5972
  %v6399 = vpop.f32.mrf.mxu0
  %v6400 = vadd.f32 %v6387, %v6399
  %v6401 = vpop.f32.mrf.mxu0
  %6402 = vdwg.mxu0
  %6403 = vmatpush.bf16.msra.mxu0 %v6298
  %6404 = vmatpush.bf16.msra.mxu0 %v6296
  %6405 = vmatpush.bf16.msra.mxu0 %v6294
  %6406 = vmatpush.bf16.msra.mxu0 %v6292
  %6407 = vmatpush.bf16.msra.mxu0 %v6290
  %6408 = vmatpush.bf16.msra.mxu0 %v6288
  %6409 = vmatpush.bf16.msra.mxu0 %v6286
  %6410 = vmatpush.bf16.msra.mxu0 %v6284
  %6411 = vmatmul.bf16.gmra.mxu0 %v5973
  %v6412 = vpop.f32.mrf.mxu0
  %v6413 = vadd.f32 %v6400, %v6412
  %v6414 = vpop.f32.mrf.mxu0
  %6415 = vdwg.mxu0
  %6416 = vmatpush.bf16.msra.mxu0 %v6251
  %6417 = vmatpush.bf16.msra.mxu0 %v6249
  %6418 = vmatpush.bf16.msra.mxu0 %v6247
  %6419 = vmatpush.bf16.msra.mxu0 %v6245
  %6420 = vmatpush.bf16.msra.mxu0 %v6243
  %6421 = vmatpush.bf16.msra.mxu0 %v6241
  %6422 = vmatpush.bf16.msra.mxu0 %v6239
  %6423 = vmatpush.bf16.msra.mxu0 %v6237
  %6424 = vmatmul.bf16.gmra.mxu0 %v5970
  %v6425 = vpop.f32.mrf.mxu0
  %v6426 = vadd.f32 %v6041, %v6425
  %v6427 = vpop.f32.mrf.mxu0
  %6428 = vdwg.mxu0
  %6429 = vmatpush.bf16.msra.mxu0 %v6267
  %6430 = vmatpush.bf16.msra.mxu0 %v6265
  %6431 = vmatpush.bf16.msra.mxu0 %v6263
  %6432 = vmatpush.bf16.msra.mxu0 %v6261
  %6433 = vmatpush.bf16.msra.mxu0 %v6259
  %6434 = vmatpush.bf16.msra.mxu0 %v6257
  %6435 = vmatpush.bf16.msra.mxu0 %v6255
  %6436 = vmatpush.bf16.msra.mxu0 %v6253
  %6437 = vmatmul.bf16.gmra.mxu0 %v5971
  %v6438 = vpop.f32.mrf.mxu0
  %v6439 = vadd.f32 %v6426, %v6438
  %v6440 = vpop.f32.mrf.mxu0
  %6441 = vdwg.mxu0
  %6442 = vmatpush.bf16.msra.mxu0 %v6283
  %6443 = vmatpush.bf16.msra.mxu0 %v6281
  %6444 = vmatpush.bf16.msra.mxu0 %v6279
  %6445 = vmatpush.bf16.msra.mxu0 %v6277
  %6446 = vmatpush.bf16.msra.mxu0 %v6275
  %6447 = vmatpush.bf16.msra.mxu0 %v6273
  %6448 = vmatpush.bf16.msra.mxu0 %v6271
  %6449 = vmatpush.bf16.msra.mxu0 %v6269
  %6450 = vmatmul.bf16.gmra.mxu0 %v5972
  %v6451 = vpop.f32.mrf.mxu0
  %v6452 = vadd.f32 %v6439, %v6451
  %v6453 = vpop.f32.mrf.mxu0
  %6454 = vdwg.mxu0
  %6455 = vmatpush.bf16.msra.mxu0 %v6299
  %6456 = vmatpush.bf16.msra.mxu0 %v6297
  %6457 = vmatpush.bf16.msra.mxu0 %v6295
  %6458 = vmatpush.bf16.msra.mxu0 %v6293
  %6459 = vmatpush.bf16.msra.mxu0 %v6291
  %6460 = vmatpush.bf16.msra.mxu0 %v6289
  %6461 = vmatpush.bf16.msra.mxu0 %v6287
  %6462 = vmatpush.bf16.msra.mxu0 %v6285
  %6463 = vmatmul.bf16.gmra.mxu0 %v5973
  %v6464 = vpop.f32.mrf.mxu0
  %v6465 = vadd.f32 %v6452, %v6464
  %v6466 = vpop.f32.mrf.mxu0
  %6467 = vdwg.mxu0
  %v6468 = vmax.f32 %v6413, 0.0
  %v6469 = vmax.f32 %v6465, 0.0
  %v6470 = vld [vmem:[%s7] sm:$0x3]
  %v6471 = vunpack.c.l.bf16 %v6470
  %v6473 = vperm.slane %v6471, 0
  %v6474 = vperm.slane %v6471, 2
  %v6477 = vperm.slane %v6473, 0
  %v6478 = vperm.slane %v6474, 0
  %v6479 = vmul.f32 %v6468, %v6477
  %v6480 = vmul.f32 %v6469, %v6478
  %v6481 = vadd.f32 %v6479, %v6480
  %6482 = vadd.xlane.f32.xlu0 %v6481
  %v6483 = vpop.xlane.xlu0 %6482
  %v6484 = vld [vmem:[#allocation2] sm:$0x1]
  %v6486 = vperm.slane %v6484, 0
  %v6488 = vadd.f32 %v6483, %v6486
  %v6489 = vsub.f32 0.0, %v6488
  %v6490 = vmul.f32 %v6489, 1.442695
  %v6491 = vpow.pop %v6490
  %v6492 = vadd.f32 %v6491, 1.0
  %v6493 = vrcp.pop %v6492
  %v6494 = vmul.f32 %v6492, %v6493
  %v6495 = vsub.f32 1.0, %v6494
  %v6496 = vmul.f32 %v6493, %v6495
  %v6497 = vadd.f32 %v6493, %v6496
  %vm6498 = vweird.f32 %v6492
  %vm6499 = vweird.f32 %v6493
  %vm6500 = vmor %vm6498, %vm6499
  %v6501 = vsel %vm6500, %v6493, %v6497
  %v6502 = vand.u32 2147483647, %v6492
  %vm6503 = vcmp.eq.f32.partialorder %v6502, 8.507059e+37
  %v6504 = vand.u32 %v6492, 2147483648
  %v6505 = vor.u32 1.1754944e-38, %v6504
  %v6506 = vsel %vm6503, %v6505, %v6501
  %v6507 = vmul.f32 1.0, %v6506
  %vm6508 = vcmask 7168
  %6509 = vst.msk [vmem:[%s9] sm:$0xff] %vm6508, %v6507
  // Predicated region
  $region38: #{discriminator_forward.1} parent=0 // pred_check
    _
  $region39: #{discriminator_forward.1} parent=0 // pred_check_branch
    %6511 = sbr.rel (0) target = $region41
  $region40: #{discriminator_forward.1} parent=0 // pred_region
    _
  $region41: #{discriminator_forward.1} parent=0 // pred_fallthru
    _
  // Predicated region
  $region42: #{discriminator_forward.1} parent=0 // pred_check
    _
  $region43: #{discriminator_forward.1} parent=0 // pred_check_branch
    %6513 = sbr.rel (0) target = $region45
  $region44: #{discriminator_forward.1} parent=0 // pred_region
    _
  $region45: #{discriminator_forward.1} parent=0 // pred_fallthru
    _

</llo_original>
